<compile_context>
chip_gen: v7x
topology: tpu7x:2x2x1
jax: 0.10.0
libtpu: 0.0.40
codegen_flags: <defaults>
</compile_context>

<pallas_src>
import functools

import jax
import jax.numpy as jnp
import numpy as np
from jax import lax
from jax.experimental import pallas as pl
from jax.experimental.pallas import tpu as pltpu


def _mm_hp(a, b):
    # Host-side high-precision matmul for weight folding / the reference.
    return jnp.matmul(a, b, precision="highest")


# -----------------------------------------------------------------------------
# Host-side parameter preprocessing: fold fc_{q,k,v} into the MHA in-projections,
# hoist mab0's constant query side, pre-transpose everything to (in, out) layout
# and pack both MABs into 5 slabs.  Runs once outside the kernel.
# -----------------------------------------------------------------------------
def pack_isab_params(I, p0, p1, num_heads, matmul_dtype):
    i2 = I[0].astype(jnp.float32)                     # (num_inds, dim_out)

    def fold(p):
        # x2 = (x @ Wfc^T + bfc) @ Win^T + bin  =  x @ (Win @ Wfc)^T + (bfc @ Win^T + bin)
        wq_full = _mm_hp(p["wqi"], p["wq"]).T
        bq_full = _mm_hp(p["bq"], p["wqi"].T) + p["bqi"]
        wk_full = _mm_hp(p["wki"], p["wk"]).T
        bk_full = _mm_hp(p["bk"], p["wki"].T) + p["bki"]
        wv_full = _mm_hp(p["wvi"], p["wv"]).T
        bv_full = _mm_hp(p["bv"], p["wvi"].T) + p["bvi"]
        return wq_full, bq_full, wk_full, bk_full, wv_full, bv_full

    wq0f, bq0f, wk0f, bk0f, wv0f, bv0f = fold(p0)
    wq1f, bq1f, wk1f, bk1f, wv1f, bv1f = fold(p1)

    # mab0's query side depends only on the constant I -> hoist it to the host.
    qp0 = _mm_hp(i2, p0["wq"].T) + p0["bq"]           # fc_q(I)             (num_inds, V)
    q20 = _mm_hp(i2, wq0f) + bq0f                     # folded in-proj_q(I) (num_inds, V)
    q0pre = jnp.stack([qp0, q20], axis=0).astype(jnp.float32)      # (2, num_inds, V)

    # mab0 k/v projection (input X, dim_in) and mab1 q projection (input X, dim_in)
    # share the (dim_in, 2V) shape (ISAB: mab0.dim_K == mab1.dim_Q == dim_in).
    wkv0 = jnp.concatenate([wk0f, wv0f], axis=1)                    # (dim_in, 2V)
    wq1b = jnp.concatenate([p1["wq"].T, wq1f], axis=1)              # (dim_in, 2V)  [fc_q | folded q]
    w_din = jnp.stack([wkv0, wq1b], axis=0).astype(matmul_dtype)    # (2, dim_in, 2V)

    wkv1 = jnp.concatenate([wk1f, wv1f], axis=1).astype(matmul_dtype)   # (V, 2V)

    w_vv = jnp.stack([p0["wout"].T, p0["wo"].T,
                      p1["wout"].T, p1["wo"].T], axis=0).astype(matmul_dtype)   # (4, V, V)

    b_all = jnp.concatenate([
        jnp.concatenate([bk0f, bv0f], axis=1),            # row 0: mab0 [bk | bv]
        jnp.concatenate([p1["bq"], bq1f], axis=1),        # row 1: mab1 [b_fcq | bq_folded]
        jnp.concatenate([bk1f, bv1f], axis=1),            # row 2: mab1 [bk | bv]
        jnp.concatenate([p0["bout"], p0["bo"]], axis=1),  # row 3: mab0 [bout | bo]
        jnp.concatenate([p1["bout"], p1["bo"]], axis=1),  # row 4: mab1 [bout | bo]
    ], axis=0).astype(jnp.float32)                                   # (5, 2V)

    return q0pre, w_din, wkv1, w_vv, b_all


# -----------------------------------------------------------------------------
# Fused ISAB kernel: Bt batch rows per grid step, both MABs in one body.
# -----------------------------------------------------------------------------
def _isab_kernel(x_ref, q0pre_ref, w_din_ref, wkv1_ref, wvv_ref, b_ref, o_ref, *, num_heads):
    nH = num_heads
    bt, n, _ = x_ref.shape
    V = wkv1_ref.shape[0]
    hd = V // nH
    scale = 1.0 / float(hd) ** 0.5
    mdt = wkv1_ref.dtype              # matmul operand dtype (bf16 by default, f32 optional)

    def mm(a, b):
        return jnp.dot(a.astype(mdt), b.astype(mdt), preferred_element_type=jnp.float32)

    def attention(q2, k2, v2, neg):
        """q2:(Nq,V) k2,v2:(Nk,V) f32, neg:(Nk,1) additive mask -> (Nq,V) f32."""
        qm, km, vm = q2.astype(mdt), k2.astype(mdt), v2.astype(mdt)
        heads = []
        for h in range(nH):           # static unroll: H=4, hd=8 -> trivial live ranges
            sl = slice(h * hd, (h + 1) * hd)
            # scores in (key, query) orientation: neg broadcasts with no transpose
            st = lax.dot_general(km[:, sl], qm[:, sl], (((1,), (1,)), ((), ())),
                                 preferred_element_type=jnp.float32)        # (Nk, Nq)
            st = st * scale + neg
            m = jnp.max(st, axis=0, keepdims=True)
            e = jnp.exp(st - m)
            # softmax denominator via EUP reciprocal instead of a VALU divide
            inv = pl.reciprocal(jnp.sum(e, axis=0, keepdims=True), approx=True)
            p = (e * inv).astype(mdt)
            heads.append(lax.dot_general(p, vm[:, sl], (((0,), (0,)), ((), ())),
                                         preferred_element_type=jnp.float32))   # (Nq, hd)
        # head-concat once, single full-width out-projection happens at the call site
        return jnp.concatenate(heads, axis=-1)                                   # (Nq, V)

    b_all = b_ref[...]                        # (5, 2V) packed biases, f32
    qp0 = q0pre_ref[0]                        # fc_q(I)               (num_inds, V) f32
    q20 = q0pre_ref[1]                        # folded in-proj_q(I)   (num_inds, V) f32
    wkv0 = w_din_ref[0]                       # mab0 [Wk | Wv]        (dim_in, 2V)
    wq1b = w_din_ref[1]                       # mab1 [Wfc_q | Wq]     (dim_in, 2V)
    wkv1 = wkv1_ref[...]                      # mab1 [Wk | Wv]        (V, 2V)
    wout0, wo0 = wvv_ref[0], wvv_ref[1]       # mab0 out-proj / fc_o  (V, V)
    wout1, wo1 = wvv_ref[2], wvv_ref[3]       # mab1 out-proj / fc_o  (V, V)

    x = x_ref[...]                            # (bt, n, dim_in) f32
    x2d = x.reshape(bt * n, x.shape[-1])

    # Stacked (over the bt batch rows) X-side projections: two fat full-width matmuls.
    kv0_all = mm(x2d, wkv0) + b_all[0:1, :]               # (bt*n, 2V)  mab0 k/v of X
    q1_all = mm(x2d, wq1b) + b_all[1:2, :]                # (bt*n, 2V)  mab1 fc_q | in-proj_q of X
    negx = jnp.where(x2d[:, 0:1] == 0.0, jnp.float32(-1e30), jnp.float32(0.0))

    outs = []
    for b in range(bt):                       # attention itself is per batch element
        rs = slice(b * n, (b + 1) * n)
        # ---- mab0(I, X[b]): query side precomputed on the host ----
        attn0 = attention(q20, kv0_all[rs, :V], kv0_all[rs, V:], negx[rs])
        hb = qp0 + (mm(attn0, wout0) + b_all[3:4, :V])                      # residual (ln=False)
        hb = hb + jnp.maximum(mm(hb, wo0) + b_all[3:4, V:], 0.0)            # + relu(fc_o(H))
        # ---- mab1(X[b], H_b) ----
        kv1b = mm(hb, wkv1) + b_all[2:3, :]                                 # (num_inds, 2V)
        neg1 = jnp.where(hb[:, 0:1] == 0.0, jnp.float32(-1e30), jnp.float32(0.0))
        q1b = q1_all[rs]                                                    # (n, 2V)
        attn1 = attention(q1b[:, V:], kv1b[:, :V], kv1b[:, V:], neg1)
        ob = q1b[:, :V] + (mm(attn1, wout1) + b_all[4:5, :V])
        ob = ob + jnp.maximum(mm(ob, wo1) + b_all[4:5, V:], 0.0)
        outs.append(ob)

    o = outs[0] if bt == 1 else jnp.concatenate(outs, axis=0)               # (bt*n, V)
    if len(o_ref.shape) == 2:        # lane-dense layout: (bt, n*V) -> unmasked stores
        o_ref[...] = o.reshape(bt, n * V).astype(o_ref.dtype)
    else:                            # conservative layout: (bt, n, V)
        o_ref[...] = o.reshape(bt, n, V).astype(o_ref.dtype)


def isab_pallas(X, I, p_mab0, p_mab1, num_heads, *,
                num_batch_blocks=None, matmul_dtype=jnp.bfloat16,
                lane_dense_out=True, single_buffer_weights=True):
    B, N, dim_in = X.shape
    V = I.shape[-1]

    if num_batch_blocks is None:
        # >= 2 grid steps keeps both v7x TensorCores busy ("parallel" batch axis);
        # on single-TC v5e/v6e the choice is measured-neutral.
        num_batch_blocks = min(B, 2)
    if B % num_batch_blocks != 0:
        num_batch_blocks = 1
    bt = B // num_batch_blocks

    packed = pack_isab_params(I, p_mab0, p_mab1, num_heads, matmul_dtype)
    kernel = functools.partial(_isab_kernel, num_heads=num_heads)

    def build_and_run(lane_dense, single_buf):
        pm = pl.Buffered(1) if single_buf else None    # constant index_map -> 1 VMEM copy suffices

        def resident(a):
            nd = a.ndim

            def idx(i):
                return (0,) * nd

            if pm is None:
                return pl.BlockSpec(a.shape, idx)
            return pl.BlockSpec(a.shape, idx, pipeline_mode=pm)

        in_specs = ([pl.BlockSpec((bt, N, dim_in), lambda i: (i, 0, 0))]
                    + [resident(a) for a in packed])

        if lane_dense:
            out_shape = jax.ShapeDtypeStruct((num_batch_blocks, bt, N * V), jnp.float32)
            out_spec = pl.BlockSpec((None, bt, N * V), lambda i: (i, 0, 0))
        else:
            out_shape = jax.ShapeDtypeStruct((B, N, V), jnp.float32)
            out_spec = pl.BlockSpec((bt, N, V), lambda i: (i, 0, 0))

        out = pl.pallas_call(
            kernel,
            out_shape=out_shape,
            grid_spec=pltpu.PrefetchScalarGridSpec(
                num_scalar_prefetch=0,
                grid=(num_batch_blocks,),
                in_specs=in_specs,
                out_specs=out_spec,
            ),
            compiler_params=pltpu.CompilerParams(
                dimension_semantics=("parallel",)),
        )(X, *packed)
        out = jax.block_until_ready(out)
        return out.reshape(B, N, V)

    try:
        return build_and_run(lane_dense_out, single_buffer_weights)
    except Exception:
        if lane_dense_out or single_buffer_weights:
            # Graceful fallback if this Pallas/Mosaic build rejects Buffered(1) or the
            # in-kernel lane-dense reshape; kernel math is identical.
            return build_and_run(False, False)
        raise


# -----------------------------------------------------------------------------
# Pure-JAX reference (unfolded, faithful to the PyTorch module) for verification
# -----------------------------------------------------------------------------
def mab_ref(Q, K, p, num_heads):
    def one(q_in, k_in):
        def lin(x, w, b):
            return _mm_hp(x, w.T) + b
        qp = lin(q_in, p["wq"], p["bq"])
        kp = lin(k_in, p["wk"], p["bk"])
        vp = lin(k_in, p["wv"], p["bv"])
        neg = jnp.where(k_in[:, 0:1] == 0.0, -1e30, 0.0)
        q2 = lin(qp, p["wqi"], p["bqi"])
        k2 = lin(kp, p["wki"], p["bki"])
        v2 = lin(vp, p["wvi"], p["bvi"])
        V = q2.shape[-1]
        hd = V // num_heads
        scale = 1.0 / (hd ** 0.5)
        heads = []
        for h in range(num_heads):
            qh = q2[:, h * hd:(h + 1) * hd]
            kh = k2[:, h * hd:(h + 1) * hd]
            vh = v2[:, h * hd:(h + 1) * hd]
            st = _mm_hp(kh, qh.T) * scale + neg
            pa = jax.nn.softmax(st, axis=0)
            heads.append(_mm_hp(pa.T, vh))
        attn = jnp.concatenate(heads, axis=-1)
        attn_out = lin(attn, p["wout"], p["bout"])
        h_res = qp + attn_out
        return h_res + jax.nn.relu(lin(h_res, p["wo"], p["bo"]))
    return jax.vmap(one)(Q, K)


def isab_ref(X, I, p_mab0, p_mab1, num_heads):
    B = X.shape[0]
    I_rep = jnp.broadcast_to(I, (B,) + I.shape[1:])
    H = mab_ref(I_rep, X, p_mab0, num_heads)
    return mab_ref(X, H, p_mab1, num_heads)


# -----------------------------------------------------------------------------
# Deterministic synthetic parameter init (shapes follow MAB.__init__)
# -----------------------------------------------------------------------------
def init_mab_params(key, dim_Q, dim_K, dim_V):
    ks = jax.random.split(key, 8)

    def lin(k, out_d, in_d):
        kw, kb = jax.random.split(k)
        bound = 1.0 / np.sqrt(in_d)
        w = jax.random.uniform(kw, (out_d, in_d), jnp.float32, -bound, bound)
        b = jax.random.uniform(kb, (1, out_d), jnp.float32, -bound, bound)
        return w, b

    wq, bq = lin(ks[0], dim_V, dim_Q)        # fc_q
    wk, bk = lin(ks[1], dim_V, dim_K)        # fc_k
    wv, bv = lin(ks[2], dim_V, dim_K)        # fc_v
    wqi, bqi = lin(ks[3], dim_V, dim_V)      # MHA in_proj (q slice)
    wki, bki = lin(ks[4], dim_V, dim_V)      # MHA in_proj (k slice)
    wvi, bvi = lin(ks[5], dim_V, dim_V)      # MHA in_proj (v slice)
    wout, bout = lin(ks[6], dim_V, dim_V)    # MHA out_proj
    wo, bo = lin(ks[7], dim_V, dim_V)        # fc_o
    return dict(wq=wq, bq=bq, wk=wk, bk=bk, wv=wv, bv=bv,
                wqi=wqi, bqi=bqi, wki=wki, bki=bki, wvi=wvi, bvi=bvi,
                wout=wout, bout=bout, wo=wo, bo=bo)


if __name__ == "__main__":
    # ISAB(dim_in=16, dim_out=32, num_heads=4, num_inds=8, ln=False)
    dim_in, dim_out, num_heads, num_inds = 16, 32, 4, 8
    B, N = 2, 8

    key = jax.random.PRNGKey(0)
    kx, ki, k0, k1 = jax.random.split(key, 4)

    X = jax.random.normal(kx, (B, N, dim_in), jnp.float32)
    bound_i = float(np.sqrt(6.0 / (num_inds * dim_out + dim_out)))
    I = jax.random.uniform(ki, (1, num_inds, dim_out), jnp.float32, -bound_i, bound_i)

    p_mab0 = init_mab_params(k0, dim_out, dim_in, dim_out)   # MAB(dim_out, dim_in, dim_out)
    p_mab1 = init_mab_params(k1, dim_in, dim_out, dim_out)   # MAB(dim_in, dim_out, dim_out)

    ref = isab_ref(X, I, p_mab0, p_mab1, num_heads)

    # Default config: bf16 MXU operands, 2 parallel batch blocks (v7x-friendly),
    # lane-dense output, single-buffered resident weights.
    out = isab_pallas(X, I, p_mab0, p_mab1, num_heads)
    out = jax.block_until_ready(out)
    assert out.shape == (B, N, dim_out)
    np.testing.assert_allclose(np.asarray(out), np.asarray(ref), rtol=1e-1, atol=1e-1)

    # Whole batch in a single grid step (fattest blocks; exercises the row-stacking path).
    out_one = isab_pallas(X, I, p_mab0, p_mab1, num_heads, num_batch_blocks=1)
    np.testing.assert_allclose(np.asarray(out_one), np.asarray(ref), rtol=1e-1, atol=1e-1)

    # f32 MXU operands: tight check of the algorithm / weight folding.
    out_f32 = isab_pallas(X, I, p_mab0, p_mab1, num_heads, matmul_dtype=jnp.float32)
    np.testing.assert_allclose(np.asarray(out_f32), np.asarray(ref), rtol=1e-2, atol=1e-2)

    print("KERNEL_OK")
</pallas_src>

<mosaic_0001>
module attributes {stable_mosaic.version = 11 : i64} {
  func.func @_isab_kernel(%arg0: i32, %arg1: memref<1x8x16xf32, #tpu.memory_space<vmem>>, %arg2: memref<2x8x32xf32, #tpu.memory_space<vmem>>, %arg3: memref<2x16x64xbf16, #tpu.memory_space<vmem>>, %arg4: memref<32x64xbf16, #tpu.memory_space<vmem>>, %arg5: memref<4x32x32xbf16, #tpu.memory_space<vmem>>, %arg6: memref<5x64xf32, #tpu.memory_space<vmem>>, %arg7: memref<1x1x256xf32, #tpu.memory_space<vmem>>) attributes {dimension_semantics = [#tpu.dimension_semantics<parallel>], iteration_bounds = array<i64: 2>, scalar_prefetch = 0 : i64, scratch_operands = 0 : i64, tpu.core_type = #tpu.core_type<tc>, window_params = [{transform_indices = @transform_0, window_bounds = array<i64: 1, 8, 16>}, {pipeline_mode = #tpu.pipeline_mode<synchronous>, transform_indices = @transform_1, window_bounds = array<i64: 2, 8, 32>}, {pipeline_mode = #tpu.pipeline_mode<synchronous>, transform_indices = @transform_2, window_bounds = array<i64: 2, 16, 64>}, {pipeline_mode = #tpu.pipeline_mode<synchronous>, transform_indices = @transform_3, window_bounds = array<i64: 32, 64>}, {pipeline_mode = #tpu.pipeline_mode<synchronous>, transform_indices = @transform_4, window_bounds = array<i64: 4, 32, 32>}, {pipeline_mode = #tpu.pipeline_mode<synchronous>, transform_indices = @transform_5, window_bounds = array<i64: 5, 64>}, {transform_indices = @transform_6, window_bounds = array<i64: 1, 1, 256>}]} {
    %c0 = arith.constant 0 : index
    %c0_0 = arith.constant 0 : index
    %0 = vector.load %arg6[%c0, %c0_0] : memref<5x64xf32, #tpu.memory_space<vmem>>, vector<5x64xf32>
    %c0_1 = arith.constant 0 : index
    %c0_2 = arith.constant 0 : index
    %c0_3 = arith.constant 0 : index
    %1 = vector.load %arg2[%c0_1, %c0_2, %c0_3] : memref<2x8x32xf32, #tpu.memory_space<vmem>>, vector<1x8x32xf32>
    %2 = vector.shape_cast %1 : vector<1x8x32xf32> to vector<8x32xf32>
    %c1 = arith.constant 1 : index
    %c0_4 = arith.constant 0 : index
    %c0_5 = arith.constant 0 : index
    %3 = vector.load %arg2[%c1, %c0_4, %c0_5] : memref<2x8x32xf32, #tpu.memory_space<vmem>>, vector<1x8x32xf32>
    %4 = vector.shape_cast %3 : vector<1x8x32xf32> to vector<8x32xf32>
    %c0_6 = arith.constant 0 : index
    %c0_7 = arith.constant 0 : index
    %c0_8 = arith.constant 0 : index
    %5 = vector.load %arg3[%c0_6, %c0_7, %c0_8] : memref<2x16x64xbf16, #tpu.memory_space<vmem>>, vector<1x16x64xbf16>
    %6 = vector.shape_cast %5 : vector<1x16x64xbf16> to vector<16x64xbf16>
    %c1_9 = arith.constant 1 : index
    %c0_10 = arith.constant 0 : index
    %c0_11 = arith.constant 0 : index
    %7 = vector.load %arg3[%c1_9, %c0_10, %c0_11] : memref<2x16x64xbf16, #tpu.memory_space<vmem>>, vector<1x16x64xbf16>
    %8 = vector.shape_cast %7 : vector<1x16x64xbf16> to vector<16x64xbf16>
    %c0_12 = arith.constant 0 : index
    %c0_13 = arith.constant 0 : index
    %9 = vector.load %arg4[%c0_12, %c0_13] : memref<32x64xbf16, #tpu.memory_space<vmem>>, vector<32x64xbf16>
    %c0_14 = arith.constant 0 : index
    %c0_15 = arith.constant 0 : index
    %c0_16 = arith.constant 0 : index
    %10 = vector.load %arg5[%c0_14, %c0_15, %c0_16] : memref<4x32x32xbf16, #tpu.memory_space<vmem>>, vector<1x32x32xbf16>
    %11 = vector.shape_cast %10 : vector<1x32x32xbf16> to vector<32x32xbf16>
    %c1_17 = arith.constant 1 : index
    %c0_18 = arith.constant 0 : index
    %c0_19 = arith.constant 0 : index
    %12 = vector.load %arg5[%c1_17, %c0_18, %c0_19] : memref<4x32x32xbf16, #tpu.memory_space<vmem>>, vector<1x32x32xbf16>
    %13 = vector.shape_cast %12 : vector<1x32x32xbf16> to vector<32x32xbf16>
    %c2 = arith.constant 2 : index
    %c0_20 = arith.constant 0 : index
    %c0_21 = arith.constant 0 : index
    %14 = vector.load %arg5[%c2, %c0_20, %c0_21] : memref<4x32x32xbf16, #tpu.memory_space<vmem>>, vector<1x32x32xbf16>
    %15 = vector.shape_cast %14 : vector<1x32x32xbf16> to vector<32x32xbf16>
    %c3 = arith.constant 3 : index
    %c0_22 = arith.constant 0 : index
    %c0_23 = arith.constant 0 : index
    %16 = vector.load %arg5[%c3, %c0_22, %c0_23] : memref<4x32x32xbf16, #tpu.memory_space<vmem>>, vector<1x32x32xbf16>
    %17 = vector.shape_cast %16 : vector<1x32x32xbf16> to vector<32x32xbf16>
    %c0_24 = arith.constant 0 : index
    %c0_25 = arith.constant 0 : index
    %c0_26 = arith.constant 0 : index
    %18 = vector.load %arg1[%c0_24, %c0_25, %c0_26] : memref<1x8x16xf32, #tpu.memory_space<vmem>>, vector<1x8x16xf32>
    %19 = vector.shape_cast %18 : vector<1x8x16xf32> to vector<8x16xf32>
    %20 = arith.truncf %19 : vector<8x16xf32> to vector<8x16xbf16>
    %cst = arith.constant dense<0.000000e+00> : vector<8x64xf32>
    %21 = tpu.matmul %20, %6, %cst {dimension_numbers = #tpu.dot_dimension_numbers<[1], [0], [0], [1], [0, 0, 1, 1], [], []>} : vector<8x16xbf16>, vector<16x64xbf16>, vector<8x64xf32> -> vector<8x64xf32>
    %22 = vector.extract_strided_slice %0 {offsets = [0, 0], sizes = [1, 64], strides = [1, 1]} : vector<5x64xf32> to vector<1x64xf32>
    %23 = vector.broadcast %22 : vector<1x64xf32> to vector<8x64xf32>
    %24 = arith.addf %21, %23 : vector<8x64xf32>
    %25 = arith.truncf %19 : vector<8x16xf32> to vector<8x16xbf16>
    %cst_27 = arith.constant dense<0.000000e+00> : vector<8x64xf32>
    %26 = tpu.matmul %25, %8, %cst_27 {dimension_numbers = #tpu.dot_dimension_numbers<[1], [0], [0], [1], [0, 0, 1, 1], [], []>} : vector<8x16xbf16>, vector<16x64xbf16>, vector<8x64xf32> -> vector<8x64xf32>
    %27 = vector.extract_strided_slice %0 {offsets = [1, 0], sizes = [1, 64], strides = [1, 1]} : vector<5x64xf32> to vector<1x64xf32>
    %28 = vector.broadcast %27 : vector<1x64xf32> to vector<8x64xf32>
    %29 = arith.addf %26, %28 : vector<8x64xf32>
    %30 = vector.extract_strided_slice %19 {offsets = [0, 0], sizes = [8, 1], strides = [1, 1]} : vector<8x16xf32> to vector<8x1xf32>
    %cst_28 = arith.constant 0.000000e+00 : f32
    %31 = vector.broadcast %cst_28 : f32 to vector<8x1xf32>
    %32 = arith.cmpf oeq, %30, %31 : vector<8x1xf32>
    %cst_29 = arith.constant -1.000000e+30 : f32
    %cst_30 = arith.constant 0.000000e+00 : f32
    %33 = vector.broadcast %cst_29 : f32 to vector<8x1xf32>
    %34 = vector.broadcast %cst_30 : f32 to vector<8x1xf32>
    %35 = arith.select %32, %33, %34 : vector<8x1xi1>, vector<8x1xf32>
    %36 = vector.extract_strided_slice %24 {offsets = [0, 0], sizes = [8, 32], strides = [1, 1]} : vector<8x64xf32> to vector<8x32xf32>
    %37 = vector.extract_strided_slice %24 {offsets = [0, 32], sizes = [8, 32], strides = [1, 1]} : vector<8x64xf32> to vector<8x32xf32>
    %38 = arith.truncf %4 : vector<8x32xf32> to vector<8x32xbf16>
    %39 = arith.truncf %36 : vector<8x32xf32> to vector<8x32xbf16>
    %40 = arith.truncf %37 : vector<8x32xf32> to vector<8x32xbf16>
    %41 = vector.extract_strided_slice %39 {offsets = [0, 0], sizes = [8, 8], strides = [1, 1]} : vector<8x32xbf16> to vector<8x8xbf16>
    %42 = vector.extract_strided_slice %38 {offsets = [0, 0], sizes = [8, 8], strides = [1, 1]} : vector<8x32xbf16> to vector<8x8xbf16>
    %cst_31 = arith.constant dense<0.000000e+00> : vector<8x8xf32>
    %43 = tpu.matmul %41, %42, %cst_31 {dimension_numbers = #tpu.dot_dimension_numbers<[1], [1], [0], [0], [0, 0, 1, 0], [], []>} : vector<8x8xbf16>, vector<8x8xbf16>, vector<8x8xf32> -> vector<8x8xf32>
    %cst_32 = arith.constant 0.353553385 : f32
    %44 = vector.broadcast %cst_32 : f32 to vector<8x8xf32>
    %45 = arith.mulf %43, %44 : vector<8x8xf32>
    %46 = vector.broadcast %35 : vector<8x1xf32> to vector<8x8xf32>
    %47 = arith.addf %45, %46 : vector<8x8xf32>
    %cst_33 = arith.constant dense<0xFF800000> : vector<8xf32>
    %48 = vector.multi_reduction <maximumf>, %47, %cst_33 [0] : vector<8x8xf32> to vector<8xf32>
    %49 = vector.shape_cast %48 : vector<8xf32> to vector<1x8xf32>
    %50 = vector.broadcast %49 : vector<1x8xf32> to vector<8x8xf32>
    %51 = arith.subf %47, %50 : vector<8x8xf32>
    %52 = math.exp %51 : vector<8x8xf32>
    %cst_34 = arith.constant dense<0.000000e+00> : vector<8xf32>
    %53 = vector.multi_reduction <add>, %52, %cst_34 [0] : vector<8x8xf32> to vector<8xf32>
    %54 = vector.shape_cast %53 : vector<8xf32> to vector<1x8xf32>
    %55 = tpu.reciprocal %54 {approx = true} : vector<1x8xf32> -> vector<1x8xf32>
    %56 = vector.broadcast %55 : vector<1x8xf32> to vector<8x8xf32>
    %57 = arith.mulf %52, %56 : vector<8x8xf32>
    %58 = arith.truncf %57 : vector<8x8xf32> to vector<8x8xbf16>
    %59 = vector.extract_strided_slice %40 {offsets = [0, 0], sizes = [8, 8], strides = [1, 1]} : vector<8x32xbf16> to vector<8x8xbf16>
    %cst_35 = arith.constant dense<0.000000e+00> : vector<8x8xf32>
    %60 = tpu.matmul %58, %59, %cst_35 {dimension_numbers = #tpu.dot_dimension_numbers<[0], [0], [1], [1], [0, 1, 1, 1], [], []>} : vector<8x8xbf16>, vector<8x8xbf16>, vector<8x8xf32> -> vector<8x8xf32>
    %61 = vector.extract_strided_slice %39 {offsets = [0, 8], sizes = [8, 8], strides = [1, 1]} : vector<8x32xbf16> to vector<8x8xbf16>
    %62 = vector.extract_strided_slice %38 {offsets = [0, 8], sizes = [8, 8], strides = [1, 1]} : vector<8x32xbf16> to vector<8x8xbf16>
    %cst_36 = arith.constant dense<0.000000e+00> : vector<8x8xf32>
    %63 = tpu.matmul %61, %62, %cst_36 {dimension_numbers = #tpu.dot_dimension_numbers<[1], [1], [0], [0], [0, 0, 1, 0], [], []>} : vector<8x8xbf16>, vector<8x8xbf16>, vector<8x8xf32> -> vector<8x8xf32>
    %cst_37 = arith.constant 0.353553385 : f32
    %64 = vector.broadcast %cst_37 : f32 to vector<8x8xf32>
    %65 = arith.mulf %63, %64 : vector<8x8xf32>
    %66 = vector.broadcast %35 : vector<8x1xf32> to vector<8x8xf32>
    %67 = arith.addf %65, %66 : vector<8x8xf32>
    %cst_38 = arith.constant dense<0xFF800000> : vector<8xf32>
    %68 = vector.multi_reduction <maximumf>, %67, %cst_38 [0] : vector<8x8xf32> to vector<8xf32>
    %69 = vector.shape_cast %68 : vector<8xf32> to vector<1x8xf32>
    %70 = vector.broadcast %69 : vector<1x8xf32> to vector<8x8xf32>
    %71 = arith.subf %67, %70 : vector<8x8xf32>
    %72 = math.exp %71 : vector<8x8xf32>
    %cst_39 = arith.constant dense<0.000000e+00> : vector<8xf32>
    %73 = vector.multi_reduction <add>, %72, %cst_39 [0] : vector<8x8xf32> to vector<8xf32>
    %74 = vector.shape_cast %73 : vector<8xf32> to vector<1x8xf32>
    %75 = tpu.reciprocal %74 {approx = true} : vector<1x8xf32> -> vector<1x8xf32>
    %76 = vector.broadcast %75 : vector<1x8xf32> to vector<8x8xf32>
    %77 = arith.mulf %72, %76 : vector<8x8xf32>
    %78 = arith.truncf %77 : vector<8x8xf32> to vector<8x8xbf16>
    %79 = vector.extract_strided_slice %40 {offsets = [0, 8], sizes = [8, 8], strides = [1, 1]} : vector<8x32xbf16> to vector<8x8xbf16>
    %cst_40 = arith.constant dense<0.000000e+00> : vector<8x8xf32>
    %80 = tpu.matmul %78, %79, %cst_40 {dimension_numbers = #tpu.dot_dimension_numbers<[0], [0], [1], [1], [0, 1, 1, 1], [], []>} : vector<8x8xbf16>, vector<8x8xbf16>, vector<8x8xf32> -> vector<8x8xf32>
    %81 = vector.extract_strided_slice %39 {offsets = [0, 16], sizes = [8, 8], strides = [1, 1]} : vector<8x32xbf16> to vector<8x8xbf16>
    %82 = vector.extract_strided_slice %38 {offsets = [0, 16], sizes = [8, 8], strides = [1, 1]} : vector<8x32xbf16> to vector<8x8xbf16>
    %cst_41 = arith.constant dense<0.000000e+00> : vector<8x8xf32>
    %83 = tpu.matmul %81, %82, %cst_41 {dimension_numbers = #tpu.dot_dimension_numbers<[1], [1], [0], [0], [0, 0, 1, 0], [], []>} : vector<8x8xbf16>, vector<8x8xbf16>, vector<8x8xf32> -> vector<8x8xf32>
    %cst_42 = arith.constant 0.353553385 : f32
    %84 = vector.broadcast %cst_42 : f32 to vector<8x8xf32>
    %85 = arith.mulf %83, %84 : vector<8x8xf32>
    %86 = vector.broadcast %35 : vector<8x1xf32> to vector<8x8xf32>
    %87 = arith.addf %85, %86 : vector<8x8xf32>
    %cst_43 = arith.constant dense<0xFF800000> : vector<8xf32>
    %88 = vector.multi_reduction <maximumf>, %87, %cst_43 [0] : vector<8x8xf32> to vector<8xf32>
    %89 = vector.shape_cast %88 : vector<8xf32> to vector<1x8xf32>
    %90 = vector.broadcast %89 : vector<1x8xf32> to vector<8x8xf32>
    %91 = arith.subf %87, %90 : vector<8x8xf32>
    %92 = math.exp %91 : vector<8x8xf32>
    %cst_44 = arith.constant dense<0.000000e+00> : vector<8xf32>
    %93 = vector.multi_reduction <add>, %92, %cst_44 [0] : vector<8x8xf32> to vector<8xf32>
    %94 = vector.shape_cast %93 : vector<8xf32> to vector<1x8xf32>
    %95 = tpu.reciprocal %94 {approx = true} : vector<1x8xf32> -> vector<1x8xf32>
    %96 = vector.broadcast %95 : vector<1x8xf32> to vector<8x8xf32>
    %97 = arith.mulf %92, %96 : vector<8x8xf32>
    %98 = arith.truncf %97 : vector<8x8xf32> to vector<8x8xbf16>
    %99 = vector.extract_strided_slice %40 {offsets = [0, 16], sizes = [8, 8], strides = [1, 1]} : vector<8x32xbf16> to vector<8x8xbf16>
    %cst_45 = arith.constant dense<0.000000e+00> : vector<8x8xf32>
    %100 = tpu.matmul %98, %99, %cst_45 {dimension_numbers = #tpu.dot_dimension_numbers<[0], [0], [1], [1], [0, 1, 1, 1], [], []>} : vector<8x8xbf16>, vector<8x8xbf16>, vector<8x8xf32> -> vector<8x8xf32>
    %101 = vector.extract_strided_slice %39 {offsets = [0, 24], sizes = [8, 8], strides = [1, 1]} : vector<8x32xbf16> to vector<8x8xbf16>
    %102 = vector.extract_strided_slice %38 {offsets = [0, 24], sizes = [8, 8], strides = [1, 1]} : vector<8x32xbf16> to vector<8x8xbf16>
    %cst_46 = arith.constant dense<0.000000e+00> : vector<8x8xf32>
    %103 = tpu.matmul %101, %102, %cst_46 {dimension_numbers = #tpu.dot_dimension_numbers<[1], [1], [0], [0], [0, 0, 1, 0], [], []>} : vector<8x8xbf16>, vector<8x8xbf16>, vector<8x8xf32> -> vector<8x8xf32>
    %cst_47 = arith.constant 0.353553385 : f32
    %104 = vector.broadcast %cst_47 : f32 to vector<8x8xf32>
    %105 = arith.mulf %103, %104 : vector<8x8xf32>
    %106 = vector.broadcast %35 : vector<8x1xf32> to vector<8x8xf32>
    %107 = arith.addf %105, %106 : vector<8x8xf32>
    %cst_48 = arith.constant dense<0xFF800000> : vector<8xf32>
    %108 = vector.multi_reduction <maximumf>, %107, %cst_48 [0] : vector<8x8xf32> to vector<8xf32>
    %109 = vector.shape_cast %108 : vector<8xf32> to vector<1x8xf32>
    %110 = vector.broadcast %109 : vector<1x8xf32> to vector<8x8xf32>
    %111 = arith.subf %107, %110 : vector<8x8xf32>
    %112 = math.exp %111 : vector<8x8xf32>
    %cst_49 = arith.constant dense<0.000000e+00> : vector<8xf32>
    %113 = vector.multi_reduction <add>, %112, %cst_49 [0] : vector<8x8xf32> to vector<8xf32>
    %114 = vector.shape_cast %113 : vector<8xf32> to vector<1x8xf32>
    %115 = tpu.reciprocal %114 {approx = true} : vector<1x8xf32> -> vector<1x8xf32>
    %116 = vector.broadcast %115 : vector<1x8xf32> to vector<8x8xf32>
    %117 = arith.mulf %112, %116 : vector<8x8xf32>
    %118 = arith.truncf %117 : vector<8x8xf32> to vector<8x8xbf16>
    %119 = vector.extract_strided_slice %40 {offsets = [0, 24], sizes = [8, 8], strides = [1, 1]} : vector<8x32xbf16> to vector<8x8xbf16>
    %cst_50 = arith.constant dense<0.000000e+00> : vector<8x8xf32>
    %120 = tpu.matmul %118, %119, %cst_50 {dimension_numbers = #tpu.dot_dimension_numbers<[0], [0], [1], [1], [0, 1, 1, 1], [], []>} : vector<8x8xbf16>, vector<8x8xbf16>, vector<8x8xf32> -> vector<8x8xf32>
    %121 = tpu.concatenate %60, %80, %100, %120 in 1 : vector<8x8xf32>, vector<8x8xf32>, vector<8x8xf32>, vector<8x8xf32> -> vector<8x32xf32>
    %122 = arith.truncf %121 : vector<8x32xf32> to vector<8x32xbf16>
    %cst_51 = arith.constant dense<0.000000e+00> : vector<8x32xf32>
    %123 = tpu.matmul %122, %11, %cst_51 {dimension_numbers = #tpu.dot_dimension_numbers<[1], [0], [0], [1], [0, 0, 1, 1], [], []>} : vector<8x32xbf16>, vector<32x32xbf16>, vector<8x32xf32> -> vector<8x32xf32>
    %124 = vector.extract_strided_slice %0 {offsets = [3, 0], sizes = [1, 32], strides = [1, 1]} : vector<5x64xf32> to vector<1x32xf32>
    %125 = vector.broadcast %124 : vector<1x32xf32> to vector<8x32xf32>
    %126 = arith.addf %123, %125 : vector<8x32xf32>
    %127 = arith.addf %2, %126 : vector<8x32xf32>
    %128 = arith.truncf %127 : vector<8x32xf32> to vector<8x32xbf16>
    %cst_52 = arith.constant dense<0.000000e+00> : vector<8x32xf32>
    %129 = tpu.matmul %128, %13, %cst_52 {dimension_numbers = #tpu.dot_dimension_numbers<[1], [0], [0], [1], [0, 0, 1, 1], [], []>} : vector<8x32xbf16>, vector<32x32xbf16>, vector<8x32xf32> -> vector<8x32xf32>
    %130 = vector.extract_strided_slice %0 {offsets = [3, 32], sizes = [1, 32], strides = [1, 1]} : vector<5x64xf32> to vector<1x32xf32>
    %131 = vector.broadcast %130 : vector<1x32xf32> to vector<8x32xf32>
    %132 = arith.addf %129, %131 : vector<8x32xf32>
    %cst_53 = arith.constant 0.000000e+00 : f32
    %133 = vector.broadcast %cst_53 : f32 to vector<8x32xf32>
    %134 = arith.maximumf %132, %133 : vector<8x32xf32>
    %135 = arith.addf %127, %134 : vector<8x32xf32>
    %136 = arith.truncf %135 : vector<8x32xf32> to vector<8x32xbf16>
    %cst_54 = arith.constant dense<0.000000e+00> : vector<8x64xf32>
    %137 = tpu.matmul %136, %9, %cst_54 {dimension_numbers = #tpu.dot_dimension_numbers<[1], [0], [0], [1], [0, 0, 1, 1], [], []>} : vector<8x32xbf16>, vector<32x64xbf16>, vector<8x64xf32> -> vector<8x64xf32>
    %138 = vector.extract_strided_slice %0 {offsets = [2, 0], sizes = [1, 64], strides = [1, 1]} : vector<5x64xf32> to vector<1x64xf32>
    %139 = vector.broadcast %138 : vector<1x64xf32> to vector<8x64xf32>
    %140 = arith.addf %137, %139 : vector<8x64xf32>
    %141 = vector.extract_strided_slice %135 {offsets = [0, 0], sizes = [8, 1], strides = [1, 1]} : vector<8x32xf32> to vector<8x1xf32>
    %cst_55 = arith.constant 0.000000e+00 : f32
    %142 = vector.broadcast %cst_55 : f32 to vector<8x1xf32>
    %143 = arith.cmpf oeq, %141, %142 : vector<8x1xf32>
    %cst_56 = arith.constant -1.000000e+30 : f32
    %cst_57 = arith.constant 0.000000e+00 : f32
    %144 = vector.broadcast %cst_56 : f32 to vector<8x1xf32>
    %145 = vector.broadcast %cst_57 : f32 to vector<8x1xf32>
    %146 = arith.select %143, %144, %145 : vector<8x1xi1>, vector<8x1xf32>
    %147 = vector.extract_strided_slice %29 {offsets = [0, 32], sizes = [8, 32], strides = [1, 1]} : vector<8x64xf32> to vector<8x32xf32>
    %148 = vector.extract_strided_slice %140 {offsets = [0, 0], sizes = [8, 32], strides = [1, 1]} : vector<8x64xf32> to vector<8x32xf32>
    %149 = vector.extract_strided_slice %140 {offsets = [0, 32], sizes = [8, 32], strides = [1, 1]} : vector<8x64xf32> to vector<8x32xf32>
    %150 = arith.truncf %147 : vector<8x32xf32> to vector<8x32xbf16>
    %151 = arith.truncf %148 : vector<8x32xf32> to vector<8x32xbf16>
    %152 = arith.truncf %149 : vector<8x32xf32> to vector<8x32xbf16>
    %153 = vector.extract_strided_slice %151 {offsets = [0, 0], sizes = [8, 8], strides = [1, 1]} : vector<8x32xbf16> to vector<8x8xbf16>
    %154 = vector.extract_strided_slice %150 {offsets = [0, 0], sizes = [8, 8], strides = [1, 1]} : vector<8x32xbf16> to vector<8x8xbf16>
    %cst_58 = arith.constant dense<0.000000e+00> : vector<8x8xf32>
    %155 = tpu.matmul %153, %154, %cst_58 {dimension_numbers = #tpu.dot_dimension_numbers<[1], [1], [0], [0], [0, 0, 1, 0], [], []>} : vector<8x8xbf16>, vector<8x8xbf16>, vector<8x8xf32> -> vector<8x8xf32>
    %cst_59 = arith.constant 0.353553385 : f32
    %156 = vector.broadcast %cst_59 : f32 to vector<8x8xf32>
    %157 = arith.mulf %155, %156 : vector<8x8xf32>
    %158 = vector.broadcast %146 : vector<8x1xf32> to vector<8x8xf32>
    %159 = arith.addf %157, %158 : vector<8x8xf32>
    %cst_60 = arith.constant dense<0xFF800000> : vector<8xf32>
    %160 = vector.multi_reduction <maximumf>, %159, %cst_60 [0] : vector<8x8xf32> to vector<8xf32>
    %161 = vector.shape_cast %160 : vector<8xf32> to vector<1x8xf32>
    %162 = vector.broadcast %161 : vector<1x8xf32> to vector<8x8xf32>
    %163 = arith.subf %159, %162 : vector<8x8xf32>
    %164 = math.exp %163 : vector<8x8xf32>
    %cst_61 = arith.constant dense<0.000000e+00> : vector<8xf32>
    %165 = vector.multi_reduction <add>, %164, %cst_61 [0] : vector<8x8xf32> to vector<8xf32>
    %166 = vector.shape_cast %165 : vector<8xf32> to vector<1x8xf32>
    %167 = tpu.reciprocal %166 {approx = true} : vector<1x8xf32> -> vector<1x8xf32>
    %168 = vector.broadcast %167 : vector<1x8xf32> to vector<8x8xf32>
    %169 = arith.mulf %164, %168 : vector<8x8xf32>
    %170 = arith.truncf %169 : vector<8x8xf32> to vector<8x8xbf16>
    %171 = vector.extract_strided_slice %152 {offsets = [0, 0], sizes = [8, 8], strides = [1, 1]} : vector<8x32xbf16> to vector<8x8xbf16>
    %cst_62 = arith.constant dense<0.000000e+00> : vector<8x8xf32>
    %172 = tpu.matmul %170, %171, %cst_62 {dimension_numbers = #tpu.dot_dimension_numbers<[0], [0], [1], [1], [0, 1, 1, 1], [], []>} : vector<8x8xbf16>, vector<8x8xbf16>, vector<8x8xf32> -> vector<8x8xf32>
    %173 = vector.extract_strided_slice %151 {offsets = [0, 8], sizes = [8, 8], strides = [1, 1]} : vector<8x32xbf16> to vector<8x8xbf16>
    %174 = vector.extract_strided_slice %150 {offsets = [0, 8], sizes = [8, 8], strides = [1, 1]} : vector<8x32xbf16> to vector<8x8xbf16>
    %cst_63 = arith.constant dense<0.000000e+00> : vector<8x8xf32>
    %175 = tpu.matmul %173, %174, %cst_63 {dimension_numbers = #tpu.dot_dimension_numbers<[1], [1], [0], [0], [0, 0, 1, 0], [], []>} : vector<8x8xbf16>, vector<8x8xbf16>, vector<8x8xf32> -> vector<8x8xf32>
    %cst_64 = arith.constant 0.353553385 : f32
    %176 = vector.broadcast %cst_64 : f32 to vector<8x8xf32>
    %177 = arith.mulf %175, %176 : vector<8x8xf32>
    %178 = vector.broadcast %146 : vector<8x1xf32> to vector<8x8xf32>
    %179 = arith.addf %177, %178 : vector<8x8xf32>
    %cst_65 = arith.constant dense<0xFF800000> : vector<8xf32>
    %180 = vector.multi_reduction <maximumf>, %179, %cst_65 [0] : vector<8x8xf32> to vector<8xf32>
    %181 = vector.shape_cast %180 : vector<8xf32> to vector<1x8xf32>
    %182 = vector.broadcast %181 : vector<1x8xf32> to vector<8x8xf32>
    %183 = arith.subf %179, %182 : vector<8x8xf32>
    %184 = math.exp %183 : vector<8x8xf32>
    %cst_66 = arith.constant dense<0.000000e+00> : vector<8xf32>
    %185 = vector.multi_reduction <add>, %184, %cst_66 [0] : vector<8x8xf32> to vector<8xf32>
    %186 = vector.shape_cast %185 : vector<8xf32> to vector<1x8xf32>
    %187 = tpu.reciprocal %186 {approx = true} : vector<1x8xf32> -> vector<1x8xf32>
    %188 = vector.broadcast %187 : vector<1x8xf32> to vector<8x8xf32>
    %189 = arith.mulf %184, %188 : vector<8x8xf32>
    %190 = arith.truncf %189 : vector<8x8xf32> to vector<8x8xbf16>
    %191 = vector.extract_strided_slice %152 {offsets = [0, 8], sizes = [8, 8], strides = [1, 1]} : vector<8x32xbf16> to vector<8x8xbf16>
    %cst_67 = arith.constant dense<0.000000e+00> : vector<8x8xf32>
    %192 = tpu.matmul %190, %191, %cst_67 {dimension_numbers = #tpu.dot_dimension_numbers<[0], [0], [1], [1], [0, 1, 1, 1], [], []>} : vector<8x8xbf16>, vector<8x8xbf16>, vector<8x8xf32> -> vector<8x8xf32>
    %193 = vector.extract_strided_slice %151 {offsets = [0, 16], sizes = [8, 8], strides = [1, 1]} : vector<8x32xbf16> to vector<8x8xbf16>
    %194 = vector.extract_strided_slice %150 {offsets = [0, 16], sizes = [8, 8], strides = [1, 1]} : vector<8x32xbf16> to vector<8x8xbf16>
    %cst_68 = arith.constant dense<0.000000e+00> : vector<8x8xf32>
    %195 = tpu.matmul %193, %194, %cst_68 {dimension_numbers = #tpu.dot_dimension_numbers<[1], [1], [0], [0], [0, 0, 1, 0], [], []>} : vector<8x8xbf16>, vector<8x8xbf16>, vector<8x8xf32> -> vector<8x8xf32>
    %cst_69 = arith.constant 0.353553385 : f32
    %196 = vector.broadcast %cst_69 : f32 to vector<8x8xf32>
    %197 = arith.mulf %195, %196 : vector<8x8xf32>
    %198 = vector.broadcast %146 : vector<8x1xf32> to vector<8x8xf32>
    %199 = arith.addf %197, %198 : vector<8x8xf32>
    %cst_70 = arith.constant dense<0xFF800000> : vector<8xf32>
    %200 = vector.multi_reduction <maximumf>, %199, %cst_70 [0] : vector<8x8xf32> to vector<8xf32>
    %201 = vector.shape_cast %200 : vector<8xf32> to vector<1x8xf32>
    %202 = vector.broadcast %201 : vector<1x8xf32> to vector<8x8xf32>
    %203 = arith.subf %199, %202 : vector<8x8xf32>
    %204 = math.exp %203 : vector<8x8xf32>
    %cst_71 = arith.constant dense<0.000000e+00> : vector<8xf32>
    %205 = vector.multi_reduction <add>, %204, %cst_71 [0] : vector<8x8xf32> to vector<8xf32>
    %206 = vector.shape_cast %205 : vector<8xf32> to vector<1x8xf32>
    %207 = tpu.reciprocal %206 {approx = true} : vector<1x8xf32> -> vector<1x8xf32>
    %208 = vector.broadcast %207 : vector<1x8xf32> to vector<8x8xf32>
    %209 = arith.mulf %204, %208 : vector<8x8xf32>
    %210 = arith.truncf %209 : vector<8x8xf32> to vector<8x8xbf16>
    %211 = vector.extract_strided_slice %152 {offsets = [0, 16], sizes = [8, 8], strides = [1, 1]} : vector<8x32xbf16> to vector<8x8xbf16>
    %cst_72 = arith.constant dense<0.000000e+00> : vector<8x8xf32>
    %212 = tpu.matmul %210, %211, %cst_72 {dimension_numbers = #tpu.dot_dimension_numbers<[0], [0], [1], [1], [0, 1, 1, 1], [], []>} : vector<8x8xbf16>, vector<8x8xbf16>, vector<8x8xf32> -> vector<8x8xf32>
    %213 = vector.extract_strided_slice %151 {offsets = [0, 24], sizes = [8, 8], strides = [1, 1]} : vector<8x32xbf16> to vector<8x8xbf16>
    %214 = vector.extract_strided_slice %150 {offsets = [0, 24], sizes = [8, 8], strides = [1, 1]} : vector<8x32xbf16> to vector<8x8xbf16>
    %cst_73 = arith.constant dense<0.000000e+00> : vector<8x8xf32>
    %215 = tpu.matmul %213, %214, %cst_73 {dimension_numbers = #tpu.dot_dimension_numbers<[1], [1], [0], [0], [0, 0, 1, 0], [], []>} : vector<8x8xbf16>, vector<8x8xbf16>, vector<8x8xf32> -> vector<8x8xf32>
    %cst_74 = arith.constant 0.353553385 : f32
    %216 = vector.broadcast %cst_74 : f32 to vector<8x8xf32>
    %217 = arith.mulf %215, %216 : vector<8x8xf32>
    %218 = vector.broadcast %146 : vector<8x1xf32> to vector<8x8xf32>
    %219 = arith.addf %217, %218 : vector<8x8xf32>
    %cst_75 = arith.constant dense<0xFF800000> : vector<8xf32>
    %220 = vector.multi_reduction <maximumf>, %219, %cst_75 [0] : vector<8x8xf32> to vector<8xf32>
    %221 = vector.shape_cast %220 : vector<8xf32> to vector<1x8xf32>
    %222 = vector.broadcast %221 : vector<1x8xf32> to vector<8x8xf32>
    %223 = arith.subf %219, %222 : vector<8x8xf32>
    %224 = math.exp %223 : vector<8x8xf32>
    %cst_76 = arith.constant dense<0.000000e+00> : vector<8xf32>
    %225 = vector.multi_reduction <add>, %224, %cst_76 [0] : vector<8x8xf32> to vector<8xf32>
    %226 = vector.shape_cast %225 : vector<8xf32> to vector<1x8xf32>
    %227 = tpu.reciprocal %226 {approx = true} : vector<1x8xf32> -> vector<1x8xf32>
    %228 = vector.broadcast %227 : vector<1x8xf32> to vector<8x8xf32>
    %229 = arith.mulf %224, %228 : vector<8x8xf32>
    %230 = arith.truncf %229 : vector<8x8xf32> to vector<8x8xbf16>
    %231 = vector.extract_strided_slice %152 {offsets = [0, 24], sizes = [8, 8], strides = [1, 1]} : vector<8x32xbf16> to vector<8x8xbf16>
    %cst_77 = arith.constant dense<0.000000e+00> : vector<8x8xf32>
    %232 = tpu.matmul %230, %231, %cst_77 {dimension_numbers = #tpu.dot_dimension_numbers<[0], [0], [1], [1], [0, 1, 1, 1], [], []>} : vector<8x8xbf16>, vector<8x8xbf16>, vector<8x8xf32> -> vector<8x8xf32>
    %233 = tpu.concatenate %172, %192, %212, %232 in 1 : vector<8x8xf32>, vector<8x8xf32>, vector<8x8xf32>, vector<8x8xf32> -> vector<8x32xf32>
    %234 = vector.extract_strided_slice %29 {offsets = [0, 0], sizes = [8, 32], strides = [1, 1]} : vector<8x64xf32> to vector<8x32xf32>
    %235 = arith.truncf %233 : vector<8x32xf32> to vector<8x32xbf16>
    %cst_78 = arith.constant dense<0.000000e+00> : vector<8x32xf32>
    %236 = tpu.matmul %235, %15, %cst_78 {dimension_numbers = #tpu.dot_dimension_numbers<[1], [0], [0], [1], [0, 0, 1, 1], [], []>} : vector<8x32xbf16>, vector<32x32xbf16>, vector<8x32xf32> -> vector<8x32xf32>
    %237 = vector.extract_strided_slice %0 {offsets = [4, 0], sizes = [1, 32], strides = [1, 1]} : vector<5x64xf32> to vector<1x32xf32>
    %238 = vector.broadcast %237 : vector<1x32xf32> to vector<8x32xf32>
    %239 = arith.addf %236, %238 : vector<8x32xf32>
    %240 = arith.addf %234, %239 : vector<8x32xf32>
    %241 = arith.truncf %240 : vector<8x32xf32> to vector<8x32xbf16>
    %cst_79 = arith.constant dense<0.000000e+00> : vector<8x32xf32>
    %242 = tpu.matmul %241, %17, %cst_79 {dimension_numbers = #tpu.dot_dimension_numbers<[1], [0], [0], [1], [0, 0, 1, 1], [], []>} : vector<8x32xbf16>, vector<32x32xbf16>, vector<8x32xf32> -> vector<8x32xf32>
    %243 = vector.extract_strided_slice %0 {offsets = [4, 32], sizes = [1, 32], strides = [1, 1]} : vector<5x64xf32> to vector<1x32xf32>
    %244 = vector.broadcast %243 : vector<1x32xf32> to vector<8x32xf32>
    %245 = arith.addf %242, %244 : vector<8x32xf32>
    %cst_80 = arith.constant 0.000000e+00 : f32
    %246 = vector.broadcast %cst_80 : f32 to vector<8x32xf32>
    %247 = arith.maximumf %245, %246 : vector<8x32xf32>
    %248 = arith.addf %240, %247 : vector<8x32xf32>
    %249 = vector.shape_cast %248 : vector<8x32xf32> to vector<1x256xf32>
    %c0_81 = arith.constant 0 : index
    %c0_82 = arith.constant 0 : index
    %c0_83 = arith.constant 0 : index
    %250 = vector.load %arg7[%c0_81, %c0_82, %c0_83] : memref<1x1x256xf32, #tpu.memory_space<vmem>>, vector<1x1x256xf32>
    %251 = vector.shape_cast %250 : vector<1x1x256xf32> to vector<1x256xf32>
    %252 = vector.shape_cast %249 : vector<1x256xf32> to vector<1x1x256xf32>
    tpu.vector_store %arg7[%c0_81, %c0_82, %c0_83], %252 {strides = array<i32>} : memref<1x1x256xf32, #tpu.memory_space<vmem>>, vector<1x1x256xf32>,
    return
  }
  func.func @transform_0(%arg0: i32) -> (i32, i32, i32) {
    %c0_i32 = arith.constant 0 : i32
    %c0_i32_0 = arith.constant 0 : i32
    %c0_i32_1 = arith.constant 0 : i32
    return %arg0, %c0_i32, %c0_i32_0 : i32, i32, i32
  }
  func.func @transform_1(%arg0: i32) -> (i32, i32, i32) {
    %c0_i32 = arith.constant 0 : i32
    %c0_i32_0 = arith.constant 0 : i32
    %c0_i32_1 = arith.constant 0 : i32
    %c0_i32_2 = arith.constant 0 : i32
    return %c0_i32, %c0_i32_0, %c0_i32_1 : i32, i32, i32
  }
  func.func @transform_2(%arg0: i32) -> (i32, i32, i32) {
    %c0_i32 = arith.constant 0 : i32
    %c0_i32_0 = arith.constant 0 : i32
    %c0_i32_1 = arith.constant 0 : i32
    %c0_i32_2 = arith.constant 0 : i32
    return %c0_i32, %c0_i32_0, %c0_i32_1 : i32, i32, i32
  }
  func.func @transform_3(%arg0: i32) -> (i32, i32) {
    %c0_i32 = arith.constant 0 : i32
    %c0_i32_0 = arith.constant 0 : i32
    %c0_i32_1 = arith.constant 0 : i32
    return %c0_i32, %c0_i32_0 : i32, i32
  }
  func.func @transform_4(%arg0: i32) -> (i32, i32, i32) {
    %c0_i32 = arith.constant 0 : i32
    %c0_i32_0 = arith.constant 0 : i32
    %c0_i32_1 = arith.constant 0 : i32
    %c0_i32_2 = arith.constant 0 : i32
    return %c0_i32, %c0_i32_0, %c0_i32_1 : i32, i32, i32
  }
  func.func @transform_5(%arg0: i32) -> (i32, i32) {
    %c0_i32 = arith.constant 0 : i32
    %c0_i32_0 = arith.constant 0 : i32
    %c0_i32_1 = arith.constant 0 : i32
    return %c0_i32, %c0_i32_0 : i32, i32
  }
  func.func @transform_6(%arg0: i32) -> (i32, i32, i32) {
    %c0_i32 = arith.constant 0 : i32
    %c0_i32_0 = arith.constant 0 : i32
    %c0_i32_1 = arith.constant 0 : i32
    return %arg0, %c0_i32, %c0_i32_0 : i32, i32, i32
  }
}

module attributes {stable_mosaic.version = 11 : i64} {
  func.func @_isab_kernel(%arg0: i32, %arg1: memref<1x8x16xf32, #tpu.memory_space<vmem>>, %arg2: memref<2x8x32xf32, #tpu.memory_space<vmem>>, %arg3: memref<2x16x64xbf16, #tpu.memory_space<vmem>>, %arg4: memref<32x64xbf16, #tpu.memory_space<vmem>>, %arg5: memref<4x32x32xbf16, #tpu.memory_space<vmem>>, %arg6: memref<5x64xf32, #tpu.memory_space<vmem>>, %arg7: memref<1x8x32xf32, #tpu.memory_space<vmem>>) attributes {dimension_semantics = [#tpu.dimension_semantics<parallel>], iteration_bounds = array<i64: 2>, scalar_prefetch = 0 : i64, scratch_operands = 0 : i64, tpu.core_type = #tpu.core_type<tc>, window_params = [{transform_indices = @transform_0, window_bounds = array<i64: 1, 8, 16>}, {pipeline_mode = #tpu.pipeline_mode<synchronous>, transform_indices = @transform_1, window_bounds = array<i64: 2, 8, 32>}, {pipeline_mode = #tpu.pipeline_mode<synchronous>, transform_indices = @transform_2, window_bounds = array<i64: 2, 16, 64>}, {pipeline_mode = #tpu.pipeline_mode<synchronous>, transform_indices = @transform_3, window_bounds = array<i64: 32, 64>}, {pipeline_mode = #tpu.pipeline_mode<synchronous>, transform_indices = @transform_4, window_bounds = array<i64: 4, 32, 32>}, {pipeline_mode = #tpu.pipeline_mode<synchronous>, transform_indices = @transform_5, window_bounds = array<i64: 5, 64>}, {transform_indices = @transform_6, window_bounds = array<i64: 1, 8, 32>}]} {
    %c0 = arith.constant 0 : index
    %c0_0 = arith.constant 0 : index
    %0 = vector.load %arg6[%c0, %c0_0] : memref<5x64xf32, #tpu.memory_space<vmem>>, vector<5x64xf32>
    %c0_1 = arith.constant 0 : index
    %c0_2 = arith.constant 0 : index
    %c0_3 = arith.constant 0 : index
    %1 = vector.load %arg2[%c0_1, %c0_2, %c0_3] : memref<2x8x32xf32, #tpu.memory_space<vmem>>, vector<1x8x32xf32>
    %2 = vector.shape_cast %1 : vector<1x8x32xf32> to vector<8x32xf32>
    %c1 = arith.constant 1 : index
    %c0_4 = arith.constant 0 : index
    %c0_5 = arith.constant 0 : index
    %3 = vector.load %arg2[%c1, %c0_4, %c0_5] : memref<2x8x32xf32, #tpu.memory_space<vmem>>, vector<1x8x32xf32>
    %4 = vector.shape_cast %3 : vector<1x8x32xf32> to vector<8x32xf32>
    %c0_6 = arith.constant 0 : index
    %c0_7 = arith.constant 0 : index
    %c0_8 = arith.constant 0 : index
    %5 = vector.load %arg3[%c0_6, %c0_7, %c0_8] : memref<2x16x64xbf16, #tpu.memory_space<vmem>>, vector<1x16x64xbf16>
    %6 = vector.shape_cast %5 : vector<1x16x64xbf16> to vector<16x64xbf16>
    %c1_9 = arith.constant 1 : index
    %c0_10 = arith.constant 0 : index
    %c0_11 = arith.constant 0 : index
    %7 = vector.load %arg3[%c1_9, %c0_10, %c0_11] : memref<2x16x64xbf16, #tpu.memory_space<vmem>>, vector<1x16x64xbf16>
    %8 = vector.shape_cast %7 : vector<1x16x64xbf16> to vector<16x64xbf16>
    %c0_12 = arith.constant 0 : index
    %c0_13 = arith.constant 0 : index
    %9 = vector.load %arg4[%c0_12, %c0_13] : memref<32x64xbf16, #tpu.memory_space<vmem>>, vector<32x64xbf16>
    %c0_14 = arith.constant 0 : index
    %c0_15 = arith.constant 0 : index
    %c0_16 = arith.constant 0 : index
    %10 = vector.load %arg5[%c0_14, %c0_15, %c0_16] : memref<4x32x32xbf16, #tpu.memory_space<vmem>>, vector<1x32x32xbf16>
    %11 = vector.shape_cast %10 : vector<1x32x32xbf16> to vector<32x32xbf16>
    %c1_17 = arith.constant 1 : index
    %c0_18 = arith.constant 0 : index
    %c0_19 = arith.constant 0 : index
    %12 = vector.load %arg5[%c1_17, %c0_18, %c0_19] : memref<4x32x32xbf16, #tpu.memory_space<vmem>>, vector<1x32x32xbf16>
    %13 = vector.shape_cast %12 : vector<1x32x32xbf16> to vector<32x32xbf16>
    %c2 = arith.constant 2 : index
    %c0_20 = arith.constant 0 : index
    %c0_21 = arith.constant 0 : index
    %14 = vector.load %arg5[%c2, %c0_20, %c0_21] : memref<4x32x32xbf16, #tpu.memory_space<vmem>>, vector<1x32x32xbf16>
    %15 = vector.shape_cast %14 : vector<1x32x32xbf16> to vector<32x32xbf16>
    %c3 = arith.constant 3 : index
    %c0_22 = arith.constant 0 : index
    %c0_23 = arith.constant 0 : index
    %16 = vector.load %arg5[%c3, %c0_22, %c0_23] : memref<4x32x32xbf16, #tpu.memory_space<vmem>>, vector<1x32x32xbf16>
    %17 = vector.shape_cast %16 : vector<1x32x32xbf16> to vector<32x32xbf16>
    %c0_24 = arith.constant 0 : index
    %c0_25 = arith.constant 0 : index
    %c0_26 = arith.constant 0 : index
    %18 = vector.load %arg1[%c0_24, %c0_25, %c0_26] : memref<1x8x16xf32, #tpu.memory_space<vmem>>, vector<1x8x16xf32>
    %19 = vector.shape_cast %18 : vector<1x8x16xf32> to vector<8x16xf32>
    %20 = arith.truncf %19 : vector<8x16xf32> to vector<8x16xbf16>
    %cst = arith.constant dense<0.000000e+00> : vector<8x64xf32>
    %21 = tpu.matmul %20, %6, %cst {dimension_numbers = #tpu.dot_dimension_numbers<[1], [0], [0], [1], [0, 0, 1, 1], [], []>} : vector<8x16xbf16>, vector<16x64xbf16>, vector<8x64xf32> -> vector<8x64xf32>
    %22 = vector.extract_strided_slice %0 {offsets = [0, 0], sizes = [1, 64], strides = [1, 1]} : vector<5x64xf32> to vector<1x64xf32>
    %23 = vector.broadcast %22 : vector<1x64xf32> to vector<8x64xf32>
    %24 = arith.addf %21, %23 : vector<8x64xf32>
    %25 = arith.truncf %19 : vector<8x16xf32> to vector<8x16xbf16>
    %cst_27 = arith.constant dense<0.000000e+00> : vector<8x64xf32>
    %26 = tpu.matmul %25, %8, %cst_27 {dimension_numbers = #tpu.dot_dimension_numbers<[1], [0], [0], [1], [0, 0, 1, 1], [], []>} : vector<8x16xbf16>, vector<16x64xbf16>, vector<8x64xf32> -> vector<8x64xf32>
    %27 = vector.extract_strided_slice %0 {offsets = [1, 0], sizes = [1, 64], strides = [1, 1]} : vector<5x64xf32> to vector<1x64xf32>
    %28 = vector.broadcast %27 : vector<1x64xf32> to vector<8x64xf32>
    %29 = arith.addf %26, %28 : vector<8x64xf32>
    %30 = vector.extract_strided_slice %19 {offsets = [0, 0], sizes = [8, 1], strides = [1, 1]} : vector<8x16xf32> to vector<8x1xf32>
    %cst_28 = arith.constant 0.000000e+00 : f32
    %31 = vector.broadcast %cst_28 : f32 to vector<8x1xf32>
    %32 = arith.cmpf oeq, %30, %31 : vector<8x1xf32>
    %cst_29 = arith.constant -1.000000e+30 : f32
    %cst_30 = arith.constant 0.000000e+00 : f32
    %33 = vector.broadcast %cst_29 : f32 to vector<8x1xf32>
    %34 = vector.broadcast %cst_30 : f32 to vector<8x1xf32>
    %35 = arith.select %32, %33, %34 : vector<8x1xi1>, vector<8x1xf32>
    %36 = vector.extract_strided_slice %24 {offsets = [0, 0], sizes = [8, 32], strides = [1, 1]} : vector<8x64xf32> to vector<8x32xf32>
    %37 = vector.extract_strided_slice %24 {offsets = [0, 32], sizes = [8, 32], strides = [1, 1]} : vector<8x64xf32> to vector<8x32xf32>
    %38 = arith.truncf %4 : vector<8x32xf32> to vector<8x32xbf16>
    %39 = arith.truncf %36 : vector<8x32xf32> to vector<8x32xbf16>
    %40 = arith.truncf %37 : vector<8x32xf32> to vector<8x32xbf16>
    %41 = vector.extract_strided_slice %39 {offsets = [0, 0], sizes = [8, 8], strides = [1, 1]} : vector<8x32xbf16> to vector<8x8xbf16>
    %42 = vector.extract_strided_slice %38 {offsets = [0, 0], sizes = [8, 8], strides = [1, 1]} : vector<8x32xbf16> to vector<8x8xbf16>
    %cst_31 = arith.constant dense<0.000000e+00> : vector<8x8xf32>
    %43 = tpu.matmul %41, %42, %cst_31 {dimension_numbers = #tpu.dot_dimension_numbers<[1], [1], [0], [0], [0, 0, 1, 0], [], []>} : vector<8x8xbf16>, vector<8x8xbf16>, vector<8x8xf32> -> vector<8x8xf32>
    %cst_32 = arith.constant 0.353553385 : f32
    %44 = vector.broadcast %cst_32 : f32 to vector<8x8xf32>
    %45 = arith.mulf %43, %44 : vector<8x8xf32>
    %46 = vector.broadcast %35 : vector<8x1xf32> to vector<8x8xf32>
    %47 = arith.addf %45, %46 : vector<8x8xf32>
    %cst_33 = arith.constant dense<0xFF800000> : vector<8xf32>
    %48 = vector.multi_reduction <maximumf>, %47, %cst_33 [0] : vector<8x8xf32> to vector<8xf32>
    %49 = vector.shape_cast %48 : vector<8xf32> to vector<1x8xf32>
    %50 = vector.broadcast %49 : vector<1x8xf32> to vector<8x8xf32>
    %51 = arith.subf %47, %50 : vector<8x8xf32>
    %52 = math.exp %51 : vector<8x8xf32>
    %cst_34 = arith.constant dense<0.000000e+00> : vector<8xf32>
    %53 = vector.multi_reduction <add>, %52, %cst_34 [0] : vector<8x8xf32> to vector<8xf32>
    %54 = vector.shape_cast %53 : vector<8xf32> to vector<1x8xf32>
    %55 = tpu.reciprocal %54 {approx = true} : vector<1x8xf32> -> vector<1x8xf32>
    %56 = vector.broadcast %55 : vector<1x8xf32> to vector<8x8xf32>
    %57 = arith.mulf %52, %56 : vector<8x8xf32>
    %58 = arith.truncf %57 : vector<8x8xf32> to vector<8x8xbf16>
    %59 = vector.extract_strided_slice %40 {offsets = [0, 0], sizes = [8, 8], strides = [1, 1]} : vector<8x32xbf16> to vector<8x8xbf16>
    %cst_35 = arith.constant dense<0.000000e+00> : vector<8x8xf32>
    %60 = tpu.matmul %58, %59, %cst_35 {dimension_numbers = #tpu.dot_dimension_numbers<[0], [0], [1], [1], [0, 1, 1, 1], [], []>} : vector<8x8xbf16>, vector<8x8xbf16>, vector<8x8xf32> -> vector<8x8xf32>
    %61 = vector.extract_strided_slice %39 {offsets = [0, 8], sizes = [8, 8], strides = [1, 1]} : vector<8x32xbf16> to vector<8x8xbf16>
    %62 = vector.extract_strided_slice %38 {offsets = [0, 8], sizes = [8, 8], strides = [1, 1]} : vector<8x32xbf16> to vector<8x8xbf16>
    %cst_36 = arith.constant dense<0.000000e+00> : vector<8x8xf32>
    %63 = tpu.matmul %61, %62, %cst_36 {dimension_numbers = #tpu.dot_dimension_numbers<[1], [1], [0], [0], [0, 0, 1, 0], [], []>} : vector<8x8xbf16>, vector<8x8xbf16>, vector<8x8xf32> -> vector<8x8xf32>
    %cst_37 = arith.constant 0.353553385 : f32
    %64 = vector.broadcast %cst_37 : f32 to vector<8x8xf32>
    %65 = arith.mulf %63, %64 : vector<8x8xf32>
    %66 = vector.broadcast %35 : vector<8x1xf32> to vector<8x8xf32>
    %67 = arith.addf %65, %66 : vector<8x8xf32>
    %cst_38 = arith.constant dense<0xFF800000> : vector<8xf32>
    %68 = vector.multi_reduction <maximumf>, %67, %cst_38 [0] : vector<8x8xf32> to vector<8xf32>
    %69 = vector.shape_cast %68 : vector<8xf32> to vector<1x8xf32>
    %70 = vector.broadcast %69 : vector<1x8xf32> to vector<8x8xf32>
    %71 = arith.subf %67, %70 : vector<8x8xf32>
    %72 = math.exp %71 : vector<8x8xf32>
    %cst_39 = arith.constant dense<0.000000e+00> : vector<8xf32>
    %73 = vector.multi_reduction <add>, %72, %cst_39 [0] : vector<8x8xf32> to vector<8xf32>
    %74 = vector.shape_cast %73 : vector<8xf32> to vector<1x8xf32>
    %75 = tpu.reciprocal %74 {approx = true} : vector<1x8xf32> -> vector<1x8xf32>
    %76 = vector.broadcast %75 : vector<1x8xf32> to vector<8x8xf32>
    %77 = arith.mulf %72, %76 : vector<8x8xf32>
    %78 = arith.truncf %77 : vector<8x8xf32> to vector<8x8xbf16>
    %79 = vector.extract_strided_slice %40 {offsets = [0, 8], sizes = [8, 8], strides = [1, 1]} : vector<8x32xbf16> to vector<8x8xbf16>
    %cst_40 = arith.constant dense<0.000000e+00> : vector<8x8xf32>
    %80 = tpu.matmul %78, %79, %cst_40 {dimension_numbers = #tpu.dot_dimension_numbers<[0], [0], [1], [1], [0, 1, 1, 1], [], []>} : vector<8x8xbf16>, vector<8x8xbf16>, vector<8x8xf32> -> vector<8x8xf32>
    %81 = vector.extract_strided_slice %39 {offsets = [0, 16], sizes = [8, 8], strides = [1, 1]} : vector<8x32xbf16> to vector<8x8xbf16>
    %82 = vector.extract_strided_slice %38 {offsets = [0, 16], sizes = [8, 8], strides = [1, 1]} : vector<8x32xbf16> to vector<8x8xbf16>
    %cst_41 = arith.constant dense<0.000000e+00> : vector<8x8xf32>
    %83 = tpu.matmul %81, %82, %cst_41 {dimension_numbers = #tpu.dot_dimension_numbers<[1], [1], [0], [0], [0, 0, 1, 0], [], []>} : vector<8x8xbf16>, vector<8x8xbf16>, vector<8x8xf32> -> vector<8x8xf32>
    %cst_42 = arith.constant 0.353553385 : f32
    %84 = vector.broadcast %cst_42 : f32 to vector<8x8xf32>
    %85 = arith.mulf %83, %84 : vector<8x8xf32>
    %86 = vector.broadcast %35 : vector<8x1xf32> to vector<8x8xf32>
    %87 = arith.addf %85, %86 : vector<8x8xf32>
    %cst_43 = arith.constant dense<0xFF800000> : vector<8xf32>
    %88 = vector.multi_reduction <maximumf>, %87, %cst_43 [0] : vector<8x8xf32> to vector<8xf32>
    %89 = vector.shape_cast %88 : vector<8xf32> to vector<1x8xf32>
    %90 = vector.broadcast %89 : vector<1x8xf32> to vector<8x8xf32>
    %91 = arith.subf %87, %90 : vector<8x8xf32>
    %92 = math.exp %91 : vector<8x8xf32>
    %cst_44 = arith.constant dense<0.000000e+00> : vector<8xf32>
    %93 = vector.multi_reduction <add>, %92, %cst_44 [0] : vector<8x8xf32> to vector<8xf32>
    %94 = vector.shape_cast %93 : vector<8xf32> to vector<1x8xf32>
    %95 = tpu.reciprocal %94 {approx = true} : vector<1x8xf32> -> vector<1x8xf32>
    %96 = vector.broadcast %95 : vector<1x8xf32> to vector<8x8xf32>
    %97 = arith.mulf %92, %96 : vector<8x8xf32>
    %98 = arith.truncf %97 : vector<8x8xf32> to vector<8x8xbf16>
    %99 = vector.extract_strided_slice %40 {offsets = [0, 16], sizes = [8, 8], strides = [1, 1]} : vector<8x32xbf16> to vector<8x8xbf16>
    %cst_45 = arith.constant dense<0.000000e+00> : vector<8x8xf32>
    %100 = tpu.matmul %98, %99, %cst_45 {dimension_numbers = #tpu.dot_dimension_numbers<[0], [0], [1], [1], [0, 1, 1, 1], [], []>} : vector<8x8xbf16>, vector<8x8xbf16>, vector<8x8xf32> -> vector<8x8xf32>
    %101 = vector.extract_strided_slice %39 {offsets = [0, 24], sizes = [8, 8], strides = [1, 1]} : vector<8x32xbf16> to vector<8x8xbf16>
    %102 = vector.extract_strided_slice %38 {offsets = [0, 24], sizes = [8, 8], strides = [1, 1]} : vector<8x32xbf16> to vector<8x8xbf16>
    %cst_46 = arith.constant dense<0.000000e+00> : vector<8x8xf32>
    %103 = tpu.matmul %101, %102, %cst_46 {dimension_numbers = #tpu.dot_dimension_numbers<[1], [1], [0], [0], [0, 0, 1, 0], [], []>} : vector<8x8xbf16>, vector<8x8xbf16>, vector<8x8xf32> -> vector<8x8xf32>
    %cst_47 = arith.constant 0.353553385 : f32
    %104 = vector.broadcast %cst_47 : f32 to vector<8x8xf32>
    %105 = arith.mulf %103, %104 : vector<8x8xf32>
    %106 = vector.broadcast %35 : vector<8x1xf32> to vector<8x8xf32>
    %107 = arith.addf %105, %106 : vector<8x8xf32>
    %cst_48 = arith.constant dense<0xFF800000> : vector<8xf32>
    %108 = vector.multi_reduction <maximumf>, %107, %cst_48 [0] : vector<8x8xf32> to vector<8xf32>
    %109 = vector.shape_cast %108 : vector<8xf32> to vector<1x8xf32>
    %110 = vector.broadcast %109 : vector<1x8xf32> to vector<8x8xf32>
    %111 = arith.subf %107, %110 : vector<8x8xf32>
    %112 = math.exp %111 : vector<8x8xf32>
    %cst_49 = arith.constant dense<0.000000e+00> : vector<8xf32>
    %113 = vector.multi_reduction <add>, %112, %cst_49 [0] : vector<8x8xf32> to vector<8xf32>
    %114 = vector.shape_cast %113 : vector<8xf32> to vector<1x8xf32>
    %115 = tpu.reciprocal %114 {approx = true} : vector<1x8xf32> -> vector<1x8xf32>
    %116 = vector.broadcast %115 : vector<1x8xf32> to vector<8x8xf32>
    %117 = arith.mulf %112, %116 : vector<8x8xf32>
    %118 = arith.truncf %117 : vector<8x8xf32> to vector<8x8xbf16>
    %119 = vector.extract_strided_slice %40 {offsets = [0, 24], sizes = [8, 8], strides = [1, 1]} : vector<8x32xbf16> to vector<8x8xbf16>
    %cst_50 = arith.constant dense<0.000000e+00> : vector<8x8xf32>
    %120 = tpu.matmul %118, %119, %cst_50 {dimension_numbers = #tpu.dot_dimension_numbers<[0], [0], [1], [1], [0, 1, 1, 1], [], []>} : vector<8x8xbf16>, vector<8x8xbf16>, vector<8x8xf32> -> vector<8x8xf32>
    %121 = tpu.concatenate %60, %80, %100, %120 in 1 : vector<8x8xf32>, vector<8x8xf32>, vector<8x8xf32>, vector<8x8xf32> -> vector<8x32xf32>
    %122 = arith.truncf %121 : vector<8x32xf32> to vector<8x32xbf16>
    %cst_51 = arith.constant dense<0.000000e+00> : vector<8x32xf32>
    %123 = tpu.matmul %122, %11, %cst_51 {dimension_numbers = #tpu.dot_dimension_numbers<[1], [0], [0], [1], [0, 0, 1, 1], [], []>} : vector<8x32xbf16>, vector<32x32xbf16>, vector<8x32xf32> -> vector<8x32xf32>
    %124 = vector.extract_strided_slice %0 {offsets = [3, 0], sizes = [1, 32], strides = [1, 1]} : vector<5x64xf32> to vector<1x32xf32>
    %125 = vector.broadcast %124 : vector<1x32xf32> to vector<8x32xf32>
    %126 = arith.addf %123, %125 : vector<8x32xf32>
    %127 = arith.addf %2, %126 : vector<8x32xf32>
    %128 = arith.truncf %127 : vector<8x32xf32> to vector<8x32xbf16>
    %cst_52 = arith.constant dense<0.000000e+00> : vector<8x32xf32>
    %129 = tpu.matmul %128, %13, %cst_52 {dimension_numbers = #tpu.dot_dimension_numbers<[1], [0], [0], [1], [0, 0, 1, 1], [], []>} : vector<8x32xbf16>, vector<32x32xbf16>, vector<8x32xf32> -> vector<8x32xf32>
    %130 = vector.extract_strided_slice %0 {offsets = [3, 32], sizes = [1, 32], strides = [1, 1]} : vector<5x64xf32> to vector<1x32xf32>
    %131 = vector.broadcast %130 : vector<1x32xf32> to vector<8x32xf32>
    %132 = arith.addf %129, %131 : vector<8x32xf32>
    %cst_53 = arith.constant 0.000000e+00 : f32
    %133 = vector.broadcast %cst_53 : f32 to vector<8x32xf32>
    %134 = arith.maximumf %132, %133 : vector<8x32xf32>
    %135 = arith.addf %127, %134 : vector<8x32xf32>
    %136 = arith.truncf %135 : vector<8x32xf32> to vector<8x32xbf16>
    %cst_54 = arith.constant dense<0.000000e+00> : vector<8x64xf32>
    %137 = tpu.matmul %136, %9, %cst_54 {dimension_numbers = #tpu.dot_dimension_numbers<[1], [0], [0], [1], [0, 0, 1, 1], [], []>} : vector<8x32xbf16>, vector<32x64xbf16>, vector<8x64xf32> -> vector<8x64xf32>
    %138 = vector.extract_strided_slice %0 {offsets = [2, 0], sizes = [1, 64], strides = [1, 1]} : vector<5x64xf32> to vector<1x64xf32>
    %139 = vector.broadcast %138 : vector<1x64xf32> to vector<8x64xf32>
    %140 = arith.addf %137, %139 : vector<8x64xf32>
    %141 = vector.extract_strided_slice %135 {offsets = [0, 0], sizes = [8, 1], strides = [1, 1]} : vector<8x32xf32> to vector<8x1xf32>
    %cst_55 = arith.constant 0.000000e+00 : f32
    %142 = vector.broadcast %cst_55 : f32 to vector<8x1xf32>
    %143 = arith.cmpf oeq, %141, %142 : vector<8x1xf32>
    %cst_56 = arith.constant -1.000000e+30 : f32
    %cst_57 = arith.constant 0.000000e+00 : f32
    %144 = vector.broadcast %cst_56 : f32 to vector<8x1xf32>
    %145 = vector.broadcast %cst_57 : f32 to vector<8x1xf32>
    %146 = arith.select %143, %144, %145 : vector<8x1xi1>, vector<8x1xf32>
    %147 = vector.extract_strided_slice %29 {offsets = [0, 32], sizes = [8, 32], strides = [1, 1]} : vector<8x64xf32> to vector<8x32xf32>
    %148 = vector.extract_strided_slice %140 {offsets = [0, 0], sizes = [8, 32], strides = [1, 1]} : vector<8x64xf32> to vector<8x32xf32>
    %149 = vector.extract_strided_slice %140 {offsets = [0, 32], sizes = [8, 32], strides = [1, 1]} : vector<8x64xf32> to vector<8x32xf32>
    %150 = arith.truncf %147 : vector<8x32xf32> to vector<8x32xbf16>
    %151 = arith.truncf %148 : vector<8x32xf32> to vector<8x32xbf16>
    %152 = arith.truncf %149 : vector<8x32xf32> to vector<8x32xbf16>
    %153 = vector.extract_strided_slice %151 {offsets = [0, 0], sizes = [8, 8], strides = [1, 1]} : vector<8x32xbf16> to vector<8x8xbf16>
    %154 = vector.extract_strided_slice %150 {offsets = [0, 0], sizes = [8, 8], strides = [1, 1]} : vector<8x32xbf16> to vector<8x8xbf16>
    %cst_58 = arith.constant dense<0.000000e+00> : vector<8x8xf32>
    %155 = tpu.matmul %153, %154, %cst_58 {dimension_numbers = #tpu.dot_dimension_numbers<[1], [1], [0], [0], [0, 0, 1, 0], [], []>} : vector<8x8xbf16>, vector<8x8xbf16>, vector<8x8xf32> -> vector<8x8xf32>
    %cst_59 = arith.constant 0.353553385 : f32
    %156 = vector.broadcast %cst_59 : f32 to vector<8x8xf32>
    %157 = arith.mulf %155, %156 : vector<8x8xf32>
    %158 = vector.broadcast %146 : vector<8x1xf32> to vector<8x8xf32>
    %159 = arith.addf %157, %158 : vector<8x8xf32>
    %cst_60 = arith.constant dense<0xFF800000> : vector<8xf32>
    %160 = vector.multi_reduction <maximumf>, %159, %cst_60 [0] : vector<8x8xf32> to vector<8xf32>
    %161 = vector.shape_cast %160 : vector<8xf32> to vector<1x8xf32>
    %162 = vector.broadcast %161 : vector<1x8xf32> to vector<8x8xf32>
    %163 = arith.subf %159, %162 : vector<8x8xf32>
    %164 = math.exp %163 : vector<8x8xf32>
    %cst_61 = arith.constant dense<0.000000e+00> : vector<8xf32>
    %165 = vector.multi_reduction <add>, %164, %cst_61 [0] : vector<8x8xf32> to vector<8xf32>
    %166 = vector.shape_cast %165 : vector<8xf32> to vector<1x8xf32>
    %167 = tpu.reciprocal %166 {approx = true} : vector<1x8xf32> -> vector<1x8xf32>
    %168 = vector.broadcast %167 : vector<1x8xf32> to vector<8x8xf32>
    %169 = arith.mulf %164, %168 : vector<8x8xf32>
    %170 = arith.truncf %169 : vector<8x8xf32> to vector<8x8xbf16>
    %171 = vector.extract_strided_slice %152 {offsets = [0, 0], sizes = [8, 8], strides = [1, 1]} : vector<8x32xbf16> to vector<8x8xbf16>
    %cst_62 = arith.constant dense<0.000000e+00> : vector<8x8xf32>
    %172 = tpu.matmul %170, %171, %cst_62 {dimension_numbers = #tpu.dot_dimension_numbers<[0], [0], [1], [1], [0, 1, 1, 1], [], []>} : vector<8x8xbf16>, vector<8x8xbf16>, vector<8x8xf32> -> vector<8x8xf32>
    %173 = vector.extract_strided_slice %151 {offsets = [0, 8], sizes = [8, 8], strides = [1, 1]} : vector<8x32xbf16> to vector<8x8xbf16>
    %174 = vector.extract_strided_slice %150 {offsets = [0, 8], sizes = [8, 8], strides = [1, 1]} : vector<8x32xbf16> to vector<8x8xbf16>
    %cst_63 = arith.constant dense<0.000000e+00> : vector<8x8xf32>
    %175 = tpu.matmul %173, %174, %cst_63 {dimension_numbers = #tpu.dot_dimension_numbers<[1], [1], [0], [0], [0, 0, 1, 0], [], []>} : vector<8x8xbf16>, vector<8x8xbf16>, vector<8x8xf32> -> vector<8x8xf32>
    %cst_64 = arith.constant 0.353553385 : f32
    %176 = vector.broadcast %cst_64 : f32 to vector<8x8xf32>
    %177 = arith.mulf %175, %176 : vector<8x8xf32>
    %178 = vector.broadcast %146 : vector<8x1xf32> to vector<8x8xf32>
    %179 = arith.addf %177, %178 : vector<8x8xf32>
    %cst_65 = arith.constant dense<0xFF800000> : vector<8xf32>
    %180 = vector.multi_reduction <maximumf>, %179, %cst_65 [0] : vector<8x8xf32> to vector<8xf32>
    %181 = vector.shape_cast %180 : vector<8xf32> to vector<1x8xf32>
    %182 = vector.broadcast %181 : vector<1x8xf32> to vector<8x8xf32>
    %183 = arith.subf %179, %182 : vector<8x8xf32>
    %184 = math.exp %183 : vector<8x8xf32>
    %cst_66 = arith.constant dense<0.000000e+00> : vector<8xf32>
    %185 = vector.multi_reduction <add>, %184, %cst_66 [0] : vector<8x8xf32> to vector<8xf32>
    %186 = vector.shape_cast %185 : vector<8xf32> to vector<1x8xf32>
    %187 = tpu.reciprocal %186 {approx = true} : vector<1x8xf32> -> vector<1x8xf32>
    %188 = vector.broadcast %187 : vector<1x8xf32> to vector<8x8xf32>
    %189 = arith.mulf %184, %188 : vector<8x8xf32>
    %190 = arith.truncf %189 : vector<8x8xf32> to vector<8x8xbf16>
    %191 = vector.extract_strided_slice %152 {offsets = [0, 8], sizes = [8, 8], strides = [1, 1]} : vector<8x32xbf16> to vector<8x8xbf16>
    %cst_67 = arith.constant dense<0.000000e+00> : vector<8x8xf32>
    %192 = tpu.matmul %190, %191, %cst_67 {dimension_numbers = #tpu.dot_dimension_numbers<[0], [0], [1], [1], [0, 1, 1, 1], [], []>} : vector<8x8xbf16>, vector<8x8xbf16>, vector<8x8xf32> -> vector<8x8xf32>
    %193 = vector.extract_strided_slice %151 {offsets = [0, 16], sizes = [8, 8], strides = [1, 1]} : vector<8x32xbf16> to vector<8x8xbf16>
    %194 = vector.extract_strided_slice %150 {offsets = [0, 16], sizes = [8, 8], strides = [1, 1]} : vector<8x32xbf16> to vector<8x8xbf16>
    %cst_68 = arith.constant dense<0.000000e+00> : vector<8x8xf32>
    %195 = tpu.matmul %193, %194, %cst_68 {dimension_numbers = #tpu.dot_dimension_numbers<[1], [1], [0], [0], [0, 0, 1, 0], [], []>} : vector<8x8xbf16>, vector<8x8xbf16>, vector<8x8xf32> -> vector<8x8xf32>
    %cst_69 = arith.constant 0.353553385 : f32
    %196 = vector.broadcast %cst_69 : f32 to vector<8x8xf32>
    %197 = arith.mulf %195, %196 : vector<8x8xf32>
    %198 = vector.broadcast %146 : vector<8x1xf32> to vector<8x8xf32>
    %199 = arith.addf %197, %198 : vector<8x8xf32>
    %cst_70 = arith.constant dense<0xFF800000> : vector<8xf32>
    %200 = vector.multi_reduction <maximumf>, %199, %cst_70 [0] : vector<8x8xf32> to vector<8xf32>
    %201 = vector.shape_cast %200 : vector<8xf32> to vector<1x8xf32>
    %202 = vector.broadcast %201 : vector<1x8xf32> to vector<8x8xf32>
    %203 = arith.subf %199, %202 : vector<8x8xf32>
    %204 = math.exp %203 : vector<8x8xf32>
    %cst_71 = arith.constant dense<0.000000e+00> : vector<8xf32>
    %205 = vector.multi_reduction <add>, %204, %cst_71 [0] : vector<8x8xf32> to vector<8xf32>
    %206 = vector.shape_cast %205 : vector<8xf32> to vector<1x8xf32>
    %207 = tpu.reciprocal %206 {approx = true} : vector<1x8xf32> -> vector<1x8xf32>
    %208 = vector.broadcast %207 : vector<1x8xf32> to vector<8x8xf32>
    %209 = arith.mulf %204, %208 : vector<8x8xf32>
    %210 = arith.truncf %209 : vector<8x8xf32> to vector<8x8xbf16>
    %211 = vector.extract_strided_slice %152 {offsets = [0, 16], sizes = [8, 8], strides = [1, 1]} : vector<8x32xbf16> to vector<8x8xbf16>
    %cst_72 = arith.constant dense<0.000000e+00> : vector<8x8xf32>
    %212 = tpu.matmul %210, %211, %cst_72 {dimension_numbers = #tpu.dot_dimension_numbers<[0], [0], [1], [1], [0, 1, 1, 1], [], []>} : vector<8x8xbf16>, vector<8x8xbf16>, vector<8x8xf32> -> vector<8x8xf32>
    %213 = vector.extract_strided_slice %151 {offsets = [0, 24], sizes = [8, 8], strides = [1, 1]} : vector<8x32xbf16> to vector<8x8xbf16>
    %214 = vector.extract_strided_slice %150 {offsets = [0, 24], sizes = [8, 8], strides = [1, 1]} : vector<8x32xbf16> to vector<8x8xbf16>
    %cst_73 = arith.constant dense<0.000000e+00> : vector<8x8xf32>
    %215 = tpu.matmul %213, %214, %cst_73 {dimension_numbers = #tpu.dot_dimension_numbers<[1], [1], [0], [0], [0, 0, 1, 0], [], []>} : vector<8x8xbf16>, vector<8x8xbf16>, vector<8x8xf32> -> vector<8x8xf32>
    %cst_74 = arith.constant 0.353553385 : f32
    %216 = vector.broadcast %cst_74 : f32 to vector<8x8xf32>
    %217 = arith.mulf %215, %216 : vector<8x8xf32>
    %218 = vector.broadcast %146 : vector<8x1xf32> to vector<8x8xf32>
    %219 = arith.addf %217, %218 : vector<8x8xf32>
    %cst_75 = arith.constant dense<0xFF800000> : vector<8xf32>
    %220 = vector.multi_reduction <maximumf>, %219, %cst_75 [0] : vector<8x8xf32> to vector<8xf32>
    %221 = vector.shape_cast %220 : vector<8xf32> to vector<1x8xf32>
    %222 = vector.broadcast %221 : vector<1x8xf32> to vector<8x8xf32>
    %223 = arith.subf %219, %222 : vector<8x8xf32>
    %224 = math.exp %223 : vector<8x8xf32>
    %cst_76 = arith.constant dense<0.000000e+00> : vector<8xf32>
    %225 = vector.multi_reduction <add>, %224, %cst_76 [0] : vector<8x8xf32> to vector<8xf32>
    %226 = vector.shape_cast %225 : vector<8xf32> to vector<1x8xf32>
    %227 = tpu.reciprocal %226 {approx = true} : vector<1x8xf32> -> vector<1x8xf32>
    %228 = vector.broadcast %227 : vector<1x8xf32> to vector<8x8xf32>
    %229 = arith.mulf %224, %228 : vector<8x8xf32>
    %230 = arith.truncf %229 : vector<8x8xf32> to vector<8x8xbf16>
    %231 = vector.extract_strided_slice %152 {offsets = [0, 24], sizes = [8, 8], strides = [1, 1]} : vector<8x32xbf16> to vector<8x8xbf16>
    %cst_77 = arith.constant dense<0.000000e+00> : vector<8x8xf32>
    %232 = tpu.matmul %230, %231, %cst_77 {dimension_numbers = #tpu.dot_dimension_numbers<[0], [0], [1], [1], [0, 1, 1, 1], [], []>} : vector<8x8xbf16>, vector<8x8xbf16>, vector<8x8xf32> -> vector<8x8xf32>
    %233 = tpu.concatenate %172, %192, %212, %232 in 1 : vector<8x8xf32>, vector<8x8xf32>, vector<8x8xf32>, vector<8x8xf32> -> vector<8x32xf32>
    %234 = vector.extract_strided_slice %29 {offsets = [0, 0], sizes = [8, 32], strides = [1, 1]} : vector<8x64xf32> to vector<8x32xf32>
    %235 = arith.truncf %233 : vector<8x32xf32> to vector<8x32xbf16>
    %cst_78 = arith.constant dense<0.000000e+00> : vector<8x32xf32>
    %236 = tpu.matmul %235, %15, %cst_78 {dimension_numbers = #tpu.dot_dimension_numbers<[1], [0], [0], [1], [0, 0, 1, 1], [], []>} : vector<8x32xbf16>, vector<32x32xbf16>, vector<8x32xf32> -> vector<8x32xf32>
    %237 = vector.extract_strided_slice %0 {offsets = [4, 0], sizes = [1, 32], strides = [1, 1]} : vector<5x64xf32> to vector<1x32xf32>
    %238 = vector.broadcast %237 : vector<1x32xf32> to vector<8x32xf32>
    %239 = arith.addf %236, %238 : vector<8x32xf32>
    %240 = arith.addf %234, %239 : vector<8x32xf32>
    %241 = arith.truncf %240 : vector<8x32xf32> to vector<8x32xbf16>
    %cst_79 = arith.constant dense<0.000000e+00> : vector<8x32xf32>
    %242 = tpu.matmul %241, %17, %cst_79 {dimension_numbers = #tpu.dot_dimension_numbers<[1], [0], [0], [1], [0, 0, 1, 1], [], []>} : vector<8x32xbf16>, vector<32x32xbf16>, vector<8x32xf32> -> vector<8x32xf32>
    %243 = vector.extract_strided_slice %0 {offsets = [4, 32], sizes = [1, 32], strides = [1, 1]} : vector<5x64xf32> to vector<1x32xf32>
    %244 = vector.broadcast %243 : vector<1x32xf32> to vector<8x32xf32>
    %245 = arith.addf %242, %244 : vector<8x32xf32>
    %cst_80 = arith.constant 0.000000e+00 : f32
    %246 = vector.broadcast %cst_80 : f32 to vector<8x32xf32>
    %247 = arith.maximumf %245, %246 : vector<8x32xf32>
    %248 = arith.addf %240, %247 : vector<8x32xf32>
    %249 = vector.shape_cast %248 : vector<8x32xf32> to vector<1x8x32xf32>
    %c0_81 = arith.constant 0 : index
    %c0_82 = arith.constant 0 : index
    %c0_83 = arith.constant 0 : index
    %250 = vector.load %arg7[%c0_81, %c0_82, %c0_83] : memref<1x8x32xf32, #tpu.memory_space<vmem>>, vector<1x8x32xf32>
    tpu.vector_store %arg7[%c0_81, %c0_82, %c0_83], %249 {strides = array<i32>} : memref<1x8x32xf32, #tpu.memory_space<vmem>>, vector<1x8x32xf32>,
    return
  }
  func.func @transform_0(%arg0: i32) -> (i32, i32, i32) {
    %c0_i32 = arith.constant 0 : i32
    %c0_i32_0 = arith.constant 0 : i32
    %c0_i32_1 = arith.constant 0 : i32
    return %arg0, %c0_i32, %c0_i32_0 : i32, i32, i32
  }
  func.func @transform_1(%arg0: i32) -> (i32, i32, i32) {
    %c0_i32 = arith.constant 0 : i32
    %c0_i32_0 = arith.constant 0 : i32
    %c0_i32_1 = arith.constant 0 : i32
    %c0_i32_2 = arith.constant 0 : i32
    return %c0_i32, %c0_i32_0, %c0_i32_1 : i32, i32, i32
  }
  func.func @transform_2(%arg0: i32) -> (i32, i32, i32) {
    %c0_i32 = arith.constant 0 : i32
    %c0_i32_0 = arith.constant 0 : i32
    %c0_i32_1 = arith.constant 0 : i32
    %c0_i32_2 = arith.constant 0 : i32
    return %c0_i32, %c0_i32_0, %c0_i32_1 : i32, i32, i32
  }
  func.func @transform_3(%arg0: i32) -> (i32, i32) {
    %c0_i32 = arith.constant 0 : i32
    %c0_i32_0 = arith.constant 0 : i32
    %c0_i32_1 = arith.constant 0 : i32
    return %c0_i32, %c0_i32_0 : i32, i32
  }
  func.func @transform_4(%arg0: i32) -> (i32, i32, i32) {
    %c0_i32 = arith.constant 0 : i32
    %c0_i32_0 = arith.constant 0 : i32
    %c0_i32_1 = arith.constant 0 : i32
    %c0_i32_2 = arith.constant 0 : i32
    return %c0_i32, %c0_i32_0, %c0_i32_1 : i32, i32, i32
  }
  func.func @transform_5(%arg0: i32) -> (i32, i32) {
    %c0_i32 = arith.constant 0 : i32
    %c0_i32_0 = arith.constant 0 : i32
    %c0_i32_1 = arith.constant 0 : i32
    return %c0_i32, %c0_i32_0 : i32, i32
  }
  func.func @transform_6(%arg0: i32) -> (i32, i32, i32) {
    %c0_i32 = arith.constant 0 : i32
    %c0_i32_0 = arith.constant 0 : i32
    %c0_i32_1 = arith.constant 0 : i32
    return %arg0, %c0_i32, %c0_i32_0 : i32, i32, i32
  }
}

</mosaic_0001>

<llo_original>
// kernel: tpu_custom_call.1
$region0: #{tpu_custom_call.1}
  #allocation0 [shape = 'u32[]', space=smem, size = 0x4, offset = 0x4, fixed_abs, tag = 'smem constant byte address 0x4 - core index']
  #allocation1 [shape = 'u32[144,128]{1,0:T(1,128)}', space=vmem, size = 0x12000, scoped, tag = 'internal scratch']
  %s0 = inlined_call_operand.hbm [shape: f32[2,8,16], index: 0, kind: input, shape index: {}]
  %s1 = inlined_call_operand.hbm [shape: f32[2,8,32], index: 1, kind: input, shape index: {}]
  %s2 = inlined_call_operand.hbm [shape: bf16[2,16,64], index: 2, kind: input, shape index: {}]
  %s3 = inlined_call_operand.hbm [shape: bf16[32,64], index: 3, kind: input, shape index: {}]
  %s4 = inlined_call_operand.hbm [shape: bf16[4,32,32], index: 4, kind: input, shape index: {}]
  %s5 = inlined_call_operand.vmem [shape: f32[5,64], index: 5, kind: input, shape index: {}]
  %s6 = inlined_call_operand.hbm [shape: f32[2,8,32], index: 6, kind: output, shape index: {}]
  %s7 = sld [smem:[#allocation0]]
  $region77: #{tpu_custom_call.1} parent=0
    _
  %s9 = ssub.s32 1, %s7
  %s10 = scalar_select 0, %s9, %s7
  $region1: #{tpu_custom_call.1} parent=0
    #allocation2 [shape = 'u8[8192]{0}', space=vmem, size = 0x2000, scoped, tag = 'input window, operand 0']
    #allocation3 [shape = 's32[2]{0}', space=sflag, size = 0x8, scoped, tag = 'scoped memory for tpu_custom_call.1']
    #allocation4 [shape = 's32[2]{0}', space=sflag, size = 0x8, scoped, tag = 'scoped memory for tpu_custom_call.1']
    #allocation5 [shape = 'u8[8192]{0}', space=vmem, size = 0x2000, scoped, tag = 'input window, operand 1, single buffered']
    #allocation6 [shape = 's32[1]{0}', space=sflag, size = 0x4, scoped, tag = 'scoped memory for tpu_custom_call.1']
    #allocation7 [shape = 'u8[8192]{0}', space=vmem, size = 0x2000, scoped, tag = 'input window, operand 2, single buffered']
    #allocation8 [shape = 'u8[8192]{0}', space=vmem, size = 0x2000, scoped, tag = 'input window, operand 3, single buffered']
    #allocation9 [shape = 's32[1]{0}', space=sflag, size = 0x4, scoped, tag = 'scoped memory for tpu_custom_call.1']
    #allocation10 [shape = 'u8[32768]{0}', space=vmem, size = 0x8000, scoped, tag = 'input window, operand 4, single buffered']
    #allocation11 [shape = 'u8[8192]{0}', space=vmem, size = 0x2000, scoped, tag = 'output window, operand 0']
    %11 = vsyncpa [#allocation3], 0
    %s12 = scalar_lea.sflag [#allocation3], 1
    %13 = vsyncpa %s12, 0
    %14 = vsyncpa [#allocation6], 0
    %15 = vsyncpa [#allocation9], 0
    %16 = vsyncpa [#allocation4], 0
    %s17 = scalar_lea.sflag [#allocation4], 1
    %18 = vsyncpa %s17, 0
    loop: start=0, step=1, limit=4
    $region2: #{tpu_custom_call.1} parent=1 // loop_pre_header
      _
    $region3: #{tpu_custom_call.1} parent=1 // loop_header
      %s20 = sphi 0, %s24
      %p21 = scmp.ge.s32.totalorder %s20, 4
      %s30 = sphi 0, %s32
      %s33 = sphi 0, %s30
      %s34 = sphi 0, %s33
      %s50 = sphi 0, %s34
      %s54 = sphi 0, %s54
      %s56 = sphi 0, %s54
      %s57 = sphi 0, %s56
      %s71 = sphi 0, %s57
      %s75 = sphi 0, %s75
      %s77 = sphi 0, %s75
      %s78 = sphi 0, %s77
      %s92 = sphi 0, %s78
      %s96 = sphi 0, %s96
      %s98 = sphi 0, %s96
      %s99 = sphi 0, %s98
      %s113 = sphi 0, %s99
      %s117 = sphi 0, %s117
      %s119 = sphi 0, %s117
      %s120 = sphi 0, %s119
      %s134 = sphi 0, %s120
      %s138 = sphi 0, %s138
      %s140 = sphi 0, %s138
      %s141 = sphi 0, %s140
      %s155 = sphi 0, %s141
      %s161 = sphi 0, %s163
      %s164 = sphi 0, %s161
      %s165 = sphi 0, %s164
      %s181 = sphi 0, %s165
    $region4: #{tpu_custom_call.1} parent=1 // loop_header_branch
      %23 = sbr.rel (%p21) target = $region8
    $region5: #{tpu_custom_call.1} parent=1 // loop_body
      %s25 = ssub.s32 %s20, 1
      %s26 = ssub.s32 %s20, 2
      %s27 = sadd.s32 %s20, 1
      %s28 = ssub.s32 %s20, %s27
      %p29 = scmp.eq.s32.totalorder %s28, 0
      %s31 = sadd.s32 %s30, 1
      %s32 = scalar_select %p29, %s30, %s31
      %p35 = pneg %p29
      %p36 = scmp.eq.s32.totalorder %s20, 1
      %p37 = por %p35, %p36
      %p38 = scmp.ne.s32.totalorder %s30, %s33
      %p39 = scmp.eq.s32.totalorder %s20, 0
      %p40 = por %p38, %p39
      %p41 = scmp.ne.s32.totalorder %s30, %s33
      %p42 = scmp.eq.s32.totalorder %s25, 1
      %p43 = por %p41, %p42
      %p44 = scmp.ne.s32.totalorder %s33, %s34
      %p45 = scmp.eq.s32.totalorder %s25, 0
      %p46 = por %p44, %p45
      %p47 = scmp.ne.s32.totalorder %s33, %s34
      %p48 = scmp.eq.s32.totalorder %s26, 1
      %p49 = por %p47, %p48
      %p51 = scmp.ne.s32.totalorder %s34, %s50
      %p52 = scmp.eq.s32.totalorder %s26, 0
      %p53 = por %p51, %p52
      %s55 = sadd.s32 %s54, 1
      %p58 = scmp.eq.s32.totalorder %s20, 1
      %p59 = scmp.ne.s32.totalorder %s54, %s56
      %p60 = scmp.eq.s32.totalorder %s20, 0
      %p61 = por %p59, %p60
      %p62 = scmp.ne.s32.totalorder %s54, %s56
      %p63 = scmp.eq.s32.totalorder %s25, 1
      %p64 = por %p62, %p63
      %p65 = scmp.ne.s32.totalorder %s56, %s57
      %p66 = scmp.eq.s32.totalorder %s25, 0
      %p67 = por %p65, %p66
      %p68 = scmp.ne.s32.totalorder %s56, %s57
      %p69 = scmp.eq.s32.totalorder %s26, 1
      %p70 = por %p68, %p69
      %p72 = scmp.ne.s32.totalorder %s57, %s71
      %p73 = scmp.eq.s32.totalorder %s26, 0
      %p74 = por %p72, %p73
      %s76 = sadd.s32 %s75, 1
      %p79 = scmp.eq.s32.totalorder %s20, 1
      %p80 = scmp.ne.s32.totalorder %s75, %s77
      %p81 = scmp.eq.s32.totalorder %s20, 0
      %p82 = por %p80, %p81
      %p83 = scmp.ne.s32.totalorder %s75, %s77
      %p84 = scmp.eq.s32.totalorder %s25, 1
      %p85 = por %p83, %p84
      %p86 = scmp.ne.s32.totalorder %s77, %s78
      %p87 = scmp.eq.s32.totalorder %s25, 0
      %p88 = por %p86, %p87
      %p89 = scmp.ne.s32.totalorder %s77, %s78
      %p90 = scmp.eq.s32.totalorder %s26, 1
      %p91 = por %p89, %p90
      %p93 = scmp.ne.s32.totalorder %s78, %s92
      %p94 = scmp.eq.s32.totalorder %s26, 0
      %p95 = por %p93, %p94
      %s97 = sadd.s32 %s96, 1
      %p100 = scmp.eq.s32.totalorder %s20, 1
      %p101 = scmp.ne.s32.totalorder %s96, %s98
      %p102 = scmp.eq.s32.totalorder %s20, 0
      %p103 = por %p101, %p102
      %p104 = scmp.ne.s32.totalorder %s96, %s98
      %p105 = scmp.eq.s32.totalorder %s25, 1
      %p106 = por %p104, %p105
      %p107 = scmp.ne.s32.totalorder %s98, %s99
      %p108 = scmp.eq.s32.totalorder %s25, 0
      %p109 = por %p107, %p108
      %p110 = scmp.ne.s32.totalorder %s98, %s99
      %p111 = scmp.eq.s32.totalorder %s26, 1
      %p112 = por %p110, %p111
      %p114 = scmp.ne.s32.totalorder %s99, %s113
      %p115 = scmp.eq.s32.totalorder %s26, 0
      %p116 = por %p114, %p115
      %s118 = sadd.s32 %s117, 1
      %p121 = scmp.eq.s32.totalorder %s20, 1
      %p122 = scmp.ne.s32.totalorder %s117, %s119
      %p123 = scmp.eq.s32.totalorder %s20, 0
      %p124 = por %p122, %p123
      %p125 = scmp.ne.s32.totalorder %s117, %s119
      %p126 = scmp.eq.s32.totalorder %s25, 1
      %p127 = por %p125, %p126
      %p128 = scmp.ne.s32.totalorder %s119, %s120
      %p129 = scmp.eq.s32.totalorder %s25, 0
      %p130 = por %p128, %p129
      %p131 = scmp.ne.s32.totalorder %s119, %s120
      %p132 = scmp.eq.s32.totalorder %s26, 1
      %p133 = por %p131, %p132
      %p135 = scmp.ne.s32.totalorder %s120, %s134
      %p136 = scmp.eq.s32.totalorder %s26, 0
      %p137 = por %p135, %p136
      %s139 = sadd.s32 %s138, 1
      %p142 = scmp.eq.s32.totalorder %s20, 1
      %p143 = scmp.ne.s32.totalorder %s138, %s140
      %p144 = scmp.eq.s32.totalorder %s20, 0
      %p145 = por %p143, %p144
      %p146 = scmp.ne.s32.totalorder %s138, %s140
      %p147 = scmp.eq.s32.totalorder %s25, 1
      %p148 = por %p146, %p147
      %p149 = scmp.ne.s32.totalorder %s140, %s141
      %p150 = scmp.eq.s32.totalorder %s25, 0
      %p151 = por %p149, %p150
      %p152 = scmp.ne.s32.totalorder %s140, %s141
      %p153 = scmp.eq.s32.totalorder %s26, 1
      %p154 = por %p152, %p153
      %p156 = scmp.ne.s32.totalorder %s141, %s155
      %p157 = scmp.eq.s32.totalorder %s26, 0
      %p158 = por %p156, %p157
      %s159 = ssub.s32 %s20, %s27
      %p160 = scmp.eq.s32.totalorder %s159, 0
      %s162 = sadd.s32 %s161, 1
      %s163 = scalar_select %p160, %s161, %s162
      %p166 = pneg %p160
      %p167 = scmp.eq.s32.totalorder %s20, 1
      %p168 = por %p166, %p167
      %p169 = scmp.ne.s32.totalorder %s161, %s164
      %p170 = scmp.eq.s32.totalorder %s20, 0
      %p171 = por %p169, %p170
      %p172 = scmp.ne.s32.totalorder %s161, %s164
      %p173 = scmp.eq.s32.totalorder %s25, 1
      %p174 = por %p172, %p173
      %p175 = scmp.ne.s32.totalorder %s164, %s165
      %p176 = scmp.eq.s32.totalorder %s25, 0
      %p177 = por %p175, %p176
      %p178 = scmp.ne.s32.totalorder %s164, %s165
      %p179 = scmp.eq.s32.totalorder %s26, 1
      %p180 = por %p178, %p179
      %p182 = scmp.ne.s32.totalorder %s165, %s181
      %p183 = scmp.eq.s32.totalorder %s26, 0
      %p184 = por %p182, %p183
      %p185 = scmp.le.s32.totalorder 1, %s20
      %p186 = scmp.lt.s32.totalorder %s20, 3
      %p187 = pnand %p185, %p186
      %p188 = pneg %p187
      // Predicated region
      $region9: #{tpu_custom_call.1} parent=5 // pred_check
        _
      $region10: #{tpu_custom_call.1} parent=5 // pred_check_branch
        %190 = sbr.rel (%p187) target = $region12
      $region11: #{tpu_custom_call.1} parent=5 // pred_region
        %s191 = ssub.s32 %s20, 1
        // Predicated region
        $region13: #{tpu_custom_call.1} parent=11 // pred_check
          %p192 = pneg %p67
        $region14: #{tpu_custom_call.1} parent=11 // pred_check_branch
          %194 = sbr.rel (%p192) target = $region16
        $region15: #{tpu_custom_call.1} parent=11 // pred_region
          %s196 = ssub.s32 256, 256
          %197 = vsyncadd [#allocation6], %s196
          %s198 = sshll.u32 [#allocation5], 4
          %s199 = int_to_ptr.vmem [resolvable:$true] %s198
          %204 = dma.hbm_to_vmem [thread:$0]  %s1, 256, %s199, [#allocation6], 128, 128, 8
        $region16: #{tpu_custom_call.1} parent=11 // pred_fallthru
          _
        // Predicated region
        $region17: #{tpu_custom_call.1} parent=11 // pred_check
          %p205 = pneg %p88
        $region18: #{tpu_custom_call.1} parent=11 // pred_check_branch
          %207 = sbr.rel (%p205) target = $region20
        $region19: #{tpu_custom_call.1} parent=11 // pred_region
          %s209 = ssub.s32 256, 256
          %210 = vsyncadd [#allocation6], %s209
          %s211 = sshll.u32 [#allocation7], 4
          %s212 = int_to_ptr.vmem [resolvable:$true] %s211
          %217 = dma.hbm_to_vmem [thread:$0]  %s2, 256, %s212, [#allocation6], 64, 64, 4
        $region20: #{tpu_custom_call.1} parent=11 // pred_fallthru
          _
        // Predicated region
        $region21: #{tpu_custom_call.1} parent=11 // pred_check
          %p218 = pneg %p109
        $region22: #{tpu_custom_call.1} parent=11 // pred_check_branch
          %220 = sbr.rel (%p218) target = $region24
        $region23: #{tpu_custom_call.1} parent=11 // pred_region
          %s222 = ssub.s32 256, 256
          %223 = vsyncadd [#allocation9], %s222
          %s224 = sshll.u32 [#allocation8], 4
          %s225 = int_to_ptr.vmem [resolvable:$true] %s224
          %230 = dma.hbm_to_vmem [thread:$0]  %s3, 256, %s225, [#allocation9], 64, 64, 4
        $region24: #{tpu_custom_call.1} parent=11 // pred_fallthru
          _
        // Predicated region
        $region25: #{tpu_custom_call.1} parent=11 // pred_check
          %p231 = pneg %p130
        $region26: #{tpu_custom_call.1} parent=11 // pred_check_branch
          %233 = sbr.rel (%p231) target = $region28
        $region27: #{tpu_custom_call.1} parent=11 // pred_region
          %s235 = ssub.s32 1024, 1024
          %236 = vsyncadd [#allocation9], %s235
          %s237 = sshll.u32 [#allocation10], 4
          %s238 = int_to_ptr.vmem [resolvable:$true] %s237
          %243 = dma.hbm_to_vmem [thread:$0]  %s4, 1024, %s238, [#allocation9], 64, 64, 4
        $region28: #{tpu_custom_call.1} parent=11 // pred_fallthru
          _
        // Predicated region
        $region29: #{tpu_custom_call.1} parent=11 // pred_check
          %p244 = pneg %p151
        $region30: #{tpu_custom_call.1} parent=11 // pred_check_branch
          %246 = sbr.rel (%p244) target = $region32
        $region31: #{tpu_custom_call.1} parent=11 // pred_region
          _
        $region32: #{tpu_custom_call.1} parent=11 // pred_fallthru
          _
      $region12: #{tpu_custom_call.1} parent=5 // pred_fallthru
        _
      %p247 = scmp.lt.s32.totalorder %s20, 2
      // Predicated region
      $region33: #{tpu_custom_call.1} parent=5 // pred_check
        %p248 = pneg %p247
      $region34: #{tpu_custom_call.1} parent=5 // pred_check_branch
        %250 = sbr.rel (%p248) target = $region36
      $region35: #{tpu_custom_call.1} parent=5 // pred_region
        // Predicated region
        $region37: #{tpu_custom_call.1} parent=35 // pred_check
          %p251 = pneg %p40
        $region38: #{tpu_custom_call.1} parent=35 // pred_check_branch
          %253 = sbr.rel (%p251) target = $region40
        $region39: #{tpu_custom_call.1} parent=35 // pred_region
          %s254 = sand.u32 %s30, 1
          %s255 = scalar_lea.sflag [#allocation3], %s254
          %s256 = sand.u32 %s30, 1
          %s257 = smul.addr %s256, 8
          %s258 = scalar_lea.vmem [#allocation2], %s257
          %s260 = ssub.s32 128, 128
          %261 = vsyncadd %s255, %s260
          %s262 = smul.addr %s20, 128
          %s263 = scalar_lea.hbm %s0, %s262
          %s265 = sshll.u32 %s258, 4
          %s266 = int_to_ptr.vmem [resolvable:$true] %s265
          %268 = dma.hbm_to_vmem [thread:$0]  %s263, 128, %s266, %s255
        $region40: #{tpu_custom_call.1} parent=35 // pred_fallthru
          _
      $region36: #{tpu_custom_call.1} parent=5 // pred_fallthru
        _
      %p269 = scmp.le.s32.totalorder 1, %s20
      %p270 = scmp.lt.s32.totalorder %s20, 3
      %p271 = pnand %p269, %p270
      %p272 = pneg %p271
      // Predicated region
      $region41: #{tpu_custom_call.1} parent=5 // pred_check
        _
      $region42: #{tpu_custom_call.1} parent=5 // pred_check_branch
        %274 = sbr.rel (%p271) target = $region44
      $region43: #{tpu_custom_call.1} parent=5 // pred_region
        %s275 = ssub.s32 %s20, 1
        %s276 = sand.u32 %s33, 1
        %s277 = scalar_lea.sflag [#allocation3], %s276
        %s278 = sand.u32 %s33, 1
        %s279 = smul.addr %s278, 8
        %s280 = scalar_lea.vmem [#allocation2], %s279
        // Predicated region
        $region45: #{tpu_custom_call.1} parent=43 // pred_check
          %p281 = pneg %p46
        $region46: #{tpu_custom_call.1} parent=43 // pred_check_branch
          %283 = sbr.rel (%p281) target = $region48
        $region47: #{tpu_custom_call.1} parent=43 // pred_region
          %284 = dma.done %s277, 128
        $region48: #{tpu_custom_call.1} parent=43 // pred_fallthru
          _
        // Predicated region
        $region49: #{tpu_custom_call.1} parent=43 // pred_check
          %p285 = pneg %p67
        $region50: #{tpu_custom_call.1} parent=43 // pred_check_branch
          %287 = sbr.rel (%p285) target = $region52
        $region51: #{tpu_custom_call.1} parent=43 // pred_region
          %288 = dma.done [#allocation6], 256
        $region52: #{tpu_custom_call.1} parent=43 // pred_fallthru
          _
        // Predicated region
        $region53: #{tpu_custom_call.1} parent=43 // pred_check
          %p289 = pneg %p88
        $region54: #{tpu_custom_call.1} parent=43 // pred_check_branch
          %291 = sbr.rel (%p289) target = $region56
        $region55: #{tpu_custom_call.1} parent=43 // pred_region
          %292 = dma.done [#allocation6], 256
        $region56: #{tpu_custom_call.1} parent=43 // pred_fallthru
          _
        // Predicated region
        $region57: #{tpu_custom_call.1} parent=43 // pred_check
          %p293 = pneg %p109
        $region58: #{tpu_custom_call.1} parent=43 // pred_check_branch
          %295 = sbr.rel (%p293) target = $region60
        $region59: #{tpu_custom_call.1} parent=43 // pred_region
          %296 = dma.done [#allocation9], 256
        $region60: #{tpu_custom_call.1} parent=43 // pred_fallthru
          _
        // Predicated region
        $region61: #{tpu_custom_call.1} parent=43 // pred_check
          %p297 = pneg %p130
        $region62: #{tpu_custom_call.1} parent=43 // pred_check_branch
          %299 = sbr.rel (%p297) target = $region64
        $region63: #{tpu_custom_call.1} parent=43 // pred_region
          %300 = dma.done [#allocation9], 1024
        $region64: #{tpu_custom_call.1} parent=43 // pred_fallthru
          _
        %s301 = sand.u32 %s33, 1
        %s302 = scalar_lea.sflag [#allocation3], %s301
        %s303 = sand.u32 %s33, 1
        %s304 = smul.addr %s303, 8
        %s305 = scalar_lea.vmem [#allocation2], %s304
        %p306 = pneg %p46
        %p307 = pneg %p43
        %p308 = pneg %p67
        %p309 = pneg %p64
        %p310 = pneg %p88
        %p311 = pneg %p85
        %p312 = pneg %p109
        %p313 = pneg %p106
        %p314 = pneg %p130
        %p315 = pneg %p127
        %p316 = pneg %p151
        %p317 = pneg %p148
        %p318 = pneg %p177
        %p319 = pneg %p174
        %s320 = sand.u32 %s164, 1
        %s321 = scalar_lea.sflag [#allocation4], %s320
        %s322 = sand.u32 %s164, 1
        %s323 = smul.addr %s322, 8
        %s324 = scalar_lea.vmem [#allocation11], %s323
        %v326 = vld [vmem:[%s5] sm:$0x1f]
        %v327 = vld [vmem:[#allocation5] sm:$0xff]
        %s328 = scalar_lea.vmem [#allocation5], 8
        %v329 = vld [vmem:[%s328] sm:$0xff]
        %v330 = vld [vmem:[#allocation7] sm:$0xf]
        %v331 = vld [vmem:[#allocation7 + $0x4] sm:$0xf]
        %s332 = scalar_lea.vmem [#allocation7], 8
        %v333 = vld [vmem:[%s332] sm:$0xf]
        %v334 = vld [vmem:[%s332 + $0x4] sm:$0xf]
        %v335 = vld [vmem:[#allocation8] sm:$0xf]
        %v336 = vld [vmem:[#allocation8 + $0x4] sm:$0xf]
        %v337 = vld [vmem:[#allocation8 + $0x8] sm:$0xf]
        %v338 = vld [vmem:[#allocation8 + $0xc] sm:$0xf]
        %v339 = vld [vmem:[#allocation10] sm:$0xf]
        %v340 = vld [vmem:[#allocation10 + $0x4] sm:$0xf]
        %v341 = vld [vmem:[#allocation10 + $0x8] sm:$0xf]
        %v342 = vld [vmem:[#allocation10 + $0xc] sm:$0xf]
        %s343 = scalar_lea.vmem [#allocation10], 16
        %v344 = vld [vmem:[%s343] sm:$0xf]
        %v345 = vld [vmem:[%s343 + $0x4] sm:$0xf]
        %v346 = vld [vmem:[%s343 + $0x8] sm:$0xf]
        %v347 = vld [vmem:[%s343 + $0xc] sm:$0xf]
        %s348 = scalar_lea.vmem [#allocation10], 32
        %v349 = vld [vmem:[%s348] sm:$0xf]
        %v350 = vld [vmem:[%s348 + $0x4] sm:$0xf]
        %v351 = vld [vmem:[%s348 + $0x8] sm:$0xf]
        %v352 = vld [vmem:[%s348 + $0xc] sm:$0xf]
        %s353 = scalar_lea.vmem [#allocation10], 48
        %v354 = vld [vmem:[%s353] sm:$0xf]
        %v355 = vld [vmem:[%s353 + $0x4] sm:$0xf]
        %v356 = vld [vmem:[%s353 + $0x8] sm:$0xf]
        %v357 = vld [vmem:[%s353 + $0xc] sm:$0xf]
        %v358 = vld [vmem:[%s280] sm:$0xff]
        %v359 = vpack.c.bf16 %v358, %v358
        %v360 = vlaneseq
        %v361 = vshrl.u32 %v360, 7
        %v362 = vsub.s32 0, %v361
        %v363 = vrot.slane %v326, %v362
        %v366 = vunpack.c.l.b16 %v330
        %v367 = vunpack.c.l.b16 %v331
        %v368 = vpack.c.b16 %v367, %v366
        %vm370 = vcmask 130048
        %v372 = vsel %vm370, %v359, 0
        %374 = vmatprep.subr.bf16.mxu0 0
        %375 = vmatpush1.bf16.msra.mxu0 %v368
        %376 = vmatprep.subr.bf16.mxu0 0
        %377 = vmatpush1.bf16.msra.mxu0 0
        %378 = vmatprep.subr.bf16.mxu0 0
        %379 = vmatpush1.bf16.msra.mxu0 0
        %380 = vmatprep.subr.bf16.mxu0 0
        %381 = vmatpush1.bf16.msra.mxu0 0
        %382 = vmatprep.subr.bf16.mxu0 0
        %383 = vmatpush1.bf16.msra.mxu0 0
        %384 = vmatprep.subr.bf16.mxu0 0
        %385 = vmatpush1.bf16.msra.mxu0 0
        %386 = vmatprep.subr.bf16.mxu0 0
        %387 = vmatpush1.bf16.msra.mxu0 0
        %388 = vmatprep.subr.bf16.mxu0 0
        %389 = vmatpush1.bf16.msra.mxu0 0
        %390 = vmatprep.subr.bf16.mxu0 0
        %391 = vmatpush1.bf16.msra.mxu0 0
        %392 = vmatprep.subr.bf16.mxu0 0
        %393 = vmatpush1.bf16.msra.mxu0 0
        %394 = vmatprep.subr.bf16.mxu0 0
        %395 = vmatpush1.bf16.msra.mxu0 0
        %396 = vmatprep.subr.bf16.mxu0 0
        %397 = vmatpush1.bf16.msra.mxu0 0
        %398 = vmatprep.subr.bf16.mxu0 0
        %399 = vmatpush1.bf16.msra.mxu0 0
        %400 = vmatprep.subr.bf16.mxu0 0
        %401 = vmatpush1.bf16.msra.mxu0 0
        %402 = vmatprep.subr.bf16.mxu0 0
        %403 = vmatpush1.bf16.msra.mxu0 0
        %404 = vmatprep.subr.bf16.mxu0 0
        %405 = vmatpush1.bf16.msra.mxu0 0
        %406 = vmatprep.mubr.bf16.mxu0 0
        %407 = vmatmul.mubr.bf16.gmra.mrb[0].mxu0 %v372
        %v408 = vpop.f32.mrb[0].mxu0
        %v409 = vadd.f32 %v363, %v408
        %v410 = vpop.f32.mrb[0].mxu0
        %v411 = vpop.f32.mrb[0].mxu0
        %v412 = vpop.f32.mrb[0].mxu0
        %413 = vdwg.mxu0
        %v414 = vlaneseq
        %v415 = vshrl.u32 %v414, 7
        %v416 = vsub.s32 1, %v415
        %v417 = vrot.slane %v326, %v416
        %v420 = vunpack.c.l.b16 %v333
        %v421 = vunpack.c.l.b16 %v334
        %v422 = vpack.c.b16 %v421, %v420
        %424 = vmatprep.subr.bf16.mxu0 0
        %425 = vmatpush1.bf16.msra.mxu0 %v422
        %426 = vmatprep.subr.bf16.mxu0 0
        %427 = vmatpush1.bf16.msra.mxu0 0
        %428 = vmatprep.subr.bf16.mxu0 0
        %429 = vmatpush1.bf16.msra.mxu0 0
        %430 = vmatprep.subr.bf16.mxu0 0
        %431 = vmatpush1.bf16.msra.mxu0 0
        %432 = vmatprep.subr.bf16.mxu0 0
        %433 = vmatpush1.bf16.msra.mxu0 0
        %434 = vmatprep.subr.bf16.mxu0 0
        %435 = vmatpush1.bf16.msra.mxu0 0
        %436 = vmatprep.subr.bf16.mxu0 0
        %437 = vmatpush1.bf16.msra.mxu0 0
        %438 = vmatprep.subr.bf16.mxu0 0
        %439 = vmatpush1.bf16.msra.mxu0 0
        %440 = vmatprep.subr.bf16.mxu0 0
        %441 = vmatpush1.bf16.msra.mxu0 0
        %442 = vmatprep.subr.bf16.mxu0 0
        %443 = vmatpush1.bf16.msra.mxu0 0
        %444 = vmatprep.subr.bf16.mxu0 0
        %445 = vmatpush1.bf16.msra.mxu0 0
        %446 = vmatprep.subr.bf16.mxu0 0
        %447 = vmatpush1.bf16.msra.mxu0 0
        %448 = vmatprep.subr.bf16.mxu0 0
        %449 = vmatpush1.bf16.msra.mxu0 0
        %450 = vmatprep.subr.bf16.mxu0 0
        %451 = vmatpush1.bf16.msra.mxu0 0
        %452 = vmatprep.subr.bf16.mxu0 0
        %453 = vmatpush1.bf16.msra.mxu0 0
        %454 = vmatprep.subr.bf16.mxu0 0
        %455 = vmatpush1.bf16.msra.mxu0 0
        %456 = vmatprep.mubr.bf16.mxu0 0
        %457 = vmatmul.mubr.bf16.gmra.mrb[0].mxu0 %v372
        %v458 = vpop.f32.mrb[0].mxu0
        %v459 = vadd.f32 %v417, %v458
        %v460 = vpop.f32.mrb[0].mxu0
        %v461 = vpop.f32.mrb[0].mxu0
        %v462 = vpop.f32.mrb[0].mxu0
        %463 = vdwg.mxu0
        %vm464 = vcmp.eq.f32.partialorder %v358, 0.0
        %v465 = vsel %vm464, -1e+30, 0.0
        %v466 = vpack.c.bf16 %v329, %v329
        %v467 = vpack.c.bf16 %v409, %v409
        %vm468 = vcmask 64512
        %v470 = vsel %vm468, %v467, 0
        %v473 = vsel %vm468, %v466, 0
        %475 = vmatprep.subr.bf16.mxu0 0
        %476 = vmatpush1.bf16.xpose.msra.mxu0 %v473
        %477 = vmatprep.subr.bf16.mxu0 0
        %478 = vmatpush1.bf16.xpose.msra.mxu0 0
        %479 = vmatprep.subr.bf16.mxu0 0
        %480 = vmatpush1.bf16.xpose.msra.mxu0 0
        %481 = vmatprep.subr.bf16.mxu0 0
        %482 = vmatpush1.bf16.xpose.msra.mxu0 0
        %483 = vmatprep.subr.bf16.mxu0 0
        %484 = vmatpush1.bf16.xpose.msra.mxu0 0
        %485 = vmatprep.subr.bf16.mxu0 0
        %486 = vmatpush1.bf16.xpose.msra.mxu0 0
        %487 = vmatprep.subr.bf16.mxu0 0
        %488 = vmatpush1.bf16.xpose.msra.mxu0 0
        %489 = vmatprep.subr.bf16.mxu0 0
        %490 = vmatpush1.bf16.xpose.msra.mxu0 0
        %491 = vmatprep.subr.bf16.mxu0 0
        %492 = vmatpush1.bf16.xpose.msra.mxu0 0
        %493 = vmatprep.subr.bf16.mxu0 0
        %494 = vmatpush1.bf16.xpose.msra.mxu0 0
        %495 = vmatprep.subr.bf16.mxu0 0
        %496 = vmatpush1.bf16.xpose.msra.mxu0 0
        %497 = vmatprep.subr.bf16.mxu0 0
        %498 = vmatpush1.bf16.xpose.msra.mxu0 0
        %499 = vmatprep.subr.bf16.mxu0 0
        %500 = vmatpush1.bf16.xpose.msra.mxu0 0
        %501 = vmatprep.subr.bf16.mxu0 0
        %502 = vmatpush1.bf16.xpose.msra.mxu0 0
        %503 = vmatprep.subr.bf16.mxu0 0
        %504 = vmatpush1.bf16.xpose.msra.mxu0 0
        %505 = vmatprep.subr.bf16.mxu0 0
        %506 = vmatpush1.bf16.xpose.msra.mxu0 0
        %507 = vmatprep.mubr.bf16.mxu0 0
        %508 = vmatmul.mubr.bf16.gmra.mrb[0].mxu0 %v470
        %v509 = vpop.f32.mrb[0].mxu0
        %v510 = vadd.f32 0.0, %v509
        %v511 = vpop.f32.mrb[0].mxu0
        %v512 = vpop.f32.mrb[0].mxu0
        %v513 = vpop.f32.mrb[0].mxu0
        %514 = vdwg.mxu0
        %v515 = vmul.f32 %v510, 0.35355338
        %517 = vset.pattern.permute.xlu0 0
        %518 = vperm.xlu0 %517, %v465
        %v519 = vpop.permute.xlu0 %518
        %v521 = vadd.f32 %v515, %v519
        %v522 = vsel %vm468, %v521, -inf
        %v523 = vrot.slane %v522, 4
        %v524 = vmax.f32 %v522, %v523
        %v525 = vrot.slane %v524, 2
        %v526 = vmax.f32 %v524, %v525
        %v527 = vrot.slane %v526, 1
        %v528 = vmax.f32 %v526, %v527
        %v529 = vsub.f32 %v521, %v528
        %v530 = vmul.f32 %v529, 1.442695
        %v531 = vpow.pop %v530
        %v532 = vsel %vm468, %v531, 0.0
        %v533 = vrot.slane %v532, 4
        %v534 = vadd.f32 %v532, %v533
        %v535 = vrot.slane %v534, 2
        %v536 = vadd.f32 %v534, %v535
        %v537 = vrot.slane %v536, 1
        %v538 = vadd.f32 %v536, %v537
        %v539 = vrcp.pop %v538
        %v540 = vmul.f32 %v531, %v539
        %v541 = vpack.c.bf16 %v540, %v540
        %542 = vxpose.xlu0.c.b16.start [1/8] %v541, 128
        %543 = vxpose.xlu0.c.b16.cont [2/8] 0, 128
        %544 = vxpose.xlu0.c.b16.cont [3/8] 0, 128
        %545 = vxpose.xlu0.c.b16.cont [4/8] 0, 128
        %546 = vxpose.xlu0.c.b16.cont [5/8] 0, 128
        %547 = vxpose.xlu0.c.b16.cont [6/8] 0, 128
        %548 = vxpose.xlu0.c.b16.cont [7/8] 0, 128
        %549 = vxpose.xlu0.c.b16.end [8/8] 0, 128
        %v550 = vpop.trf.xlu0
        %v551 = vpop.trf.xlu0
        %v552 = vpop.trf.xlu0
        %v553 = vpop.trf.xlu0
        %v554 = vpop.trf.xlu0
        %v555 = vpop.trf.xlu0
        %v556 = vpop.trf.xlu0
        %v557 = vpop.trf.xlu0
        %559 = vrot.lane.b32.xlu0 %v467, 96
        %v560 = vpop.permute.xlu0 %559
        %v562 = vsel %vm468, %v550, 0
        %vm564 = vcmask 1043456
        %v566 = vsel %vm564, %v560, 0
        %568 = vmatprep.subr.bf16.mxu0 0
        %569 = vmatpush1.bf16.msra.mxu0 %v566
        %570 = vmatprep.subr.bf16.mxu0 0
        %571 = vmatpush1.bf16.msra.mxu0 0
        %572 = vmatprep.subr.bf16.mxu0 0
        %573 = vmatpush1.bf16.msra.mxu0 0
        %574 = vmatprep.subr.bf16.mxu0 0
        %575 = vmatpush1.bf16.msra.mxu0 0
        %576 = vmatprep.subr.bf16.mxu0 0
        %577 = vmatpush1.bf16.msra.mxu0 0
        %578 = vmatprep.subr.bf16.mxu0 0
        %579 = vmatpush1.bf16.msra.mxu0 0
        %580 = vmatprep.subr.bf16.mxu0 0
        %581 = vmatpush1.bf16.msra.mxu0 0
        %582 = vmatprep.subr.bf16.mxu0 0
        %583 = vmatpush1.bf16.msra.mxu0 0
        %584 = vmatprep.subr.bf16.mxu0 0
        %585 = vmatpush1.bf16.msra.mxu0 0
        %586 = vmatprep.subr.bf16.mxu0 0
        %587 = vmatpush1.bf16.msra.mxu0 0
        %588 = vmatprep.subr.bf16.mxu0 0
        %589 = vmatpush1.bf16.msra.mxu0 0
        %590 = vmatprep.subr.bf16.mxu0 0
        %591 = vmatpush1.bf16.msra.mxu0 0
        %592 = vmatprep.subr.bf16.mxu0 0
        %593 = vmatpush1.bf16.msra.mxu0 0
        %594 = vmatprep.subr.bf16.mxu0 0
        %595 = vmatpush1.bf16.msra.mxu0 0
        %596 = vmatprep.subr.bf16.mxu0 0
        %597 = vmatpush1.bf16.msra.mxu0 0
        %598 = vmatprep.subr.bf16.mxu0 0
        %599 = vmatpush1.bf16.msra.mxu0 0
        %600 = vmatprep.mubr.bf16.mxu0 0
        %601 = vmatmul.mubr.bf16.gmra.mrb[0].mxu0 %v562
        %v602 = vpop.f32.mrb[0].mxu0
        %v603 = vadd.f32 0.0, %v602
        %v604 = vpop.f32.mrb[0].mxu0
        %v605 = vpop.f32.mrb[0].mxu0
        %v606 = vpop.f32.mrb[0].mxu0
        %607 = vdwg.mxu0
        %608 = vrot.lane.b32.xlu0 %v467, 120
        %v609 = vpop.permute.xlu0 %608
        %611 = vrot.lane.b32.xlu0 %v466, 120
        %v612 = vpop.permute.xlu0 %611
        %v614 = vsel %vm468, %v609, 0
        %v617 = vsel %vm468, %v612, 0
        %619 = vmatprep.subr.bf16.mxu0 0
        %620 = vmatpush1.bf16.xpose.msra.mxu0 %v617
        %621 = vmatprep.subr.bf16.mxu0 0
        %622 = vmatpush1.bf16.xpose.msra.mxu0 0
        %623 = vmatprep.subr.bf16.mxu0 0
        %624 = vmatpush1.bf16.xpose.msra.mxu0 0
        %625 = vmatprep.subr.bf16.mxu0 0
        %626 = vmatpush1.bf16.xpose.msra.mxu0 0
        %627 = vmatprep.subr.bf16.mxu0 0
        %628 = vmatpush1.bf16.xpose.msra.mxu0 0
        %629 = vmatprep.subr.bf16.mxu0 0
        %630 = vmatpush1.bf16.xpose.msra.mxu0 0
        %631 = vmatprep.subr.bf16.mxu0 0
        %632 = vmatpush1.bf16.xpose.msra.mxu0 0
        %633 = vmatprep.subr.bf16.mxu0 0
        %634 = vmatpush1.bf16.xpose.msra.mxu0 0
        %635 = vmatprep.subr.bf16.mxu0 0
        %636 = vmatpush1.bf16.xpose.msra.mxu0 0
        %637 = vmatprep.subr.bf16.mxu0 0
        %638 = vmatpush1.bf16.xpose.msra.mxu0 0
        %639 = vmatprep.subr.bf16.mxu0 0
        %640 = vmatpush1.bf16.xpose.msra.mxu0 0
        %641 = vmatprep.subr.bf16.mxu0 0
        %642 = vmatpush1.bf16.xpose.msra.mxu0 0
        %643 = vmatprep.subr.bf16.mxu0 0
        %644 = vmatpush1.bf16.xpose.msra.mxu0 0
        %645 = vmatprep.subr.bf16.mxu0 0
        %646 = vmatpush1.bf16.xpose.msra.mxu0 0
        %647 = vmatprep.subr.bf16.mxu0 0
        %648 = vmatpush1.bf16.xpose.msra.mxu0 0
        %649 = vmatprep.subr.bf16.mxu0 0
        %650 = vmatpush1.bf16.xpose.msra.mxu0 0
        %651 = vmatprep.mubr.bf16.mxu0 0
        %652 = vmatmul.mubr.bf16.gmra.mrb[0].mxu0 %v614
        %v653 = vpop.f32.mrb[0].mxu0
        %v654 = vadd.f32 0.0, %v653
        %v655 = vpop.f32.mrb[0].mxu0
        %v656 = vpop.f32.mrb[0].mxu0
        %v657 = vpop.f32.mrb[0].mxu0
        %658 = vdwg.mxu0
        %v659 = vmul.f32 %v654, 0.35355338
        %v660 = vadd.f32 %v659, %v519
        %v661 = vsel %vm468, %v660, -inf
        %v662 = vrot.slane %v661, 4
        %v663 = vmax.f32 %v661, %v662
        %v664 = vrot.slane %v663, 2
        %v665 = vmax.f32 %v663, %v664
        %v666 = vrot.slane %v665, 1
        %v667 = vmax.f32 %v665, %v666
        %v668 = vsub.f32 %v660, %v667
        %v669 = vmul.f32 %v668, 1.442695
        %v670 = vpow.pop %v669
        %v671 = vsel %vm468, %v670, 0.0
        %v672 = vrot.slane %v671, 4
        %v673 = vadd.f32 %v671, %v672
        %v674 = vrot.slane %v673, 2
        %v675 = vadd.f32 %v673, %v674
        %v676 = vrot.slane %v675, 1
        %v677 = vadd.f32 %v675, %v676
        %v678 = vrcp.pop %v677
        %v679 = vmul.f32 %v670, %v678
        %v680 = vpack.c.bf16 %v679, %v679
        %681 = vxpose.xlu0.c.b16.start [1/8] %v680, 128
        %682 = vxpose.xlu0.c.b16.cont [2/8] 0, 128
        %683 = vxpose.xlu0.c.b16.cont [3/8] 0, 128
        %684 = vxpose.xlu0.c.b16.cont [4/8] 0, 128
        %685 = vxpose.xlu0.c.b16.cont [5/8] 0, 128
        %686 = vxpose.xlu0.c.b16.cont [6/8] 0, 128
        %687 = vxpose.xlu0.c.b16.cont [7/8] 0, 128
        %688 = vxpose.xlu0.c.b16.end [8/8] 0, 128
        %v689 = vpop.trf.xlu0
        %v690 = vpop.trf.xlu0
        %v691 = vpop.trf.xlu0
        %v692 = vpop.trf.xlu0
        %v693 = vpop.trf.xlu0
        %v694 = vpop.trf.xlu0
        %v695 = vpop.trf.xlu0
        %v696 = vpop.trf.xlu0
        %697 = vrot.lane.b32.xlu0 %v467, 88
        %v698 = vpop.permute.xlu0 %697
        %v700 = vsel %vm468, %v689, 0
        %v703 = vsel %vm564, %v698, 0
        %705 = vmatprep.subr.bf16.mxu0 0
        %706 = vmatpush1.bf16.msra.mxu0 %v703
        %707 = vmatprep.subr.bf16.mxu0 0
        %708 = vmatpush1.bf16.msra.mxu0 0
        %709 = vmatprep.subr.bf16.mxu0 0
        %710 = vmatpush1.bf16.msra.mxu0 0
        %711 = vmatprep.subr.bf16.mxu0 0
        %712 = vmatpush1.bf16.msra.mxu0 0
        %713 = vmatprep.subr.bf16.mxu0 0
        %714 = vmatpush1.bf16.msra.mxu0 0
        %715 = vmatprep.subr.bf16.mxu0 0
        %716 = vmatpush1.bf16.msra.mxu0 0
        %717 = vmatprep.subr.bf16.mxu0 0
        %718 = vmatpush1.bf16.msra.mxu0 0
        %719 = vmatprep.subr.bf16.mxu0 0
        %720 = vmatpush1.bf16.msra.mxu0 0
        %721 = vmatprep.subr.bf16.mxu0 0
        %722 = vmatpush1.bf16.msra.mxu0 0
        %723 = vmatprep.subr.bf16.mxu0 0
        %724 = vmatpush1.bf16.msra.mxu0 0
        %725 = vmatprep.subr.bf16.mxu0 0
        %726 = vmatpush1.bf16.msra.mxu0 0
        %727 = vmatprep.subr.bf16.mxu0 0
        %728 = vmatpush1.bf16.msra.mxu0 0
        %729 = vmatprep.subr.bf16.mxu0 0
        %730 = vmatpush1.bf16.msra.mxu0 0
        %731 = vmatprep.subr.bf16.mxu0 0
        %732 = vmatpush1.bf16.msra.mxu0 0
        %733 = vmatprep.subr.bf16.mxu0 0
        %734 = vmatpush1.bf16.msra.mxu0 0
        %735 = vmatprep.subr.bf16.mxu0 0
        %736 = vmatpush1.bf16.msra.mxu0 0
        %737 = vmatprep.mubr.bf16.mxu0 0
        %738 = vmatmul.mubr.bf16.gmra.mrb[0].mxu0 %v700
        %v739 = vpop.f32.mrb[0].mxu0
        %v740 = vadd.f32 0.0, %v739
        %v741 = vpop.f32.mrb[0].mxu0
        %v742 = vpop.f32.mrb[0].mxu0
        %v743 = vpop.f32.mrb[0].mxu0
        %744 = vdwg.mxu0
        %745 = vrot.lane.b32.xlu0 %v467, 112
        %v746 = vpop.permute.xlu0 %745
        %747 = vrot.lane.b32.xlu0 %v466, 112
        %v748 = vpop.permute.xlu0 %747
        %v750 = vsel %vm468, %v746, 0
        %v753 = vsel %vm468, %v748, 0
        %755 = vmatprep.subr.bf16.mxu0 0
        %756 = vmatpush1.bf16.xpose.msra.mxu0 %v753
        %757 = vmatprep.subr.bf16.mxu0 0
        %758 = vmatpush1.bf16.xpose.msra.mxu0 0
        %759 = vmatprep.subr.bf16.mxu0 0
        %760 = vmatpush1.bf16.xpose.msra.mxu0 0
        %761 = vmatprep.subr.bf16.mxu0 0
        %762 = vmatpush1.bf16.xpose.msra.mxu0 0
        %763 = vmatprep.subr.bf16.mxu0 0
        %764 = vmatpush1.bf16.xpose.msra.mxu0 0
        %765 = vmatprep.subr.bf16.mxu0 0
        %766 = vmatpush1.bf16.xpose.msra.mxu0 0
        %767 = vmatprep.subr.bf16.mxu0 0
        %768 = vmatpush1.bf16.xpose.msra.mxu0 0
        %769 = vmatprep.subr.bf16.mxu0 0
        %770 = vmatpush1.bf16.xpose.msra.mxu0 0
        %771 = vmatprep.subr.bf16.mxu0 0
        %772 = vmatpush1.bf16.xpose.msra.mxu0 0
        %773 = vmatprep.subr.bf16.mxu0 0
        %774 = vmatpush1.bf16.xpose.msra.mxu0 0
        %775 = vmatprep.subr.bf16.mxu0 0
        %776 = vmatpush1.bf16.xpose.msra.mxu0 0
        %777 = vmatprep.subr.bf16.mxu0 0
        %778 = vmatpush1.bf16.xpose.msra.mxu0 0
        %779 = vmatprep.subr.bf16.mxu0 0
        %780 = vmatpush1.bf16.xpose.msra.mxu0 0
        %781 = vmatprep.subr.bf16.mxu0 0
        %782 = vmatpush1.bf16.xpose.msra.mxu0 0
        %783 = vmatprep.subr.bf16.mxu0 0
        %784 = vmatpush1.bf16.xpose.msra.mxu0 0
        %785 = vmatprep.subr.bf16.mxu0 0
        %786 = vmatpush1.bf16.xpose.msra.mxu0 0
        %787 = vmatprep.mubr.bf16.mxu0 0
        %788 = vmatmul.mubr.bf16.gmra.mrb[0].mxu0 %v750
        %v789 = vpop.f32.mrb[0].mxu0
        %v790 = vadd.f32 0.0, %v789
        %v791 = vpop.f32.mrb[0].mxu0
        %v792 = vpop.f32.mrb[0].mxu0
        %v793 = vpop.f32.mrb[0].mxu0
        %794 = vdwg.mxu0
        %v795 = vmul.f32 %v790, 0.35355338
        %v796 = vadd.f32 %v795, %v519
        %v797 = vsel %vm468, %v796, -inf
        %v798 = vrot.slane %v797, 4
        %v799 = vmax.f32 %v797, %v798
        %v800 = vrot.slane %v799, 2
        %v801 = vmax.f32 %v799, %v800
        %v802 = vrot.slane %v801, 1
        %v803 = vmax.f32 %v801, %v802
        %v804 = vsub.f32 %v796, %v803
        %v805 = vmul.f32 %v804, 1.442695
        %v806 = vpow.pop %v805
        %v807 = vsel %vm468, %v806, 0.0
        %v808 = vrot.slane %v807, 4
        %v809 = vadd.f32 %v807, %v808
        %v810 = vrot.slane %v809, 2
        %v811 = vadd.f32 %v809, %v810
        %v812 = vrot.slane %v811, 1
        %v813 = vadd.f32 %v811, %v812
        %v814 = vrcp.pop %v813
        %v815 = vmul.f32 %v806, %v814
        %v816 = vpack.c.bf16 %v815, %v815
        %817 = vxpose.xlu0.c.b16.start [1/8] %v816, 128
        %818 = vxpose.xlu0.c.b16.cont [2/8] 0, 128
        %819 = vxpose.xlu0.c.b16.cont [3/8] 0, 128
        %820 = vxpose.xlu0.c.b16.cont [4/8] 0, 128
        %821 = vxpose.xlu0.c.b16.cont [5/8] 0, 128
        %822 = vxpose.xlu0.c.b16.cont [6/8] 0, 128
        %823 = vxpose.xlu0.c.b16.cont [7/8] 0, 128
        %824 = vxpose.xlu0.c.b16.end [8/8] 0, 128
        %v825 = vpop.trf.xlu0
        %v826 = vpop.trf.xlu0
        %v827 = vpop.trf.xlu0
        %v828 = vpop.trf.xlu0
        %v829 = vpop.trf.xlu0
        %v830 = vpop.trf.xlu0
        %v831 = vpop.trf.xlu0
        %v832 = vpop.trf.xlu0
        %833 = vrot.lane.b32.xlu0 %v467, 80
        %v834 = vpop.permute.xlu0 %833
        %v836 = vsel %vm468, %v825, 0
        %v839 = vsel %vm564, %v834, 0
        %841 = vmatprep.subr.bf16.mxu0 0
        %842 = vmatpush1.bf16.msra.mxu0 %v839
        %843 = vmatprep.subr.bf16.mxu0 0
        %844 = vmatpush1.bf16.msra.mxu0 0
        %845 = vmatprep.subr.bf16.mxu0 0
        %846 = vmatpush1.bf16.msra.mxu0 0
        %847 = vmatprep.subr.bf16.mxu0 0
        %848 = vmatpush1.bf16.msra.mxu0 0
        %849 = vmatprep.subr.bf16.mxu0 0
        %850 = vmatpush1.bf16.msra.mxu0 0
        %851 = vmatprep.subr.bf16.mxu0 0
        %852 = vmatpush1.bf16.msra.mxu0 0
        %853 = vmatprep.subr.bf16.mxu0 0
        %854 = vmatpush1.bf16.msra.mxu0 0
        %855 = vmatprep.subr.bf16.mxu0 0
        %856 = vmatpush1.bf16.msra.mxu0 0
        %857 = vmatprep.subr.bf16.mxu0 0
        %858 = vmatpush1.bf16.msra.mxu0 0
        %859 = vmatprep.subr.bf16.mxu0 0
        %860 = vmatpush1.bf16.msra.mxu0 0
        %861 = vmatprep.subr.bf16.mxu0 0
        %862 = vmatpush1.bf16.msra.mxu0 0
        %863 = vmatprep.subr.bf16.mxu0 0
        %864 = vmatpush1.bf16.msra.mxu0 0
        %865 = vmatprep.subr.bf16.mxu0 0
        %866 = vmatpush1.bf16.msra.mxu0 0
        %867 = vmatprep.subr.bf16.mxu0 0
        %868 = vmatpush1.bf16.msra.mxu0 0
        %869 = vmatprep.subr.bf16.mxu0 0
        %870 = vmatpush1.bf16.msra.mxu0 0
        %871 = vmatprep.subr.bf16.mxu0 0
        %872 = vmatpush1.bf16.msra.mxu0 0
        %873 = vmatprep.mubr.bf16.mxu0 0
        %874 = vmatmul.mubr.bf16.gmra.mrb[0].mxu0 %v836
        %v875 = vpop.f32.mrb[0].mxu0
        %v876 = vadd.f32 0.0, %v875
        %v877 = vpop.f32.mrb[0].mxu0
        %v878 = vpop.f32.mrb[0].mxu0
        %v879 = vpop.f32.mrb[0].mxu0
        %880 = vdwg.mxu0
        %881 = vrot.lane.b32.xlu0 %v467, 104
        %v882 = vpop.permute.xlu0 %881
        %883 = vrot.lane.b32.xlu0 %v466, 104
        %v884 = vpop.permute.xlu0 %883
        %v886 = vsel %vm468, %v882, 0
        %v889 = vsel %vm468, %v884, 0
        %891 = vmatprep.subr.bf16.mxu0 0
        %892 = vmatpush1.bf16.xpose.msra.mxu0 %v889
        %893 = vmatprep.subr.bf16.mxu0 0
        %894 = vmatpush1.bf16.xpose.msra.mxu0 0
        %895 = vmatprep.subr.bf16.mxu0 0
        %896 = vmatpush1.bf16.xpose.msra.mxu0 0
        %897 = vmatprep.subr.bf16.mxu0 0
        %898 = vmatpush1.bf16.xpose.msra.mxu0 0
        %899 = vmatprep.subr.bf16.mxu0 0
        %900 = vmatpush1.bf16.xpose.msra.mxu0 0
        %901 = vmatprep.subr.bf16.mxu0 0
        %902 = vmatpush1.bf16.xpose.msra.mxu0 0
        %903 = vmatprep.subr.bf16.mxu0 0
        %904 = vmatpush1.bf16.xpose.msra.mxu0 0
        %905 = vmatprep.subr.bf16.mxu0 0
        %906 = vmatpush1.bf16.xpose.msra.mxu0 0
        %907 = vmatprep.subr.bf16.mxu0 0
        %908 = vmatpush1.bf16.xpose.msra.mxu0 0
        %909 = vmatprep.subr.bf16.mxu0 0
        %910 = vmatpush1.bf16.xpose.msra.mxu0 0
        %911 = vmatprep.subr.bf16.mxu0 0
        %912 = vmatpush1.bf16.xpose.msra.mxu0 0
        %913 = vmatprep.subr.bf16.mxu0 0
        %914 = vmatpush1.bf16.xpose.msra.mxu0 0
        %915 = vmatprep.subr.bf16.mxu0 0
        %916 = vmatpush1.bf16.xpose.msra.mxu0 0
        %917 = vmatprep.subr.bf16.mxu0 0
        %918 = vmatpush1.bf16.xpose.msra.mxu0 0
        %919 = vmatprep.subr.bf16.mxu0 0
        %920 = vmatpush1.bf16.xpose.msra.mxu0 0
        %921 = vmatprep.subr.bf16.mxu0 0
        %922 = vmatpush1.bf16.xpose.msra.mxu0 0
        %923 = vmatprep.mubr.bf16.mxu0 0
        %924 = vmatmul.mubr.bf16.gmra.mrb[0].mxu0 %v886
        %v925 = vpop.f32.mrb[0].mxu0
        %v926 = vadd.f32 0.0, %v925
        %v927 = vpop.f32.mrb[0].mxu0
        %v928 = vpop.f32.mrb[0].mxu0
        %v929 = vpop.f32.mrb[0].mxu0
        %930 = vdwg.mxu0
        %v931 = vmul.f32 %v926, 0.35355338
        %v932 = vadd.f32 %v931, %v519
        %v933 = vsel %vm468, %v932, -inf
        %v934 = vrot.slane %v933, 4
        %v935 = vmax.f32 %v933, %v934
        %v936 = vrot.slane %v935, 2
        %v937 = vmax.f32 %v935, %v936
        %v938 = vrot.slane %v937, 1
        %v939 = vmax.f32 %v937, %v938
        %v940 = vsub.f32 %v932, %v939
        %v941 = vmul.f32 %v940, 1.442695
        %v942 = vpow.pop %v941
        %v943 = vsel %vm468, %v942, 0.0
        %v944 = vrot.slane %v943, 4
        %v945 = vadd.f32 %v943, %v944
        %v946 = vrot.slane %v945, 2
        %v947 = vadd.f32 %v945, %v946
        %v948 = vrot.slane %v947, 1
        %v949 = vadd.f32 %v947, %v948
        %v950 = vrcp.pop %v949
        %v951 = vmul.f32 %v942, %v950
        %v952 = vpack.c.bf16 %v951, %v951
        %953 = vxpose.xlu0.c.b16.start [1/8] %v952, 128
        %954 = vxpose.xlu0.c.b16.cont [2/8] 0, 128
        %955 = vxpose.xlu0.c.b16.cont [3/8] 0, 128
        %956 = vxpose.xlu0.c.b16.cont [4/8] 0, 128
        %957 = vxpose.xlu0.c.b16.cont [5/8] 0, 128
        %958 = vxpose.xlu0.c.b16.cont [6/8] 0, 128
        %959 = vxpose.xlu0.c.b16.cont [7/8] 0, 128
        %960 = vxpose.xlu0.c.b16.end [8/8] 0, 128
        %v961 = vpop.trf.xlu0
        %v962 = vpop.trf.xlu0
        %v963 = vpop.trf.xlu0
        %v964 = vpop.trf.xlu0
        %v965 = vpop.trf.xlu0
        %v966 = vpop.trf.xlu0
        %v967 = vpop.trf.xlu0
        %v968 = vpop.trf.xlu0
        %969 = vrot.lane.b32.xlu0 %v467, 72
        %v970 = vpop.permute.xlu0 %969
        %v972 = vsel %vm468, %v961, 0
        %v975 = vsel %vm564, %v970, 0
        %977 = vmatprep.subr.bf16.mxu0 0
        %978 = vmatpush1.bf16.msra.mxu0 %v975
        %979 = vmatprep.subr.bf16.mxu0 0
        %980 = vmatpush1.bf16.msra.mxu0 0
        %981 = vmatprep.subr.bf16.mxu0 0
        %982 = vmatpush1.bf16.msra.mxu0 0
        %983 = vmatprep.subr.bf16.mxu0 0
        %984 = vmatpush1.bf16.msra.mxu0 0
        %985 = vmatprep.subr.bf16.mxu0 0
        %986 = vmatpush1.bf16.msra.mxu0 0
        %987 = vmatprep.subr.bf16.mxu0 0
        %988 = vmatpush1.bf16.msra.mxu0 0
        %989 = vmatprep.subr.bf16.mxu0 0
        %990 = vmatpush1.bf16.msra.mxu0 0
        %991 = vmatprep.subr.bf16.mxu0 0
        %992 = vmatpush1.bf16.msra.mxu0 0
        %993 = vmatprep.subr.bf16.mxu0 0
        %994 = vmatpush1.bf16.msra.mxu0 0
        %995 = vmatprep.subr.bf16.mxu0 0
        %996 = vmatpush1.bf16.msra.mxu0 0
        %997 = vmatprep.subr.bf16.mxu0 0
        %998 = vmatpush1.bf16.msra.mxu0 0
        %999 = vmatprep.subr.bf16.mxu0 0
        %1000 = vmatpush1.bf16.msra.mxu0 0
        %1001 = vmatprep.subr.bf16.mxu0 0
        %1002 = vmatpush1.bf16.msra.mxu0 0
        %1003 = vmatprep.subr.bf16.mxu0 0
        %1004 = vmatpush1.bf16.msra.mxu0 0
        %1005 = vmatprep.subr.bf16.mxu0 0
        %1006 = vmatpush1.bf16.msra.mxu0 0
        %1007 = vmatprep.subr.bf16.mxu0 0
        %1008 = vmatpush1.bf16.msra.mxu0 0
        %1009 = vmatprep.mubr.bf16.mxu0 0
        %1010 = vmatmul.mubr.bf16.gmra.mrb[0].mxu0 %v972
        %v1011 = vpop.f32.mrb[0].mxu0
        %v1012 = vadd.f32 0.0, %v1011
        %v1013 = vpop.f32.mrb[0].mxu0
        %v1014 = vpop.f32.mrb[0].mxu0
        %v1015 = vpop.f32.mrb[0].mxu0
        %1016 = vdwg.mxu0
        %1018 = vrot.lane.b32.xlu0 %v740, 8
        %v1019 = vpop.permute.xlu0 %1018
        %1022 = vrot.lane.b32.xlu0 %v876, 16
        %v1023 = vpop.permute.xlu0 %1022
        %1026 = vrot.lane.b32.xlu0 %v1012, 24
        %v1027 = vpop.permute.xlu0 %1026
        %v1029 = vsel %vm468, %v603, %v1019
        %v1030 = vsel %vm370, %v1029, %v1023
        %vm1031 = vcmask 195584
        %v1032 = vsel %vm1031, %v1030, %v1027
        %v1033 = vpack.c.bf16 %v1032, %v1032
        %v1034 = vlaneseq
        %v1035 = vshrl.u32 %v1034, 7
        %v1036 = vsub.s32 3, %v1035
        %v1037 = vrot.slane %v326, %v1036
        %v1042 = vunpack.c.l.b16 %v339
        %v1043 = vunpack.c.l.b16 %v340
        %v1044 = vunpack.c.l.b16 %v341
        %v1045 = vunpack.c.l.b16 %v342
        %v1046 = vpack.c.b16 %v1043, %v1042
        %v1047 = vpack.c.b16 %v1045, %v1044
        %vm1050 = vcmask 261120
        %v1052 = vsel %vm1050, %v1033, 0
        %1054 = vmatprep.subr.bf16.mxu0 0
        %1055 = vmatpush1.bf16.msra.mxu0 %v1046
        %1056 = vmatprep.subr.bf16.mxu0 0
        %1057 = vmatpush1.bf16.msra.mxu0 %v1047
        %1058 = vmatprep.subr.bf16.mxu0 0
        %1059 = vmatpush1.bf16.msra.mxu0 0
        %1060 = vmatprep.subr.bf16.mxu0 0
        %1061 = vmatpush1.bf16.msra.mxu0 0
        %1062 = vmatprep.subr.bf16.mxu0 0
        %1063 = vmatpush1.bf16.msra.mxu0 0
        %1064 = vmatprep.subr.bf16.mxu0 0
        %1065 = vmatpush1.bf16.msra.mxu0 0
        %1066 = vmatprep.subr.bf16.mxu0 0
        %1067 = vmatpush1.bf16.msra.mxu0 0
        %1068 = vmatprep.subr.bf16.mxu0 0
        %1069 = vmatpush1.bf16.msra.mxu0 0
        %1070 = vmatprep.subr.bf16.mxu0 0
        %1071 = vmatpush1.bf16.msra.mxu0 0
        %1072 = vmatprep.subr.bf16.mxu0 0
        %1073 = vmatpush1.bf16.msra.mxu0 0
        %1074 = vmatprep.subr.bf16.mxu0 0
        %1075 = vmatpush1.bf16.msra.mxu0 0
        %1076 = vmatprep.subr.bf16.mxu0 0
        %1077 = vmatpush1.bf16.msra.mxu0 0
        %1078 = vmatprep.subr.bf16.mxu0 0
        %1079 = vmatpush1.bf16.msra.mxu0 0
        %1080 = vmatprep.subr.bf16.mxu0 0
        %1081 = vmatpush1.bf16.msra.mxu0 0
        %1082 = vmatprep.subr.bf16.mxu0 0
        %1083 = vmatpush1.bf16.msra.mxu0 0
        %1084 = vmatprep.subr.bf16.mxu0 0
        %1085 = vmatpush1.bf16.msra.mxu0 0
        %1086 = vmatprep.mubr.bf16.mxu0 0
        %1087 = vmatmul.mubr.bf16.gmra.mrb[0].mxu0 %v1052
        %v1088 = vpop.f32.mrb[0].mxu0
        %v1089 = vadd.f32 %v1037, %v1088
        %v1090 = vpop.f32.mrb[0].mxu0
        %v1091 = vpop.f32.mrb[0].mxu0
        %v1092 = vpop.f32.mrb[0].mxu0
        %1093 = vdwg.mxu0
        %v1094 = vadd.f32 %v327, %v1089
        %v1095 = vpack.c.bf16 %v1094, %v1094
        %v1100 = vunpack.c.l.b16 %v344
        %v1101 = vunpack.c.l.b16 %v345
        %v1102 = vunpack.c.l.b16 %v346
        %v1103 = vunpack.c.l.b16 %v347
        %v1104 = vpack.c.b16 %v1101, %v1100
        %v1105 = vpack.c.b16 %v1103, %v1102
        %1109 = vrot.lane.b32.xlu0 %v1037, 96
        %v1110 = vpop.permute.xlu0 %1109
        %v1113 = vsel %vm1050, %v1095, 0
        %1115 = vmatprep.subr.bf16.mxu0 0
        %1116 = vmatpush1.bf16.msra.mxu0 %v1104
        %1117 = vmatprep.subr.bf16.mxu0 0
        %1118 = vmatpush1.bf16.msra.mxu0 %v1105
        %1119 = vmatprep.subr.bf16.mxu0 0
        %1120 = vmatpush1.bf16.msra.mxu0 0
        %1121 = vmatprep.subr.bf16.mxu0 0
        %1122 = vmatpush1.bf16.msra.mxu0 0
        %1123 = vmatprep.subr.bf16.mxu0 0
        %1124 = vmatpush1.bf16.msra.mxu0 0
        %1125 = vmatprep.subr.bf16.mxu0 0
        %1126 = vmatpush1.bf16.msra.mxu0 0
        %1127 = vmatprep.subr.bf16.mxu0 0
        %1128 = vmatpush1.bf16.msra.mxu0 0
        %1129 = vmatprep.subr.bf16.mxu0 0
        %1130 = vmatpush1.bf16.msra.mxu0 0
        %1131 = vmatprep.subr.bf16.mxu0 0
        %1132 = vmatpush1.bf16.msra.mxu0 0
        %1133 = vmatprep.subr.bf16.mxu0 0
        %1134 = vmatpush1.bf16.msra.mxu0 0
        %1135 = vmatprep.subr.bf16.mxu0 0
        %1136 = vmatpush1.bf16.msra.mxu0 0
        %1137 = vmatprep.subr.bf16.mxu0 0
        %1138 = vmatpush1.bf16.msra.mxu0 0
        %1139 = vmatprep.subr.bf16.mxu0 0
        %1140 = vmatpush1.bf16.msra.mxu0 0
        %1141 = vmatprep.subr.bf16.mxu0 0
        %1142 = vmatpush1.bf16.msra.mxu0 0
        %1143 = vmatprep.subr.bf16.mxu0 0
        %1144 = vmatpush1.bf16.msra.mxu0 0
        %1145 = vmatprep.subr.bf16.mxu0 0
        %1146 = vmatpush1.bf16.msra.mxu0 0
        %1147 = vmatprep.mubr.bf16.mxu0 0
        %1148 = vmatmul.mubr.bf16.gmra.mrb[0].mxu0 %v1113
        %v1149 = vpop.f32.mrb[0].mxu0
        %v1150 = vadd.f32 %v1110, %v1149
        %v1151 = vpop.f32.mrb[0].mxu0
        %v1152 = vpop.f32.mrb[0].mxu0
        %v1153 = vpop.f32.mrb[0].mxu0
        %1154 = vdwg.mxu0
        %v1155 = vmax.f32 %v1150, 0.0
        %v1156 = vadd.f32 %v1094, %v1155
        %v1157 = vpack.c.bf16 %v1156, %v1156
        %v1158 = vlaneseq
        %v1159 = vshrl.u32 %v1158, 7
        %v1160 = vsub.s32 2, %v1159
        %v1161 = vrot.slane %v326, %v1160
        %v1166 = vunpack.c.l.b16 %v335
        %v1167 = vunpack.c.l.b16 %v336
        %v1168 = vunpack.c.l.b16 %v337
        %v1169 = vunpack.c.l.b16 %v338
        %v1170 = vpack.c.b16 %v1167, %v1166
        %v1171 = vpack.c.b16 %v1169, %v1168
        %v1175 = vsel %vm1050, %v1157, 0
        %1177 = vmatprep.subr.bf16.mxu0 0
        %1178 = vmatpush1.bf16.msra.mxu0 %v1170
        %1179 = vmatprep.subr.bf16.mxu0 0
        %1180 = vmatpush1.bf16.msra.mxu0 %v1171
        %1181 = vmatprep.subr.bf16.mxu0 0
        %1182 = vmatpush1.bf16.msra.mxu0 0
        %1183 = vmatprep.subr.bf16.mxu0 0
        %1184 = vmatpush1.bf16.msra.mxu0 0
        %1185 = vmatprep.subr.bf16.mxu0 0
        %1186 = vmatpush1.bf16.msra.mxu0 0
        %1187 = vmatprep.subr.bf16.mxu0 0
        %1188 = vmatpush1.bf16.msra.mxu0 0
        %1189 = vmatprep.subr.bf16.mxu0 0
        %1190 = vmatpush1.bf16.msra.mxu0 0
        %1191 = vmatprep.subr.bf16.mxu0 0
        %1192 = vmatpush1.bf16.msra.mxu0 0
        %1193 = vmatprep.subr.bf16.mxu0 0
        %1194 = vmatpush1.bf16.msra.mxu0 0
        %1195 = vmatprep.subr.bf16.mxu0 0
        %1196 = vmatpush1.bf16.msra.mxu0 0
        %1197 = vmatprep.subr.bf16.mxu0 0
        %1198 = vmatpush1.bf16.msra.mxu0 0
        %1199 = vmatprep.subr.bf16.mxu0 0
        %1200 = vmatpush1.bf16.msra.mxu0 0
        %1201 = vmatprep.subr.bf16.mxu0 0
        %1202 = vmatpush1.bf16.msra.mxu0 0
        %1203 = vmatprep.subr.bf16.mxu0 0
        %1204 = vmatpush1.bf16.msra.mxu0 0
        %1205 = vmatprep.subr.bf16.mxu0 0
        %1206 = vmatpush1.bf16.msra.mxu0 0
        %1207 = vmatprep.subr.bf16.mxu0 0
        %1208 = vmatpush1.bf16.msra.mxu0 0
        %1209 = vmatprep.mubr.bf16.mxu0 0
        %1210 = vmatmul.mubr.bf16.gmra.mrb[0].mxu0 %v1175
        %v1211 = vpop.f32.mrb[0].mxu0
        %v1212 = vadd.f32 %v1161, %v1211
        %v1213 = vpop.f32.mrb[0].mxu0
        %v1214 = vpop.f32.mrb[0].mxu0
        %v1215 = vpop.f32.mrb[0].mxu0
        %1216 = vdwg.mxu0
        %vm1217 = vcmp.eq.f32.partialorder %v1156, 0.0
        %v1218 = vsel %vm1217, -1e+30, 0.0
        %v1219 = vpack.c.bf16 %v459, %v459
        %v1220 = vpack.c.bf16 %v1212, %v1212
        %1222 = vrot.lane.b32.xlu0 %v1219, 96
        %v1223 = vpop.permute.xlu0 %1222
        %v1225 = vsel %vm468, %v1220, 0
        %v1228 = vsel %vm468, %v1223, 0
        %1230 = vmatprep.subr.bf16.mxu0 0
        %1231 = vmatpush1.bf16.xpose.msra.mxu0 %v1228
        %1232 = vmatprep.subr.bf16.mxu0 0
        %1233 = vmatpush1.bf16.xpose.msra.mxu0 0
        %1234 = vmatprep.subr.bf16.mxu0 0
        %1235 = vmatpush1.bf16.xpose.msra.mxu0 0
        %1236 = vmatprep.subr.bf16.mxu0 0
        %1237 = vmatpush1.bf16.xpose.msra.mxu0 0
        %1238 = vmatprep.subr.bf16.mxu0 0
        %1239 = vmatpush1.bf16.xpose.msra.mxu0 0
        %1240 = vmatprep.subr.bf16.mxu0 0
        %1241 = vmatpush1.bf16.xpose.msra.mxu0 0
        %1242 = vmatprep.subr.bf16.mxu0 0
        %1243 = vmatpush1.bf16.xpose.msra.mxu0 0
        %1244 = vmatprep.subr.bf16.mxu0 0
        %1245 = vmatpush1.bf16.xpose.msra.mxu0 0
        %1246 = vmatprep.subr.bf16.mxu0 0
        %1247 = vmatpush1.bf16.xpose.msra.mxu0 0
        %1248 = vmatprep.subr.bf16.mxu0 0
        %1249 = vmatpush1.bf16.xpose.msra.mxu0 0
        %1250 = vmatprep.subr.bf16.mxu0 0
        %1251 = vmatpush1.bf16.xpose.msra.mxu0 0
        %1252 = vmatprep.subr.bf16.mxu0 0
        %1253 = vmatpush1.bf16.xpose.msra.mxu0 0
        %1254 = vmatprep.subr.bf16.mxu0 0
        %1255 = vmatpush1.bf16.xpose.msra.mxu0 0
        %1256 = vmatprep.subr.bf16.mxu0 0
        %1257 = vmatpush1.bf16.xpose.msra.mxu0 0
        %1258 = vmatprep.subr.bf16.mxu0 0
        %1259 = vmatpush1.bf16.xpose.msra.mxu0 0
        %1260 = vmatprep.subr.bf16.mxu0 0
        %1261 = vmatpush1.bf16.xpose.msra.mxu0 0
        %1262 = vmatprep.mubr.bf16.mxu0 0
        %1263 = vmatmul.mubr.bf16.gmra.mrb[0].mxu0 %v1225
        %v1264 = vpop.f32.mrb[0].mxu0
        %v1265 = vadd.f32 0.0, %v1264
        %v1266 = vpop.f32.mrb[0].mxu0
        %v1267 = vpop.f32.mrb[0].mxu0
        %v1268 = vpop.f32.mrb[0].mxu0
        %1269 = vdwg.mxu0
        %v1270 = vmul.f32 %v1265, 0.35355338
        %1272 = vset.pattern.permute.xlu0 0
        %1273 = vperm.xlu0 %1272, %v1218
        %v1274 = vpop.permute.xlu0 %1273
        %v1276 = vadd.f32 %v1270, %v1274
        %v1277 = vsel %vm468, %v1276, -inf
        %v1278 = vrot.slane %v1277, 4
        %v1279 = vmax.f32 %v1277, %v1278
        %v1280 = vrot.slane %v1279, 2
        %v1281 = vmax.f32 %v1279, %v1280
        %v1282 = vrot.slane %v1281, 1
        %v1283 = vmax.f32 %v1281, %v1282
        %v1284 = vsub.f32 %v1276, %v1283
        %v1285 = vmul.f32 %v1284, 1.442695
        %v1286 = vpow.pop %v1285
        %v1287 = vsel %vm468, %v1286, 0.0
        %v1288 = vrot.slane %v1287, 4
        %v1289 = vadd.f32 %v1287, %v1288
        %v1290 = vrot.slane %v1289, 2
        %v1291 = vadd.f32 %v1289, %v1290
        %v1292 = vrot.slane %v1291, 1
        %v1293 = vadd.f32 %v1291, %v1292
        %v1294 = vrcp.pop %v1293
        %v1295 = vmul.f32 %v1286, %v1294
        %v1296 = vpack.c.bf16 %v1295, %v1295
        %1297 = vxpose.xlu0.c.b16.start [1/8] %v1296, 128
        %1298 = vxpose.xlu0.c.b16.cont [2/8] 0, 128
        %1299 = vxpose.xlu0.c.b16.cont [3/8] 0, 128
        %1300 = vxpose.xlu0.c.b16.cont [4/8] 0, 128
        %1301 = vxpose.xlu0.c.b16.cont [5/8] 0, 128
        %1302 = vxpose.xlu0.c.b16.cont [6/8] 0, 128
        %1303 = vxpose.xlu0.c.b16.cont [7/8] 0, 128
        %1304 = vxpose.xlu0.c.b16.end [8/8] 0, 128
        %v1305 = vpop.trf.xlu0
        %v1306 = vpop.trf.xlu0
        %v1307 = vpop.trf.xlu0
        %v1308 = vpop.trf.xlu0
        %v1309 = vpop.trf.xlu0
        %v1310 = vpop.trf.xlu0
        %v1311 = vpop.trf.xlu0
        %v1312 = vpop.trf.xlu0
        %1314 = vrot.lane.b32.xlu0 %v1220, 96
        %v1315 = vpop.permute.xlu0 %1314
        %v1317 = vsel %vm468, %v1305, 0
        %v1320 = vsel %vm564, %v1315, 0
        %1322 = vmatprep.subr.bf16.mxu0 0
        %1323 = vmatpush1.bf16.msra.mxu0 %v1320
        %1324 = vmatprep.subr.bf16.mxu0 0
        %1325 = vmatpush1.bf16.msra.mxu0 0
        %1326 = vmatprep.subr.bf16.mxu0 0
        %1327 = vmatpush1.bf16.msra.mxu0 0
        %1328 = vmatprep.subr.bf16.mxu0 0
        %1329 = vmatpush1.bf16.msra.mxu0 0
        %1330 = vmatprep.subr.bf16.mxu0 0
        %1331 = vmatpush1.bf16.msra.mxu0 0
        %1332 = vmatprep.subr.bf16.mxu0 0
        %1333 = vmatpush1.bf16.msra.mxu0 0
        %1334 = vmatprep.subr.bf16.mxu0 0
        %1335 = vmatpush1.bf16.msra.mxu0 0
        %1336 = vmatprep.subr.bf16.mxu0 0
        %1337 = vmatpush1.bf16.msra.mxu0 0
        %1338 = vmatprep.subr.bf16.mxu0 0
        %1339 = vmatpush1.bf16.msra.mxu0 0
        %1340 = vmatprep.subr.bf16.mxu0 0
        %1341 = vmatpush1.bf16.msra.mxu0 0
        %1342 = vmatprep.subr.bf16.mxu0 0
        %1343 = vmatpush1.bf16.msra.mxu0 0
        %1344 = vmatprep.subr.bf16.mxu0 0
        %1345 = vmatpush1.bf16.msra.mxu0 0
        %1346 = vmatprep.subr.bf16.mxu0 0
        %1347 = vmatpush1.bf16.msra.mxu0 0
        %1348 = vmatprep.subr.bf16.mxu0 0
        %1349 = vmatpush1.bf16.msra.mxu0 0
        %1350 = vmatprep.subr.bf16.mxu0 0
        %1351 = vmatpush1.bf16.msra.mxu0 0
        %1352 = vmatprep.subr.bf16.mxu0 0
        %1353 = vmatpush1.bf16.msra.mxu0 0
        %1354 = vmatprep.mubr.bf16.mxu0 0
        %1355 = vmatmul.mubr.bf16.gmra.mrb[0].mxu0 %v1317
        %v1356 = vpop.f32.mrb[0].mxu0
        %v1357 = vadd.f32 0.0, %v1356
        %v1358 = vpop.f32.mrb[0].mxu0
        %v1359 = vpop.f32.mrb[0].mxu0
        %v1360 = vpop.f32.mrb[0].mxu0
        %1361 = vdwg.mxu0
        %1362 = vrot.lane.b32.xlu0 %v1220, 120
        %v1363 = vpop.permute.xlu0 %1362
        %1364 = vrot.lane.b32.xlu0 %v1219, 88
        %v1365 = vpop.permute.xlu0 %1364
        %v1367 = vsel %vm468, %v1363, 0
        %v1370 = vsel %vm468, %v1365, 0
        %1372 = vmatprep.subr.bf16.mxu0 0
        %1373 = vmatpush1.bf16.xpose.msra.mxu0 %v1370
        %1374 = vmatprep.subr.bf16.mxu0 0
        %1375 = vmatpush1.bf16.xpose.msra.mxu0 0
        %1376 = vmatprep.subr.bf16.mxu0 0
        %1377 = vmatpush1.bf16.xpose.msra.mxu0 0
        %1378 = vmatprep.subr.bf16.mxu0 0
        %1379 = vmatpush1.bf16.xpose.msra.mxu0 0
        %1380 = vmatprep.subr.bf16.mxu0 0
        %1381 = vmatpush1.bf16.xpose.msra.mxu0 0
        %1382 = vmatprep.subr.bf16.mxu0 0
        %1383 = vmatpush1.bf16.xpose.msra.mxu0 0
        %1384 = vmatprep.subr.bf16.mxu0 0
        %1385 = vmatpush1.bf16.xpose.msra.mxu0 0
        %1386 = vmatprep.subr.bf16.mxu0 0
        %1387 = vmatpush1.bf16.xpose.msra.mxu0 0
        %1388 = vmatprep.subr.bf16.mxu0 0
        %1389 = vmatpush1.bf16.xpose.msra.mxu0 0
        %1390 = vmatprep.subr.bf16.mxu0 0
        %1391 = vmatpush1.bf16.xpose.msra.mxu0 0
        %1392 = vmatprep.subr.bf16.mxu0 0
        %1393 = vmatpush1.bf16.xpose.msra.mxu0 0
        %1394 = vmatprep.subr.bf16.mxu0 0
        %1395 = vmatpush1.bf16.xpose.msra.mxu0 0
        %1396 = vmatprep.subr.bf16.mxu0 0
        %1397 = vmatpush1.bf16.xpose.msra.mxu0 0
        %1398 = vmatprep.subr.bf16.mxu0 0
        %1399 = vmatpush1.bf16.xpose.msra.mxu0 0
        %1400 = vmatprep.subr.bf16.mxu0 0
        %1401 = vmatpush1.bf16.xpose.msra.mxu0 0
        %1402 = vmatprep.subr.bf16.mxu0 0
        %1403 = vmatpush1.bf16.xpose.msra.mxu0 0
        %1404 = vmatprep.mubr.bf16.mxu0 0
        %1405 = vmatmul.mubr.bf16.gmra.mrb[0].mxu0 %v1367
        %v1406 = vpop.f32.mrb[0].mxu0
        %v1407 = vadd.f32 0.0, %v1406
        %v1408 = vpop.f32.mrb[0].mxu0
        %v1409 = vpop.f32.mrb[0].mxu0
        %v1410 = vpop.f32.mrb[0].mxu0
        %1411 = vdwg.mxu0
        %v1412 = vmul.f32 %v1407, 0.35355338
        %v1413 = vadd.f32 %v1412, %v1274
        %v1414 = vsel %vm468, %v1413, -inf
        %v1415 = vrot.slane %v1414, 4
        %v1416 = vmax.f32 %v1414, %v1415
        %v1417 = vrot.slane %v1416, 2
        %v1418 = vmax.f32 %v1416, %v1417
        %v1419 = vrot.slane %v1418, 1
        %v1420 = vmax.f32 %v1418, %v1419
        %v1421 = vsub.f32 %v1413, %v1420
        %v1422 = vmul.f32 %v1421, 1.442695
        %v1423 = vpow.pop %v1422
        %v1424 = vsel %vm468, %v1423, 0.0
        %v1425 = vrot.slane %v1424, 4
        %v1426 = vadd.f32 %v1424, %v1425
        %v1427 = vrot.slane %v1426, 2
        %v1428 = vadd.f32 %v1426, %v1427
        %v1429 = vrot.slane %v1428, 1
        %v1430 = vadd.f32 %v1428, %v1429
        %v1431 = vrcp.pop %v1430
        %v1432 = vmul.f32 %v1423, %v1431
        %v1433 = vpack.c.bf16 %v1432, %v1432
        %1434 = vxpose.xlu0.c.b16.start [1/8] %v1433, 128
        %1435 = vxpose.xlu0.c.b16.cont [2/8] 0, 128
        %1436 = vxpose.xlu0.c.b16.cont [3/8] 0, 128
        %1437 = vxpose.xlu0.c.b16.cont [4/8] 0, 128
        %1438 = vxpose.xlu0.c.b16.cont [5/8] 0, 128
        %1439 = vxpose.xlu0.c.b16.cont [6/8] 0, 128
        %1440 = vxpose.xlu0.c.b16.cont [7/8] 0, 128
        %1441 = vxpose.xlu0.c.b16.end [8/8] 0, 128
        %v1442 = vpop.trf.xlu0
        %v1443 = vpop.trf.xlu0
        %v1444 = vpop.trf.xlu0
        %v1445 = vpop.trf.xlu0
        %v1446 = vpop.trf.xlu0
        %v1447 = vpop.trf.xlu0
        %v1448 = vpop.trf.xlu0
        %v1449 = vpop.trf.xlu0
        %1450 = vrot.lane.b32.xlu0 %v1220, 88
        %v1451 = vpop.permute.xlu0 %1450
        %v1453 = vsel %vm468, %v1442, 0
        %v1456 = vsel %vm564, %v1451, 0
        %1458 = vmatprep.subr.bf16.mxu0 0
        %1459 = vmatpush1.bf16.msra.mxu0 %v1456
        %1460 = vmatprep.subr.bf16.mxu0 0
        %1461 = vmatpush1.bf16.msra.mxu0 0
        %1462 = vmatprep.subr.bf16.mxu0 0
        %1463 = vmatpush1.bf16.msra.mxu0 0
        %1464 = vmatprep.subr.bf16.mxu0 0
        %1465 = vmatpush1.bf16.msra.mxu0 0
        %1466 = vmatprep.subr.bf16.mxu0 0
        %1467 = vmatpush1.bf16.msra.mxu0 0
        %1468 = vmatprep.subr.bf16.mxu0 0
        %1469 = vmatpush1.bf16.msra.mxu0 0
        %1470 = vmatprep.subr.bf16.mxu0 0
        %1471 = vmatpush1.bf16.msra.mxu0 0
        %1472 = vmatprep.subr.bf16.mxu0 0
        %1473 = vmatpush1.bf16.msra.mxu0 0
        %1474 = vmatprep.subr.bf16.mxu0 0
        %1475 = vmatpush1.bf16.msra.mxu0 0
        %1476 = vmatprep.subr.bf16.mxu0 0
        %1477 = vmatpush1.bf16.msra.mxu0 0
        %1478 = vmatprep.subr.bf16.mxu0 0
        %1479 = vmatpush1.bf16.msra.mxu0 0
        %1480 = vmatprep.subr.bf16.mxu0 0
        %1481 = vmatpush1.bf16.msra.mxu0 0
        %1482 = vmatprep.subr.bf16.mxu0 0
        %1483 = vmatpush1.bf16.msra.mxu0 0
        %1484 = vmatprep.subr.bf16.mxu0 0
        %1485 = vmatpush1.bf16.msra.mxu0 0
        %1486 = vmatprep.subr.bf16.mxu0 0
        %1487 = vmatpush1.bf16.msra.mxu0 0
        %1488 = vmatprep.subr.bf16.mxu0 0
        %1489 = vmatpush1.bf16.msra.mxu0 0
        %1490 = vmatprep.mubr.bf16.mxu0 0
        %1491 = vmatmul.mubr.bf16.gmra.mrb[0].mxu0 %v1453
        %v1492 = vpop.f32.mrb[0].mxu0
        %v1493 = vadd.f32 0.0, %v1492
        %v1494 = vpop.f32.mrb[0].mxu0
        %v1495 = vpop.f32.mrb[0].mxu0
        %v1496 = vpop.f32.mrb[0].mxu0
        %1497 = vdwg.mxu0
        %1498 = vrot.lane.b32.xlu0 %v1220, 112
        %v1499 = vpop.permute.xlu0 %1498
        %1500 = vrot.lane.b32.xlu0 %v1219, 80
        %v1501 = vpop.permute.xlu0 %1500
        %v1503 = vsel %vm468, %v1499, 0
        %v1506 = vsel %vm468, %v1501, 0
        %1508 = vmatprep.subr.bf16.mxu0 0
        %1509 = vmatpush1.bf16.xpose.msra.mxu0 %v1506
        %1510 = vmatprep.subr.bf16.mxu0 0
        %1511 = vmatpush1.bf16.xpose.msra.mxu0 0
        %1512 = vmatprep.subr.bf16.mxu0 0
        %1513 = vmatpush1.bf16.xpose.msra.mxu0 0
        %1514 = vmatprep.subr.bf16.mxu0 0
        %1515 = vmatpush1.bf16.xpose.msra.mxu0 0
        %1516 = vmatprep.subr.bf16.mxu0 0
        %1517 = vmatpush1.bf16.xpose.msra.mxu0 0
        %1518 = vmatprep.subr.bf16.mxu0 0
        %1519 = vmatpush1.bf16.xpose.msra.mxu0 0
        %1520 = vmatprep.subr.bf16.mxu0 0
        %1521 = vmatpush1.bf16.xpose.msra.mxu0 0
        %1522 = vmatprep.subr.bf16.mxu0 0
        %1523 = vmatpush1.bf16.xpose.msra.mxu0 0
        %1524 = vmatprep.subr.bf16.mxu0 0
        %1525 = vmatpush1.bf16.xpose.msra.mxu0 0
        %1526 = vmatprep.subr.bf16.mxu0 0
        %1527 = vmatpush1.bf16.xpose.msra.mxu0 0
        %1528 = vmatprep.subr.bf16.mxu0 0
        %1529 = vmatpush1.bf16.xpose.msra.mxu0 0
        %1530 = vmatprep.subr.bf16.mxu0 0
        %1531 = vmatpush1.bf16.xpose.msra.mxu0 0
        %1532 = vmatprep.subr.bf16.mxu0 0
        %1533 = vmatpush1.bf16.xpose.msra.mxu0 0
        %1534 = vmatprep.subr.bf16.mxu0 0
        %1535 = vmatpush1.bf16.xpose.msra.mxu0 0
        %1536 = vmatprep.subr.bf16.mxu0 0
        %1537 = vmatpush1.bf16.xpose.msra.mxu0 0
        %1538 = vmatprep.subr.bf16.mxu0 0
        %1539 = vmatpush1.bf16.xpose.msra.mxu0 0
        %1540 = vmatprep.mubr.bf16.mxu0 0
        %1541 = vmatmul.mubr.bf16.gmra.mrb[0].mxu0 %v1503
        %v1542 = vpop.f32.mrb[0].mxu0
        %v1543 = vadd.f32 0.0, %v1542
        %v1544 = vpop.f32.mrb[0].mxu0
        %v1545 = vpop.f32.mrb[0].mxu0
        %v1546 = vpop.f32.mrb[0].mxu0
        %1547 = vdwg.mxu0
        %v1548 = vmul.f32 %v1543, 0.35355338
        %v1549 = vadd.f32 %v1548, %v1274
        %v1550 = vsel %vm468, %v1549, -inf
        %v1551 = vrot.slane %v1550, 4
        %v1552 = vmax.f32 %v1550, %v1551
        %v1553 = vrot.slane %v1552, 2
        %v1554 = vmax.f32 %v1552, %v1553
        %v1555 = vrot.slane %v1554, 1
        %v1556 = vmax.f32 %v1554, %v1555
        %v1557 = vsub.f32 %v1549, %v1556
        %v1558 = vmul.f32 %v1557, 1.442695
        %v1559 = vpow.pop %v1558
        %v1560 = vsel %vm468, %v1559, 0.0
        %v1561 = vrot.slane %v1560, 4
        %v1562 = vadd.f32 %v1560, %v1561
        %v1563 = vrot.slane %v1562, 2
        %v1564 = vadd.f32 %v1562, %v1563
        %v1565 = vrot.slane %v1564, 1
        %v1566 = vadd.f32 %v1564, %v1565
        %v1567 = vrcp.pop %v1566
        %v1568 = vmul.f32 %v1559, %v1567
        %v1569 = vpack.c.bf16 %v1568, %v1568
        %1570 = vxpose.xlu0.c.b16.start [1/8] %v1569, 128
        %1571 = vxpose.xlu0.c.b16.cont [2/8] 0, 128
        %1572 = vxpose.xlu0.c.b16.cont [3/8] 0, 128
        %1573 = vxpose.xlu0.c.b16.cont [4/8] 0, 128
        %1574 = vxpose.xlu0.c.b16.cont [5/8] 0, 128
        %1575 = vxpose.xlu0.c.b16.cont [6/8] 0, 128
        %1576 = vxpose.xlu0.c.b16.cont [7/8] 0, 128
        %1577 = vxpose.xlu0.c.b16.end [8/8] 0, 128
        %v1578 = vpop.trf.xlu0
        %v1579 = vpop.trf.xlu0
        %v1580 = vpop.trf.xlu0
        %v1581 = vpop.trf.xlu0
        %v1582 = vpop.trf.xlu0
        %v1583 = vpop.trf.xlu0
        %v1584 = vpop.trf.xlu0
        %v1585 = vpop.trf.xlu0
        %1586 = vrot.lane.b32.xlu0 %v1220, 80
        %v1587 = vpop.permute.xlu0 %1586
        %v1589 = vsel %vm468, %v1578, 0
        %v1592 = vsel %vm564, %v1587, 0
        %1594 = vmatprep.subr.bf16.mxu0 0
        %1595 = vmatpush1.bf16.msra.mxu0 %v1592
        %1596 = vmatprep.subr.bf16.mxu0 0
        %1597 = vmatpush1.bf16.msra.mxu0 0
        %1598 = vmatprep.subr.bf16.mxu0 0
        %1599 = vmatpush1.bf16.msra.mxu0 0
        %1600 = vmatprep.subr.bf16.mxu0 0
        %1601 = vmatpush1.bf16.msra.mxu0 0
        %1602 = vmatprep.subr.bf16.mxu0 0
        %1603 = vmatpush1.bf16.msra.mxu0 0
        %1604 = vmatprep.subr.bf16.mxu0 0
        %1605 = vmatpush1.bf16.msra.mxu0 0
        %1606 = vmatprep.subr.bf16.mxu0 0
        %1607 = vmatpush1.bf16.msra.mxu0 0
        %1608 = vmatprep.subr.bf16.mxu0 0
        %1609 = vmatpush1.bf16.msra.mxu0 0
        %1610 = vmatprep.subr.bf16.mxu0 0
        %1611 = vmatpush1.bf16.msra.mxu0 0
        %1612 = vmatprep.subr.bf16.mxu0 0
        %1613 = vmatpush1.bf16.msra.mxu0 0
        %1614 = vmatprep.subr.bf16.mxu0 0
        %1615 = vmatpush1.bf16.msra.mxu0 0
        %1616 = vmatprep.subr.bf16.mxu0 0
        %1617 = vmatpush1.bf16.msra.mxu0 0
        %1618 = vmatprep.subr.bf16.mxu0 0
        %1619 = vmatpush1.bf16.msra.mxu0 0
        %1620 = vmatprep.subr.bf16.mxu0 0
        %1621 = vmatpush1.bf16.msra.mxu0 0
        %1622 = vmatprep.subr.bf16.mxu0 0
        %1623 = vmatpush1.bf16.msra.mxu0 0
        %1624 = vmatprep.subr.bf16.mxu0 0
        %1625 = vmatpush1.bf16.msra.mxu0 0
        %1626 = vmatprep.mubr.bf16.mxu0 0
        %1627 = vmatmul.mubr.bf16.gmra.mrb[0].mxu0 %v1589
        %v1628 = vpop.f32.mrb[0].mxu0
        %v1629 = vadd.f32 0.0, %v1628
        %v1630 = vpop.f32.mrb[0].mxu0
        %v1631 = vpop.f32.mrb[0].mxu0
        %v1632 = vpop.f32.mrb[0].mxu0
        %1633 = vdwg.mxu0
        %1634 = vrot.lane.b32.xlu0 %v1220, 104
        %v1635 = vpop.permute.xlu0 %1634
        %1636 = vrot.lane.b32.xlu0 %v1219, 72
        %v1637 = vpop.permute.xlu0 %1636
        %v1639 = vsel %vm468, %v1635, 0
        %v1642 = vsel %vm468, %v1637, 0
        %1644 = vmatprep.subr.bf16.mxu0 0
        %1645 = vmatpush1.bf16.xpose.msra.mxu0 %v1642
        %1646 = vmatprep.subr.bf16.mxu0 0
        %1647 = vmatpush1.bf16.xpose.msra.mxu0 0
        %1648 = vmatprep.subr.bf16.mxu0 0
        %1649 = vmatpush1.bf16.xpose.msra.mxu0 0
        %1650 = vmatprep.subr.bf16.mxu0 0
        %1651 = vmatpush1.bf16.xpose.msra.mxu0 0
        %1652 = vmatprep.subr.bf16.mxu0 0
        %1653 = vmatpush1.bf16.xpose.msra.mxu0 0
        %1654 = vmatprep.subr.bf16.mxu0 0
        %1655 = vmatpush1.bf16.xpose.msra.mxu0 0
        %1656 = vmatprep.subr.bf16.mxu0 0
        %1657 = vmatpush1.bf16.xpose.msra.mxu0 0
        %1658 = vmatprep.subr.bf16.mxu0 0
        %1659 = vmatpush1.bf16.xpose.msra.mxu0 0
        %1660 = vmatprep.subr.bf16.mxu0 0
        %1661 = vmatpush1.bf16.xpose.msra.mxu0 0
        %1662 = vmatprep.subr.bf16.mxu0 0
        %1663 = vmatpush1.bf16.xpose.msra.mxu0 0
        %1664 = vmatprep.subr.bf16.mxu0 0
        %1665 = vmatpush1.bf16.xpose.msra.mxu0 0
        %1666 = vmatprep.subr.bf16.mxu0 0
        %1667 = vmatpush1.bf16.xpose.msra.mxu0 0
        %1668 = vmatprep.subr.bf16.mxu0 0
        %1669 = vmatpush1.bf16.xpose.msra.mxu0 0
        %1670 = vmatprep.subr.bf16.mxu0 0
        %1671 = vmatpush1.bf16.xpose.msra.mxu0 0
        %1672 = vmatprep.subr.bf16.mxu0 0
        %1673 = vmatpush1.bf16.xpose.msra.mxu0 0
        %1674 = vmatprep.subr.bf16.mxu0 0
        %1675 = vmatpush1.bf16.xpose.msra.mxu0 0
        %1676 = vmatprep.mubr.bf16.mxu0 0
        %1677 = vmatmul.mubr.bf16.gmra.mrb[0].mxu0 %v1639
        %v1678 = vpop.f32.mrb[0].mxu0
        %v1679 = vadd.f32 0.0, %v1678
        %v1680 = vpop.f32.mrb[0].mxu0
        %v1681 = vpop.f32.mrb[0].mxu0
        %v1682 = vpop.f32.mrb[0].mxu0
        %1683 = vdwg.mxu0
        %v1684 = vmul.f32 %v1679, 0.35355338
        %v1685 = vadd.f32 %v1684, %v1274
        %v1686 = vsel %vm468, %v1685, -inf
        %v1687 = vrot.slane %v1686, 4
        %v1688 = vmax.f32 %v1686, %v1687
        %v1689 = vrot.slane %v1688, 2
        %v1690 = vmax.f32 %v1688, %v1689
        %v1691 = vrot.slane %v1690, 1
        %v1692 = vmax.f32 %v1690, %v1691
        %v1693 = vsub.f32 %v1685, %v1692
        %v1694 = vmul.f32 %v1693, 1.442695
        %v1695 = vpow.pop %v1694
        %v1696 = vsel %vm468, %v1695, 0.0
        %v1697 = vrot.slane %v1696, 4
        %v1698 = vadd.f32 %v1696, %v1697
        %v1699 = vrot.slane %v1698, 2
        %v1700 = vadd.f32 %v1698, %v1699
        %v1701 = vrot.slane %v1700, 1
        %v1702 = vadd.f32 %v1700, %v1701
        %v1703 = vrcp.pop %v1702
        %v1704 = vmul.f32 %v1695, %v1703
        %v1705 = vpack.c.bf16 %v1704, %v1704
        %1706 = vxpose.xlu0.c.b16.start [1/8] %v1705, 128
        %1707 = vxpose.xlu0.c.b16.cont [2/8] 0, 128
        %1708 = vxpose.xlu0.c.b16.cont [3/8] 0, 128
        %1709 = vxpose.xlu0.c.b16.cont [4/8] 0, 128
        %1710 = vxpose.xlu0.c.b16.cont [5/8] 0, 128
        %1711 = vxpose.xlu0.c.b16.cont [6/8] 0, 128
        %1712 = vxpose.xlu0.c.b16.cont [7/8] 0, 128
        %1713 = vxpose.xlu0.c.b16.end [8/8] 0, 128
        %v1714 = vpop.trf.xlu0
        %v1715 = vpop.trf.xlu0
        %v1716 = vpop.trf.xlu0
        %v1717 = vpop.trf.xlu0
        %v1718 = vpop.trf.xlu0
        %v1719 = vpop.trf.xlu0
        %v1720 = vpop.trf.xlu0
        %v1721 = vpop.trf.xlu0
        %1722 = vrot.lane.b32.xlu0 %v1220, 72
        %v1723 = vpop.permute.xlu0 %1722
        %v1725 = vsel %vm468, %v1714, 0
        %v1728 = vsel %vm564, %v1723, 0
        %1730 = vmatprep.subr.bf16.mxu0 0
        %1731 = vmatpush1.bf16.msra.mxu0 %v1728
        %1732 = vmatprep.subr.bf16.mxu0 0
        %1733 = vmatpush1.bf16.msra.mxu0 0
        %1734 = vmatprep.subr.bf16.mxu0 0
        %1735 = vmatpush1.bf16.msra.mxu0 0
        %1736 = vmatprep.subr.bf16.mxu0 0
        %1737 = vmatpush1.bf16.msra.mxu0 0
        %1738 = vmatprep.subr.bf16.mxu0 0
        %1739 = vmatpush1.bf16.msra.mxu0 0
        %1740 = vmatprep.subr.bf16.mxu0 0
        %1741 = vmatpush1.bf16.msra.mxu0 0
        %1742 = vmatprep.subr.bf16.mxu0 0
        %1743 = vmatpush1.bf16.msra.mxu0 0
        %1744 = vmatprep.subr.bf16.mxu0 0
        %1745 = vmatpush1.bf16.msra.mxu0 0
        %1746 = vmatprep.subr.bf16.mxu0 0
        %1747 = vmatpush1.bf16.msra.mxu0 0
        %1748 = vmatprep.subr.bf16.mxu0 0
        %1749 = vmatpush1.bf16.msra.mxu0 0
        %1750 = vmatprep.subr.bf16.mxu0 0
        %1751 = vmatpush1.bf16.msra.mxu0 0
        %1752 = vmatprep.subr.bf16.mxu0 0
        %1753 = vmatpush1.bf16.msra.mxu0 0
        %1754 = vmatprep.subr.bf16.mxu0 0
        %1755 = vmatpush1.bf16.msra.mxu0 0
        %1756 = vmatprep.subr.bf16.mxu0 0
        %1757 = vmatpush1.bf16.msra.mxu0 0
        %1758 = vmatprep.subr.bf16.mxu0 0
        %1759 = vmatpush1.bf16.msra.mxu0 0
        %1760 = vmatprep.subr.bf16.mxu0 0
        %1761 = vmatpush1.bf16.msra.mxu0 0
        %1762 = vmatprep.mubr.bf16.mxu0 0
        %1763 = vmatmul.mubr.bf16.gmra.mrb[0].mxu0 %v1725
        %v1764 = vpop.f32.mrb[0].mxu0
        %v1765 = vadd.f32 0.0, %v1764
        %v1766 = vpop.f32.mrb[0].mxu0
        %v1767 = vpop.f32.mrb[0].mxu0
        %v1768 = vpop.f32.mrb[0].mxu0
        %1769 = vdwg.mxu0
        %1771 = vrot.lane.b32.xlu0 %v1493, 8
        %v1772 = vpop.permute.xlu0 %1771
        %1775 = vrot.lane.b32.xlu0 %v1629, 16
        %v1776 = vpop.permute.xlu0 %1775
        %1779 = vrot.lane.b32.xlu0 %v1765, 24
        %v1780 = vpop.permute.xlu0 %1779
        %v1782 = vsel %vm468, %v1357, %v1772
        %v1783 = vsel %vm370, %v1782, %v1776
        %v1784 = vsel %vm1031, %v1783, %v1780
        %v1785 = vpack.c.bf16 %v1784, %v1784
        %v1786 = vlaneseq
        %v1787 = vshrl.u32 %v1786, 7
        %v1788 = vsub.s32 4, %v1787
        %v1789 = vrot.slane %v326, %v1788
        %v1794 = vunpack.c.l.b16 %v349
        %v1795 = vunpack.c.l.b16 %v350
        %v1796 = vunpack.c.l.b16 %v351
        %v1797 = vunpack.c.l.b16 %v352
        %v1798 = vpack.c.b16 %v1795, %v1794
        %v1799 = vpack.c.b16 %v1797, %v1796
        %v1803 = vsel %vm1050, %v1785, 0
        %1805 = vmatprep.subr.bf16.mxu0 0
        %1806 = vmatpush1.bf16.msra.mxu0 %v1798
        %1807 = vmatprep.subr.bf16.mxu0 0
        %1808 = vmatpush1.bf16.msra.mxu0 %v1799
        %1809 = vmatprep.subr.bf16.mxu0 0
        %1810 = vmatpush1.bf16.msra.mxu0 0
        %1811 = vmatprep.subr.bf16.mxu0 0
        %1812 = vmatpush1.bf16.msra.mxu0 0
        %1813 = vmatprep.subr.bf16.mxu0 0
        %1814 = vmatpush1.bf16.msra.mxu0 0
        %1815 = vmatprep.subr.bf16.mxu0 0
        %1816 = vmatpush1.bf16.msra.mxu0 0
        %1817 = vmatprep.subr.bf16.mxu0 0
        %1818 = vmatpush1.bf16.msra.mxu0 0
        %1819 = vmatprep.subr.bf16.mxu0 0
        %1820 = vmatpush1.bf16.msra.mxu0 0
        %1821 = vmatprep.subr.bf16.mxu0 0
        %1822 = vmatpush1.bf16.msra.mxu0 0
        %1823 = vmatprep.subr.bf16.mxu0 0
        %1824 = vmatpush1.bf16.msra.mxu0 0
        %1825 = vmatprep.subr.bf16.mxu0 0
        %1826 = vmatpush1.bf16.msra.mxu0 0
        %1827 = vmatprep.subr.bf16.mxu0 0
        %1828 = vmatpush1.bf16.msra.mxu0 0
        %1829 = vmatprep.subr.bf16.mxu0 0
        %1830 = vmatpush1.bf16.msra.mxu0 0
        %1831 = vmatprep.subr.bf16.mxu0 0
        %1832 = vmatpush1.bf16.msra.mxu0 0
        %1833 = vmatprep.subr.bf16.mxu0 0
        %1834 = vmatpush1.bf16.msra.mxu0 0
        %1835 = vmatprep.subr.bf16.mxu0 0
        %1836 = vmatpush1.bf16.msra.mxu0 0
        %1837 = vmatprep.mubr.bf16.mxu0 0
        %1838 = vmatmul.mubr.bf16.gmra.mrb[0].mxu0 %v1803
        %v1839 = vpop.f32.mrb[0].mxu0
        %v1840 = vadd.f32 %v1789, %v1839
        %v1841 = vpop.f32.mrb[0].mxu0
        %v1842 = vpop.f32.mrb[0].mxu0
        %v1843 = vpop.f32.mrb[0].mxu0
        %1844 = vdwg.mxu0
        %v1845 = vadd.f32 %v459, %v1840
        %v1846 = vpack.c.bf16 %v1845, %v1845
        %v1851 = vunpack.c.l.b16 %v354
        %v1852 = vunpack.c.l.b16 %v355
        %v1853 = vunpack.c.l.b16 %v356
        %v1854 = vunpack.c.l.b16 %v357
        %v1855 = vpack.c.b16 %v1852, %v1851
        %v1856 = vpack.c.b16 %v1854, %v1853
        %1860 = vrot.lane.b32.xlu0 %v1789, 96
        %v1861 = vpop.permute.xlu0 %1860
        %v1864 = vsel %vm1050, %v1846, 0
        %1866 = vmatprep.subr.bf16.mxu0 0
        %1867 = vmatpush1.bf16.msra.mxu0 %v1855
        %1868 = vmatprep.subr.bf16.mxu0 0
        %1869 = vmatpush1.bf16.msra.mxu0 %v1856
        %1870 = vmatprep.subr.bf16.mxu0 0
        %1871 = vmatpush1.bf16.msra.mxu0 0
        %1872 = vmatprep.subr.bf16.mxu0 0
        %1873 = vmatpush1.bf16.msra.mxu0 0
        %1874 = vmatprep.subr.bf16.mxu0 0
        %1875 = vmatpush1.bf16.msra.mxu0 0
        %1876 = vmatprep.subr.bf16.mxu0 0
        %1877 = vmatpush1.bf16.msra.mxu0 0
        %1878 = vmatprep.subr.bf16.mxu0 0
        %1879 = vmatpush1.bf16.msra.mxu0 0
        %1880 = vmatprep.subr.bf16.mxu0 0
        %1881 = vmatpush1.bf16.msra.mxu0 0
        %1882 = vmatprep.subr.bf16.mxu0 0
        %1883 = vmatpush1.bf16.msra.mxu0 0
        %1884 = vmatprep.subr.bf16.mxu0 0
        %1885 = vmatpush1.bf16.msra.mxu0 0
        %1886 = vmatprep.subr.bf16.mxu0 0
        %1887 = vmatpush1.bf16.msra.mxu0 0
        %1888 = vmatprep.subr.bf16.mxu0 0
        %1889 = vmatpush1.bf16.msra.mxu0 0
        %1890 = vmatprep.subr.bf16.mxu0 0
        %1891 = vmatpush1.bf16.msra.mxu0 0
        %1892 = vmatprep.subr.bf16.mxu0 0
        %1893 = vmatpush1.bf16.msra.mxu0 0
        %1894 = vmatprep.subr.bf16.mxu0 0
        %1895 = vmatpush1.bf16.msra.mxu0 0
        %1896 = vmatprep.subr.bf16.mxu0 0
        %1897 = vmatpush1.bf16.msra.mxu0 0
        %1898 = vmatprep.mubr.bf16.mxu0 0
        %1899 = vmatmul.mubr.bf16.gmra.mrb[0].mxu0 %v1864
        %v1900 = vpop.f32.mrb[0].mxu0
        %v1901 = vadd.f32 %v1861, %v1900
        %v1902 = vpop.f32.mrb[0].mxu0
        %v1903 = vpop.f32.mrb[0].mxu0
        %v1904 = vpop.f32.mrb[0].mxu0
        %1905 = vdwg.mxu0
        %v1906 = vmax.f32 %v1901, 0.0
        %v1907 = vadd.f32 %v1845, %v1906
        %1908 = vst.msk [vmem:[%s324] sm:$0xff] %vm1050, %v1907
        %s1909 = sand.u32 %s164, 1
        %s1910 = scalar_lea.sflag [#allocation4], %s1909
        %s1911 = sand.u32 %s164, 1
        %s1912 = smul.addr %s1911, 8
        %s1913 = scalar_lea.vmem [#allocation11], %s1912
        // Predicated region
        $region65: #{tpu_custom_call.1} parent=43 // pred_check
          %p1914 = pneg %p174
        $region66: #{tpu_custom_call.1} parent=43 // pred_check_branch
          %1916 = sbr.rel (%p1914) target = $region68
        $region67: #{tpu_custom_call.1} parent=43 // pred_region
          %s1918 = ssub.s32 128, 128
          %1919 = vsyncadd %s1910, %s1918
          %s1920 = smul.addr %s25, 128
          %s1921 = scalar_lea.hbm %s6, %s1920
          %s1923 = sshll.u32 %s1913, 4
          %s1924 = int_to_ptr.vmem [resolvable:$true] %s1923
          %1926 = dma.vmem_to_hbm [thread:$0]  %s1924, 128, %s1921, %s1910
        $region68: #{tpu_custom_call.1} parent=43 // pred_fallthru
          _
      $region44: #{tpu_custom_call.1} parent=5 // pred_fallthru
        _
      %p1927 = scmp.le.s32.totalorder 2, %s20
      // Predicated region
      $region69: #{tpu_custom_call.1} parent=5 // pred_check
        %p1928 = pneg %p1927
      $region70: #{tpu_custom_call.1} parent=5 // pred_check_branch
        %1930 = sbr.rel (%p1928) target = $region72
      $region71: #{tpu_custom_call.1} parent=5 // pred_region
        %s1931 = ssub.s32 %s20, 2
        // Predicated region
        $region73: #{tpu_custom_call.1} parent=71 // pred_check
          %p1932 = pneg %p180
        $region74: #{tpu_custom_call.1} parent=71 // pred_check_branch
          %1934 = sbr.rel (%p1932) target = $region76
        $region75: #{tpu_custom_call.1} parent=71 // pred_region
          %s1935 = sand.u32 %s165, 1
          %s1936 = scalar_lea.sflag [#allocation4], %s1935
          %s1937 = sand.u32 %s165, 1
          %s1938 = smul.addr %s1937, 8
          %s1939 = scalar_lea.vmem [#allocation11], %s1938
          %1940 = dma.done %s1936, 128
        $region76: #{tpu_custom_call.1} parent=71 // pred_fallthru
          _
      $region72: #{tpu_custom_call.1} parent=5 // pred_fallthru
        _
    $region6: #{tpu_custom_call.1} parent=1 // loop_footer
      %s24 = sadd.s32 1, %s20
    $region7: #{tpu_custom_call.1} parent=1 // loop_footer_branch
      %19 = sbr.rel target = $region3
    $region8: #{tpu_custom_call.1} parent=1 // loop_exit
      _
    %1941 = vsyncpa [#allocation3], 1
    %s1942 = scalar_lea.sflag [#allocation3], 1
    %1943 = vsyncpa %s1942, 1
    %1944 = vsyncpa [#allocation6], 1
    %1945 = vsyncpa [#allocation9], 1
    %1946 = vsyncpa [#allocation4], 1
    %s1947 = scalar_lea.sflag [#allocation4], 1
    %1948 = vsyncpa %s1947, 1

</llo_original>
